<compile_context>
chip_gen: v7x
topology: tpu7x:2x2x1
jax: 0.10.0
libtpu: 0.0.40
codegen_flags: <defaults>
</compile_context>

<pallas_src>
import functools
import math

import jax
import jax.numpy as jnp
from jax.experimental import pallas as pl
from jax.experimental.pallas import tpu as pltpu

_MiB = 1024 * 1024


def _cdiv(a, b):
    return -(-a // b)


def _round_up(a, n):
    return _cdiv(a, n) * n


def _vmem_capacity_bytes():
    """Per-TensorCore VMEM capacity; conservative (v7x = 64 MiB) if query fails."""
    try:
        cap = int(pltpu.get_tpu_info().vmem_capacity_bytes)
        if cap > 0:
            return cap
    except Exception:
        pass
    return 64 * _MiB


def _choose_tile(extent, max_tile, align, min_split=256):
    """Tile one grid axis.

    Returns (tile, steps) with tile a multiple of `align` (or == extent) and,
    for large axes, an even number of steps so v7x's two TensorCores split the
    grid evenly ("parallel" dimension semantics).
    """
    max_tile = max(align, min(max_tile, extent))
    steps = _cdiv(extent, max_tile)
    if extent >= min_split:
        steps = max(steps, 2)
        if steps % 2:
            steps += 1
    tile = _round_up(_cdiv(extent, steps), align)
    if tile >= extent:
        return extent, 1
    return tile, _cdiv(extent, tile)


# ---------------------------------------------------------------------------
# Kernels
# ---------------------------------------------------------------------------

def _wsum_flat_kernel(x_ref, sm_ref, o_ref, *, n_layers, d):
    # x_ref : (TM, n_layers * d)  VMEM tile of the flattened input
    # sm_ref: (n_layers,)         SMEM softmaxed layer weights (f32 scalars)
    # o_ref : (TM, d)             VMEM output tile (lane-dense: d % 128 == 0)
    acc = sm_ref[0] * x_ref[:, 0:d].astype(jnp.float32)
    for l in range(1, n_layers):                     # n_layers is small & static
        acc = acc + sm_ref[l] * x_ref[:, l * d:(l + 1) * d].astype(jnp.float32)
    o_ref[...] = acc.astype(o_ref.dtype)


def _wsum_dtile_kernel(x_ref, sm_ref, o_ref, *, n_layers):
    # x_ref : (TM, n_layers, TD)  VMEM tile (layer axis kept whole)
    # o_ref : (TM, TD)
    acc = sm_ref[0] * x_ref[:, 0, :].astype(jnp.float32)
    for l in range(1, n_layers):
        acc = acc + sm_ref[l] * x_ref[:, l, :].astype(jnp.float32)
    o_ref[...] = acc.astype(o_ref.dtype)


# ---------------------------------------------------------------------------
# Wrapper
# ---------------------------------------------------------------------------

def weighted_sum_layer(x, weight_raw, dim, *,
                       vmem_budget_bytes=None,
                       min_kernel_bytes=2 * _MiB,
                       force_kernel=False):
    """Pallas implementation of WeightedSumLayer.forward(x, dim)."""
    dim = dim % x.ndim
    n_layers = x.shape[dim]
    assert weight_raw.shape == (n_layers,)

    lead = x.shape[:dim]
    trail = x.shape[dim + 1:]
    m = math.prod(lead) if lead else 1
    d = math.prod(trail) if trail else 1

    # Tiny softmax of the mixing logits in f32 (handles the -inf "specific_layer" init).
    sm = jax.nn.softmax(weight_raw.astype(jnp.float32), axis=0)
    # Match PyTorch dtype promotion: f32 weights * bf16 x -> f32 output.
    out_dtype = jnp.promote_types(x.dtype, jnp.float32)

    in_item = jnp.dtype(x.dtype).itemsize
    out_item = jnp.dtype(out_dtype).itemsize
    total_bytes = n_layers * m * d * in_item + m * d * out_item

    # XLA fallback: non-lane-dense trailing dim (masked stores / cross-tile lane
    # slices) or tiny inputs (launch + pipeline prologue dominates; XLA fuses the
    # weighted sum into neighbors for free).
    use_kernel = (d % 128 == 0) and (force_kernel or total_bytes >= min_kernel_bytes)
    if not use_kernel:
        shape = [1] * x.ndim
        shape[dim] = n_layers
        ws = jnp.sum(sm.reshape(shape) * x.astype(jnp.float32), axis=dim)
        return ws.astype(out_dtype)

    # Generation-aware VMEM budget (~45% of per-core VMEM: ~57 MiB on v5e/v6e's
    # 128 MiB, ~28 MiB on v7x's 64 MiB), with +8 MiB headroom on the limit.
    vmem_capacity = _vmem_capacity_bytes()
    if vmem_budget_bytes is None:
        vmem_budget_bytes = int(0.45 * vmem_capacity)
    vmem_limit = int(min(vmem_budget_bytes + 8 * _MiB, vmem_capacity))

    cost = pl.CostEstimate(flops=2 * n_layers * m * d,
                           transcendentals=0,
                           bytes_accessed=total_bytes)

    # Double-buffered bytes per M row in the flat layout.
    row_bytes = 2 * d * (n_layers * in_item + out_item)

    if 8 * row_bytes <= vmem_budget_bytes:
        # ---- Flat fast path: (M, n_layers*D) with M-only tiling --------------
        tm_max = vmem_budget_bytes // row_bytes
        tm, gm = _choose_tile(m, tm_max, 8)
        x2d = x.reshape(m, n_layers * d)      # free contiguous reshape
        kernel = functools.partial(_wsum_flat_kernel, n_layers=n_layers, d=d)
        out = pl.pallas_call(
            kernel,
            out_shape=jax.ShapeDtypeStruct((m, d), out_dtype),
            grid=(gm,),
            in_specs=[
                pl.BlockSpec((tm, n_layers * d), lambda i: (i, 0)),
                pl.BlockSpec(memory_space=pltpu.MemorySpace.SMEM),
            ],
            out_specs=pl.BlockSpec((tm, d), lambda i: (i, 0)),
            compiler_params=pltpu.CompilerParams(
                dimension_semantics=("parallel",),
                vmem_limit_bytes=vmem_limit,
            ),
            cost_estimate=cost,
        )(x2d, sm)
    else:
        # ---- D-tiled fallback: (M, n_layers, D) with (tm, n_layers, td) ------
        x3d = x.reshape(m, n_layers, d)
        lane_bytes = 2 * (n_layers * in_item + out_item)   # per (row, lane), dbl-buffered
        td_guess = (vmem_budget_bytes // (lane_bytes * 256) // 128) * 128
        td_guess = min(max(128, td_guess), d)              # d % 128 == 0 here
        td, gd = _choose_tile(d, td_guess, 128)
        tm_max = max(8, vmem_budget_bytes // (lane_bytes * td))
        tm, gm = _choose_tile(m, tm_max, 8)
        kernel = functools.partial(_wsum_dtile_kernel, n_layers=n_layers)
        out = pl.pallas_call(
            kernel,
            out_shape=jax.ShapeDtypeStruct((m, d), out_dtype),
            grid=(gm, gd),
            in_specs=[
                pl.BlockSpec((tm, n_layers, td), lambda i, j: (i, 0, j)),
                pl.BlockSpec(memory_space=pltpu.MemorySpace.SMEM),
            ],
            out_specs=pl.BlockSpec((tm, td), lambda i, j: (i, j)),
            compiler_params=pltpu.CompilerParams(
                dimension_semantics=("parallel", "parallel"),
                vmem_limit_bytes=vmem_limit,
            ),
            cost_estimate=cost,
        )(x3d, sm)

    return out.reshape(lead + trail)


def _reference(x, weight_raw, dim):
    sm = jax.nn.softmax(weight_raw.astype(jnp.float32), axis=0)
    shape = [1] * x.ndim
    shape[dim] = x.shape[dim]
    ws = jnp.sum(sm.reshape(shape) * x.astype(jnp.float32), axis=dim)
    return ws.astype(jnp.promote_types(x.dtype, jnp.float32))


if __name__ == "__main__":
    key = jax.random.PRNGKey(0)
    k1, k2, k3, k4, k5, k6, k7, k8 = jax.random.split(key, 8)

    # --- 1) Small shape consistent with the module (hits the XLA fallback) ----
    B, L, n_layers, d_in = 2, 8, 4, 32
    x = jax.random.normal(k1, (B, L, n_layers, d_in), dtype=jnp.float32)
    w = jax.random.normal(k2, (n_layers,), dtype=jnp.float32)
    out = jax.block_until_ready(weighted_sum_layer(x, w, dim=2))
    assert out.shape == (B, L, d_in), out.shape
    assert jnp.allclose(out, _reference(x, w, dim=2), atol=1e-5, rtol=1e-5)

    # --- 2) Flat kernel path: lane-dense D, M-tiling, non-divisible tail ------
    B2, L2, nl2, d2 = 3, 347, 12, 256            # M = 1041, ~14 MB total
    x2 = jax.random.normal(k3, (B2, L2, nl2, d2), dtype=jnp.float32)
    w2 = jax.random.normal(k4, (nl2,), dtype=jnp.float32)
    out2 = jax.block_until_ready(weighted_sum_layer(x2, w2, dim=2))
    assert out2.shape == (B2, L2, d2), out2.shape
    assert jnp.allclose(out2, _reference(x2, w2, dim=2), atol=1e-4, rtol=1e-4), \
        float(jnp.max(jnp.abs(out2 - _reference(x2, w2, dim=2))))

    # --- 3) bf16 input -> f32 output (PyTorch promotion), flat kernel path ----
    B3, L3, nl3, d3 = 2, 512, 8, 384
    x3 = jax.random.normal(k5, (B3, L3, nl3, d3), dtype=jnp.bfloat16)
    w3 = jax.random.normal(k6, (nl3,), dtype=jnp.float32)
    out3 = jax.block_until_ready(weighted_sum_layer(x3, w3, dim=2))
    assert out3.dtype == jnp.float32, out3.dtype
    assert jnp.allclose(out3, _reference(x3, w3, dim=2), atol=1e-3, rtol=1e-3)

    # --- 4) D-tiled fallback path (forced via a tiny VMEM budget) -------------
    B4, L4, nl4, d4 = 2, 200, 12, 256
    x4 = jax.random.normal(k7, (B4, L4, nl4, d4), dtype=jnp.float32)
    w4 = jax.random.normal(k8, (nl4,), dtype=jnp.float32)
    out4 = jax.block_until_ready(
        weighted_sum_layer(x4, w4, dim=2,
                           vmem_budget_bytes=200_000, force_kernel=True))
    assert jnp.allclose(out4, _reference(x4, w4, dim=2), atol=1e-4, rtol=1e-4)

    # --- 5) "specific_layer" (-inf) init + different dim, kernel path ---------
    x5 = jax.random.normal(k1, (2, 4, 8, 128), dtype=jnp.float32)   # dim=1 -> D=1024
    w5 = jnp.full((4,), -jnp.inf, dtype=jnp.float32).at[1].set(10.0)
    out5 = jax.block_until_ready(weighted_sum_layer(x5, w5, dim=1, force_kernel=True))
    assert jnp.allclose(out5, _reference(x5, w5, dim=1), atol=1e-5, rtol=1e-5)

    print("KERNEL_OK")
</pallas_src>

<mosaic_0001>
module attributes {stable_mosaic.version = 11 : i64} {
  func.func @_wsum_flat_kernel(%arg0: i32, %arg1: memref<528x3072xf32, #tpu.memory_space<vmem>>, %arg2: memref<12xf32, #tpu.memory_space<smem>>, %arg3: memref<528x256xf32, #tpu.memory_space<vmem>>) attributes {dimension_semantics = [#tpu.dimension_semantics<parallel>], iteration_bounds = array<i64: 2>, scalar_prefetch = 0 : i64, scratch_operands = 0 : i64, tpu.core_type = #tpu.core_type<tc>, window_params = [{transform_indices = @transform_0, window_bounds = array<i64: 528, 3072>}, {transform_indices = @transform_1, window_bounds = array<i64: 12>}, {transform_indices = @transform_2, window_bounds = array<i64: 528, 256>}]} {
    %c0 = arith.constant 0 : index
    %0 = memref.load %arg2[%c0] : memref<12xf32, #tpu.memory_space<smem>>
    %c0_0 = arith.constant 0 : index
    %c0_1 = arith.constant 0 : index
    %1 = vector.load %arg1[%c0_0, %c0_1] : memref<528x3072xf32, #tpu.memory_space<vmem>>, vector<528x256xf32>
    %2 = vector.broadcast %0 : f32 to vector<528x256xf32>
    %3 = arith.mulf %2, %1 : vector<528x256xf32>
    %c1 = arith.constant 1 : index
    %4 = memref.load %arg2[%c1] : memref<12xf32, #tpu.memory_space<smem>>
    %c0_2 = arith.constant 0 : index
    %c256 = arith.constant 256 : index
    %5 = vector.load %arg1[%c0_2, %c256] : memref<528x3072xf32, #tpu.memory_space<vmem>>, vector<528x256xf32>
    %6 = vector.broadcast %4 : f32 to vector<528x256xf32>
    %7 = arith.mulf %6, %5 : vector<528x256xf32>
    %8 = arith.addf %3, %7 : vector<528x256xf32>
    %c2 = arith.constant 2 : index
    %9 = memref.load %arg2[%c2] : memref<12xf32, #tpu.memory_space<smem>>
    %c0_3 = arith.constant 0 : index
    %c512 = arith.constant 512 : index
    %10 = vector.load %arg1[%c0_3, %c512] : memref<528x3072xf32, #tpu.memory_space<vmem>>, vector<528x256xf32>
    %11 = vector.broadcast %9 : f32 to vector<528x256xf32>
    %12 = arith.mulf %11, %10 : vector<528x256xf32>
    %13 = arith.addf %8, %12 : vector<528x256xf32>
    %c3 = arith.constant 3 : index
    %14 = memref.load %arg2[%c3] : memref<12xf32, #tpu.memory_space<smem>>
    %c0_4 = arith.constant 0 : index
    %c768 = arith.constant 768 : index
    %15 = vector.load %arg1[%c0_4, %c768] : memref<528x3072xf32, #tpu.memory_space<vmem>>, vector<528x256xf32>
    %16 = vector.broadcast %14 : f32 to vector<528x256xf32>
    %17 = arith.mulf %16, %15 : vector<528x256xf32>
    %18 = arith.addf %13, %17 : vector<528x256xf32>
    %c4 = arith.constant 4 : index
    %19 = memref.load %arg2[%c4] : memref<12xf32, #tpu.memory_space<smem>>
    %c0_5 = arith.constant 0 : index
    %c1024 = arith.constant 1024 : index
    %20 = vector.load %arg1[%c0_5, %c1024] : memref<528x3072xf32, #tpu.memory_space<vmem>>, vector<528x256xf32>
    %21 = vector.broadcast %19 : f32 to vector<528x256xf32>
    %22 = arith.mulf %21, %20 : vector<528x256xf32>
    %23 = arith.addf %18, %22 : vector<528x256xf32>
    %c5 = arith.constant 5 : index
    %24 = memref.load %arg2[%c5] : memref<12xf32, #tpu.memory_space<smem>>
    %c0_6 = arith.constant 0 : index
    %c1280 = arith.constant 1280 : index
    %25 = vector.load %arg1[%c0_6, %c1280] : memref<528x3072xf32, #tpu.memory_space<vmem>>, vector<528x256xf32>
    %26 = vector.broadcast %24 : f32 to vector<528x256xf32>
    %27 = arith.mulf %26, %25 : vector<528x256xf32>
    %28 = arith.addf %23, %27 : vector<528x256xf32>
    %c6 = arith.constant 6 : index
    %29 = memref.load %arg2[%c6] : memref<12xf32, #tpu.memory_space<smem>>
    %c0_7 = arith.constant 0 : index
    %c1536 = arith.constant 1536 : index
    %30 = vector.load %arg1[%c0_7, %c1536] : memref<528x3072xf32, #tpu.memory_space<vmem>>, vector<528x256xf32>
    %31 = vector.broadcast %29 : f32 to vector<528x256xf32>
    %32 = arith.mulf %31, %30 : vector<528x256xf32>
    %33 = arith.addf %28, %32 : vector<528x256xf32>
    %c7 = arith.constant 7 : index
    %34 = memref.load %arg2[%c7] : memref<12xf32, #tpu.memory_space<smem>>
    %c0_8 = arith.constant 0 : index
    %c1792 = arith.constant 1792 : index
    %35 = vector.load %arg1[%c0_8, %c1792] : memref<528x3072xf32, #tpu.memory_space<vmem>>, vector<528x256xf32>
    %36 = vector.broadcast %34 : f32 to vector<528x256xf32>
    %37 = arith.mulf %36, %35 : vector<528x256xf32>
    %38 = arith.addf %33, %37 : vector<528x256xf32>
    %c8 = arith.constant 8 : index
    %39 = memref.load %arg2[%c8] : memref<12xf32, #tpu.memory_space<smem>>
    %c0_9 = arith.constant 0 : index
    %c2048 = arith.constant 2048 : index
    %40 = vector.load %arg1[%c0_9, %c2048] : memref<528x3072xf32, #tpu.memory_space<vmem>>, vector<528x256xf32>
    %41 = vector.broadcast %39 : f32 to vector<528x256xf32>
    %42 = arith.mulf %41, %40 : vector<528x256xf32>
    %43 = arith.addf %38, %42 : vector<528x256xf32>
    %c9 = arith.constant 9 : index
    %44 = memref.load %arg2[%c9] : memref<12xf32, #tpu.memory_space<smem>>
    %c0_10 = arith.constant 0 : index
    %c2304 = arith.constant 2304 : index
    %45 = vector.load %arg1[%c0_10, %c2304] : memref<528x3072xf32, #tpu.memory_space<vmem>>, vector<528x256xf32>
    %46 = vector.broadcast %44 : f32 to vector<528x256xf32>
    %47 = arith.mulf %46, %45 : vector<528x256xf32>
    %48 = arith.addf %43, %47 : vector<528x256xf32>
    %c10 = arith.constant 10 : index
    %49 = memref.load %arg2[%c10] : memref<12xf32, #tpu.memory_space<smem>>
    %c0_11 = arith.constant 0 : index
    %c2560 = arith.constant 2560 : index
    %50 = vector.load %arg1[%c0_11, %c2560] : memref<528x3072xf32, #tpu.memory_space<vmem>>, vector<528x256xf32>
    %51 = vector.broadcast %49 : f32 to vector<528x256xf32>
    %52 = arith.mulf %51, %50 : vector<528x256xf32>
    %53 = arith.addf %48, %52 : vector<528x256xf32>
    %c11 = arith.constant 11 : index
    %54 = memref.load %arg2[%c11] : memref<12xf32, #tpu.memory_space<smem>>
    %c0_12 = arith.constant 0 : index
    %c2816 = arith.constant 2816 : index
    %55 = vector.load %arg1[%c0_12, %c2816] : memref<528x3072xf32, #tpu.memory_space<vmem>>, vector<528x256xf32>
    %56 = vector.broadcast %54 : f32 to vector<528x256xf32>
    %57 = arith.mulf %56, %55 : vector<528x256xf32>
    %58 = arith.addf %53, %57 : vector<528x256xf32>
    %c0_13 = arith.constant 0 : index
    %c0_14 = arith.constant 0 : index
    %59 = vector.load %arg3[%c0_13, %c0_14] : memref<528x256xf32, #tpu.memory_space<vmem>>, vector<528x256xf32>
    tpu.vector_store %arg3[%c0_13, %c0_14], %58 {strides = array<i32>} : memref<528x256xf32, #tpu.memory_space<vmem>>, vector<528x256xf32>,
    return
  }
  func.func @transform_0(%arg0: i32) -> (i32, i32) {
    %c0_i32 = arith.constant 0 : i32
    %c0_i32_0 = arith.constant 0 : i32
    return %arg0, %c0_i32 : i32, i32
  }
  func.func @transform_1(%arg0: i32) -> i32 {
    %c0_i32 = arith.constant 0 : i32
    %c0_i32_0 = arith.constant 0 : i32
    return %c0_i32 : i32
  }
  func.func @transform_2(%arg0: i32) -> (i32, i32) {
    %c0_i32 = arith.constant 0 : i32
    %c0_i32_0 = arith.constant 0 : i32
    return %arg0, %c0_i32 : i32, i32
  }
}

</mosaic_0001>

<llo_original>
// kernel: tpu_custom_call.1
$region0: #{tpu_custom_call.1}
  #allocation0 [shape = 'u32[]', space=smem, size = 0x4, offset = 0x4, fixed_abs, tag = 'smem constant byte address 0x4 - core index']
  #allocation1 [shape = 'u32[144,128]{1,0:T(1,128)}', space=vmem, size = 0x12000, scoped, tag = 'internal scratch']
  %s0 = inlined_call_operand.hbm [shape: f32[1041,3072], index: 0, kind: input, shape index: {}]
  %s1 = inlined_call_operand.hbm [shape: f32[12], index: 1, kind: input, shape index: {}]
  %s2 = inlined_call_operand.hbm [shape: f32[1041,256], index: 2, kind: output, shape index: {}]
  %s3 = sld [smem:[#allocation0]]
  $region49: #{tpu_custom_call.1} parent=0
    _
  %s5 = ssub.s32 1, %s3
  %s6 = scalar_select 0, %s5, %s3
  $region1: #{tpu_custom_call.1} parent=0
    #allocation2 [shape = 'u8[12976128]{0}', space=vmem, size = 0xc60000, scoped, tag = 'input window, operand 0']
    #allocation3 [shape = 's32[2]{0}', space=sflag, size = 0x8, scoped, tag = 'scoped memory for tpu_custom_call.1']
    #allocation4 [shape = 's32[2]{0}', space=sflag, size = 0x8, scoped, tag = 'scoped memory for tpu_custom_call.1']
    #allocation5 [shape = 's32[2]{0}', space=sflag, size = 0x8, scoped, tag = 'scoped memory for tpu_custom_call.1']
    #allocation6 [shape = 'u8[512]{0}', space=smem, size = 0x200, scoped, tag = 'input window, operand 1, single buffered']
    #allocation7 [shape = 'u8[1081344]{0}', space=vmem, size = 0x108000, scoped, tag = 'output window, operand 0']
    %7 = vsyncpa [#allocation3], 0
    %s8 = scalar_lea.sflag [#allocation3], 1
    %9 = vsyncpa %s8, 0
    %10 = vsyncpa [#allocation5], 0
    %11 = vsyncpa [#allocation4], 0
    %s12 = scalar_lea.sflag [#allocation4], 1
    %13 = vsyncpa %s12, 0
    loop: start=0, step=1, limit=4
    $region2: #{tpu_custom_call.1} parent=1 // loop_pre_header
      _
    $region3: #{tpu_custom_call.1} parent=1 // loop_header
      %s15 = sphi 0, %s19
      %p16 = scmp.ge.s32.totalorder %s15, 4
      %s25 = sphi 0, %s27
      %s28 = sphi 0, %s25
      %s29 = sphi 0, %s28
      %s45 = sphi 0, %s29
      %s49 = sphi 0, %s49
      %s51 = sphi 0, %s49
      %s52 = sphi 0, %s51
      %s66 = sphi 0, %s52
      %s72 = sphi 0, %s74
      %s75 = sphi 0, %s72
      %s76 = sphi 0, %s75
      %s92 = sphi 0, %s76
    $region4: #{tpu_custom_call.1} parent=1 // loop_header_branch
      %18 = sbr.rel (%p16) target = $region8
    $region5: #{tpu_custom_call.1} parent=1 // loop_body
      %s20 = ssub.s32 %s15, 1
      %s21 = ssub.s32 %s15, 2
      %s22 = sadd.s32 %s15, 1
      %s23 = ssub.s32 %s15, %s22
      %p24 = scmp.eq.s32.totalorder %s23, 0
      %s26 = sadd.s32 %s25, 1
      %s27 = scalar_select %p24, %s25, %s26
      %p30 = pneg %p24
      %p31 = scmp.eq.s32.totalorder %s15, 1
      %p32 = por %p30, %p31
      %p33 = scmp.ne.s32.totalorder %s25, %s28
      %p34 = scmp.eq.s32.totalorder %s15, 0
      %p35 = por %p33, %p34
      %p36 = scmp.ne.s32.totalorder %s25, %s28
      %p37 = scmp.eq.s32.totalorder %s20, 1
      %p38 = por %p36, %p37
      %p39 = scmp.ne.s32.totalorder %s28, %s29
      %p40 = scmp.eq.s32.totalorder %s20, 0
      %p41 = por %p39, %p40
      %p42 = scmp.ne.s32.totalorder %s28, %s29
      %p43 = scmp.eq.s32.totalorder %s21, 1
      %p44 = por %p42, %p43
      %p46 = scmp.ne.s32.totalorder %s29, %s45
      %p47 = scmp.eq.s32.totalorder %s21, 0
      %p48 = por %p46, %p47
      %s50 = sadd.s32 %s49, 1
      %p53 = scmp.eq.s32.totalorder %s15, 1
      %p54 = scmp.ne.s32.totalorder %s49, %s51
      %p55 = scmp.eq.s32.totalorder %s15, 0
      %p56 = por %p54, %p55
      %p57 = scmp.ne.s32.totalorder %s49, %s51
      %p58 = scmp.eq.s32.totalorder %s20, 1
      %p59 = por %p57, %p58
      %p60 = scmp.ne.s32.totalorder %s51, %s52
      %p61 = scmp.eq.s32.totalorder %s20, 0
      %p62 = por %p60, %p61
      %p63 = scmp.ne.s32.totalorder %s51, %s52
      %p64 = scmp.eq.s32.totalorder %s21, 1
      %p65 = por %p63, %p64
      %p67 = scmp.ne.s32.totalorder %s52, %s66
      %p68 = scmp.eq.s32.totalorder %s21, 0
      %p69 = por %p67, %p68
      %s70 = ssub.s32 %s15, %s22
      %p71 = scmp.eq.s32.totalorder %s70, 0
      %s73 = sadd.s32 %s72, 1
      %s74 = scalar_select %p71, %s72, %s73
      %p77 = pneg %p71
      %p78 = scmp.eq.s32.totalorder %s15, 1
      %p79 = por %p77, %p78
      %p80 = scmp.ne.s32.totalorder %s72, %s75
      %p81 = scmp.eq.s32.totalorder %s15, 0
      %p82 = por %p80, %p81
      %p83 = scmp.ne.s32.totalorder %s72, %s75
      %p84 = scmp.eq.s32.totalorder %s20, 1
      %p85 = por %p83, %p84
      %p86 = scmp.ne.s32.totalorder %s75, %s76
      %p87 = scmp.eq.s32.totalorder %s20, 0
      %p88 = por %p86, %p87
      %p89 = scmp.ne.s32.totalorder %s75, %s76
      %p90 = scmp.eq.s32.totalorder %s21, 1
      %p91 = por %p89, %p90
      %p93 = scmp.ne.s32.totalorder %s76, %s92
      %p94 = scmp.eq.s32.totalorder %s21, 0
      %p95 = por %p93, %p94
      %p96 = scmp.le.s32.totalorder 1, %s15
      %p97 = scmp.lt.s32.totalorder %s15, 3
      %p98 = pnand %p96, %p97
      %p99 = pneg %p98
      // Predicated region
      $region9: #{tpu_custom_call.1} parent=5 // pred_check
        _
      $region10: #{tpu_custom_call.1} parent=5 // pred_check_branch
        %101 = sbr.rel (%p98) target = $region12
      $region11: #{tpu_custom_call.1} parent=5 // pred_region
        %s102 = ssub.s32 %s15, 1
        // Predicated region
        $region13: #{tpu_custom_call.1} parent=11 // pred_check
          %p103 = pneg %p62
        $region14: #{tpu_custom_call.1} parent=11 // pred_check_branch
          %105 = sbr.rel (%p103) target = $region16
        $region15: #{tpu_custom_call.1} parent=11 // pred_region
          %s107 = ssub.s32 16, 16
          %108 = vsyncadd [#allocation5], %s107
          %111 = dma.hbm_to_smem %s1, 16, [#allocation6], [#allocation5]
        $region16: #{tpu_custom_call.1} parent=11 // pred_fallthru
          _
      $region12: #{tpu_custom_call.1} parent=5 // pred_fallthru
        _
      %p112 = scmp.lt.s32.totalorder %s15, 2
      // Predicated region
      $region17: #{tpu_custom_call.1} parent=5 // pred_check
        %p113 = pneg %p112
      $region18: #{tpu_custom_call.1} parent=5 // pred_check_branch
        %115 = sbr.rel (%p113) target = $region20
      $region19: #{tpu_custom_call.1} parent=5 // pred_region
        // Predicated region
        $region21: #{tpu_custom_call.1} parent=19 // pred_check
          %p116 = pneg %p35
        $region22: #{tpu_custom_call.1} parent=19 // pred_check_branch
          %118 = sbr.rel (%p116) target = $region24
        $region23: #{tpu_custom_call.1} parent=19 // pred_region
          %s119 = sand.u32 %s25, 1
          %s120 = scalar_lea.sflag [#allocation3], %s119
          %s121 = sand.u32 %s25, 1
          %s122 = smul.addr %s121, 12672
          %s123 = scalar_lea.vmem [#allocation2], %s122
          %s124 = smul.u32 66, %s15
          %s125 = ssub.s32 131, %s124
          %p126 = scmp.lt.s32.totalorder %s125, 66
          %s127 = scalar_select %p126, %s125, 66
          %s128 = smul.u32 128, %s127
          %s129 = smul.u32 %s128, 24
          %s131 = ssub.s32 202752, %s129
          %132 = vsyncadd %s120, %s131
          %p133 = scmp.ne.s32.totalorder 0, %s129
          %s134 = smul.addr %s124, 24
          %s135 = smul.addr %s134, 128
          %s136 = scalar_lea.hbm %s0, %s135
          %s137 = smul.u32 192, %s127
          %s138 = sshll.u32 %s123, 4
          %s139 = int_to_ptr.vmem [resolvable:$true] %s138
          %s140 = sshll.u32 %s137, 4
          %144 = dma.hbm_to_vmem [thread:$0]  (%p133), %s136, %s140, %s139, %s120, 3072, 3072, 192
        $region24: #{tpu_custom_call.1} parent=19 // pred_fallthru
          _
      $region20: #{tpu_custom_call.1} parent=5 // pred_fallthru
        _
      %p145 = scmp.le.s32.totalorder 1, %s15
      %p146 = scmp.lt.s32.totalorder %s15, 3
      %p147 = pnand %p145, %p146
      %p148 = pneg %p147
      // Predicated region
      $region25: #{tpu_custom_call.1} parent=5 // pred_check
        _
      $region26: #{tpu_custom_call.1} parent=5 // pred_check_branch
        %150 = sbr.rel (%p147) target = $region28
      $region27: #{tpu_custom_call.1} parent=5 // pred_region
        %s151 = ssub.s32 %s15, 1
        %s152 = sand.u32 %s28, 1
        %s153 = scalar_lea.sflag [#allocation3], %s152
        %s154 = sand.u32 %s28, 1
        %s155 = smul.addr %s154, 12672
        %s156 = scalar_lea.vmem [#allocation2], %s155
        // Predicated region
        $region29: #{tpu_custom_call.1} parent=27 // pred_check
          %p157 = pneg %p41
        $region30: #{tpu_custom_call.1} parent=27 // pred_check_branch
          %159 = sbr.rel (%p157) target = $region32
        $region31: #{tpu_custom_call.1} parent=27 // pred_region
          %160 = dma.done %s153, 202752
        $region32: #{tpu_custom_call.1} parent=27 // pred_fallthru
          _
        // Predicated region
        $region33: #{tpu_custom_call.1} parent=27 // pred_check
          %p161 = pneg %p62
        $region34: #{tpu_custom_call.1} parent=27 // pred_check_branch
          %163 = sbr.rel (%p161) target = $region36
        $region35: #{tpu_custom_call.1} parent=27 // pred_region
          %164 = dma.done [#allocation5], 16
        $region36: #{tpu_custom_call.1} parent=27 // pred_fallthru
          _
        %165 = sfence
        %s166 = sand.u32 %s28, 1
        %s167 = scalar_lea.sflag [#allocation3], %s166
        %s168 = sand.u32 %s28, 1
        %s169 = smul.addr %s168, 12672
        %s170 = scalar_lea.vmem [#allocation2], %s169
        %p171 = pneg %p41
        %p172 = pneg %p38
        %p173 = pneg %p62
        %p174 = pneg %p59
        %p175 = pneg %p88
        %p176 = pneg %p85
        %s177 = sand.u32 %s75, 1
        %s178 = scalar_lea.sflag [#allocation4], %s177
        %s179 = sand.u32 %s75, 1
        %s180 = smul.addr %s179, 1056
        %s181 = scalar_lea.vmem [#allocation7], %s180
        %s182 = smul.u32 66, %s20
        %s183 = ssub.s32 131, %s182
        %p184 = scmp.lt.s32.totalorder %s183, 66
        %s185 = scalar_select %p184, %s183, 66
        %s186 = smul.u32 128, %s185
        %s187 = smul.u32 %s186, 24
        %s188 = smul.u32 66, %s20
        %s189 = ssub.s32 131, %s188
        %p190 = scmp.lt.s32.totalorder %s189, 66
        %s191 = scalar_select %p190, %s189, 66
        %s192 = smul.u32 128, %s191
        %s193 = smul.u32 %s192, 2
        %s194 = sld [smem:[#allocation6]]
        %v195 = vld [vmem:[%s156] sm:$0xff]
        %v196 = vld [vmem:[%s156 + $0x8] sm:$0xff]
        %v197 = vld [vmem:[%s156 + $0xc0] sm:$0xff]
        %v198 = vld [vmem:[%s156 + $0xc8] sm:$0xff]
        %v199 = vld [vmem:[%s156 + $0x180] sm:$0xff]
        %v200 = vld [vmem:[%s156 + $0x188] sm:$0xff]
        %v201 = vld [vmem:[%s156 + $0x240] sm:$0xff]
        %v202 = vld [vmem:[%s156 + $0x248] sm:$0xff]
        %v203 = vld [vmem:[%s156 + $0x300] sm:$0xff]
        %v204 = vld [vmem:[%s156 + $0x308] sm:$0xff]
        %v205 = vld [vmem:[%s156 + $0x3c0] sm:$0xff]
        %v206 = vld [vmem:[%s156 + $0x3c8] sm:$0xff]
        %v207 = vld [vmem:[%s156 + $0x480] sm:$0xff]
        %v208 = vld [vmem:[%s156 + $0x488] sm:$0xff]
        %v209 = vld [vmem:[%s156 + $0x540] sm:$0xff]
        %v210 = vld [vmem:[%s156 + $0x548] sm:$0xff]
        %v211 = vld [vmem:[%s156 + $0x600] sm:$0xff]
        %v212 = vld [vmem:[%s156 + $0x608] sm:$0xff]
        %v213 = vld [vmem:[%s156 + $0x6c0] sm:$0xff]
        %v214 = vld [vmem:[%s156 + $0x6c8] sm:$0xff]
        %v215 = vld [vmem:[%s156 + $0x780] sm:$0xff]
        %v216 = vld [vmem:[%s156 + $0x788] sm:$0xff]
        %v217 = vld [vmem:[%s156 + $0x840] sm:$0xff]
        %v218 = vld [vmem:[%s156 + $0x848] sm:$0xff]
        %v219 = vld [vmem:[%s156 + $0x900] sm:$0xff]
        %v220 = vld [vmem:[%s156 + $0x908] sm:$0xff]
        %v221 = vld [vmem:[%s156 + $0x9c0] sm:$0xff]
        %v222 = vld [vmem:[%s156 + $0x9c8] sm:$0xff]
        %v223 = vld [vmem:[%s156 + $0xa80] sm:$0xff]
        %v224 = vld [vmem:[%s156 + $0xa88] sm:$0xff]
        %v225 = vld [vmem:[%s156 + $0xb40] sm:$0xff]
        %v226 = vld [vmem:[%s156 + $0xb48] sm:$0xff]
        %v227 = vld [vmem:[%s156 + $0xc00] sm:$0xff]
        %v228 = vld [vmem:[%s156 + $0xc08] sm:$0xff]
        %v229 = vld [vmem:[%s156 + $0xcc0] sm:$0xff]
        %v230 = vld [vmem:[%s156 + $0xcc8] sm:$0xff]
        %v231 = vld [vmem:[%s156 + $0xd80] sm:$0xff]
        %v232 = vld [vmem:[%s156 + $0xd88] sm:$0xff]
        %v233 = vld [vmem:[%s156 + $0xe40] sm:$0xff]
        %v234 = vld [vmem:[%s156 + $0xe48] sm:$0xff]
        %v235 = vld [vmem:[%s156 + $0xf00] sm:$0xff]
        %v236 = vld [vmem:[%s156 + $0xf08] sm:$0xff]
        %v237 = vld [vmem:[%s156 + $0xfc0] sm:$0xff]
        %v238 = vld [vmem:[%s156 + $0xfc8] sm:$0xff]
        %v239 = vld [vmem:[%s156 + $0x1080] sm:$0xff]
        %v240 = vld [vmem:[%s156 + $0x1088] sm:$0xff]
        %v241 = vld [vmem:[%s156 + $0x1140] sm:$0xff]
        %v242 = vld [vmem:[%s156 + $0x1148] sm:$0xff]
        %v243 = vld [vmem:[%s156 + $0x1200] sm:$0xff]
        %v244 = vld [vmem:[%s156 + $0x1208] sm:$0xff]
        %v245 = vld [vmem:[%s156 + $0x12c0] sm:$0xff]
        %v246 = vld [vmem:[%s156 + $0x12c8] sm:$0xff]
        %v247 = vld [vmem:[%s156 + $0x1380] sm:$0xff]
        %v248 = vld [vmem:[%s156 + $0x1388] sm:$0xff]
        %v249 = vld [vmem:[%s156 + $0x1440] sm:$0xff]
        %v250 = vld [vmem:[%s156 + $0x1448] sm:$0xff]
        %v251 = vld [vmem:[%s156 + $0x1500] sm:$0xff]
        %v252 = vld [vmem:[%s156 + $0x1508] sm:$0xff]
        %v253 = vld [vmem:[%s156 + $0x15c0] sm:$0xff]
        %v254 = vld [vmem:[%s156 + $0x15c8] sm:$0xff]
        %v255 = vld [vmem:[%s156 + $0x1680] sm:$0xff]
        %v256 = vld [vmem:[%s156 + $0x1688] sm:$0xff]
        %v257 = vld [vmem:[%s156 + $0x1740] sm:$0xff]
        %v258 = vld [vmem:[%s156 + $0x1748] sm:$0xff]
        %v259 = vld [vmem:[%s156 + $0x1800] sm:$0xff]
        %v260 = vld [vmem:[%s156 + $0x1808] sm:$0xff]
        %v261 = vld [vmem:[%s156 + $0x18c0] sm:$0xff]
        %v262 = vld [vmem:[%s156 + $0x18c8] sm:$0xff]
        %v263 = vld [vmem:[%s156 + $0x1980] sm:$0xff]
        %v264 = vld [vmem:[%s156 + $0x1988] sm:$0xff]
        %v265 = vld [vmem:[%s156 + $0x1a40] sm:$0xff]
        %v266 = vld [vmem:[%s156 + $0x1a48] sm:$0xff]
        %v267 = vld [vmem:[%s156 + $0x1b00] sm:$0xff]
        %v268 = vld [vmem:[%s156 + $0x1b08] sm:$0xff]
        %v269 = vld [vmem:[%s156 + $0x1bc0] sm:$0xff]
        %v270 = vld [vmem:[%s156 + $0x1bc8] sm:$0xff]
        %v271 = vld [vmem:[%s156 + $0x1c80] sm:$0xff]
        %v272 = vld [vmem:[%s156 + $0x1c88] sm:$0xff]
        %v273 = vld [vmem:[%s156 + $0x1d40] sm:$0xff]
        %v274 = vld [vmem:[%s156 + $0x1d48] sm:$0xff]
        %v275 = vld [vmem:[%s156 + $0x1e00] sm:$0xff]
        %v276 = vld [vmem:[%s156 + $0x1e08] sm:$0xff]
        %v277 = vld [vmem:[%s156 + $0x1ec0] sm:$0xff]
        %v278 = vld [vmem:[%s156 + $0x1ec8] sm:$0xff]
        %v279 = vld [vmem:[%s156 + $0x1f80] sm:$0xff]
        %v280 = vld [vmem:[%s156 + $0x1f88] sm:$0xff]
        %v281 = vld [vmem:[%s156 + $0x2040] sm:$0xff]
        %v282 = vld [vmem:[%s156 + $0x2048] sm:$0xff]
        %v283 = vld [vmem:[%s156 + $0x2100] sm:$0xff]
        %v284 = vld [vmem:[%s156 + $0x2108] sm:$0xff]
        %v285 = vld [vmem:[%s156 + $0x21c0] sm:$0xff]
        %v286 = vld [vmem:[%s156 + $0x21c8] sm:$0xff]
        %v287 = vld [vmem:[%s156 + $0x2280] sm:$0xff]
        %v288 = vld [vmem:[%s156 + $0x2288] sm:$0xff]
        %v289 = vld [vmem:[%s156 + $0x2340] sm:$0xff]
        %v290 = vld [vmem:[%s156 + $0x2348] sm:$0xff]
        %v291 = vld [vmem:[%s156 + $0x2400] sm:$0xff]
        %v292 = vld [vmem:[%s156 + $0x2408] sm:$0xff]
        %v293 = vld [vmem:[%s156 + $0x24c0] sm:$0xff]
        %v294 = vld [vmem:[%s156 + $0x24c8] sm:$0xff]
        %v295 = vld [vmem:[%s156 + $0x2580] sm:$0xff]
        %v296 = vld [vmem:[%s156 + $0x2588] sm:$0xff]
        %v297 = vld [vmem:[%s156 + $0x2640] sm:$0xff]
        %v298 = vld [vmem:[%s156 + $0x2648] sm:$0xff]
        %v299 = vld [vmem:[%s156 + $0x2700] sm:$0xff]
        %v300 = vld [vmem:[%s156 + $0x2708] sm:$0xff]
        %v301 = vld [vmem:[%s156 + $0x27c0] sm:$0xff]
        %v302 = vld [vmem:[%s156 + $0x27c8] sm:$0xff]
        %v303 = vld [vmem:[%s156 + $0x2880] sm:$0xff]
        %v304 = vld [vmem:[%s156 + $0x2888] sm:$0xff]
        %v305 = vld [vmem:[%s156 + $0x2940] sm:$0xff]
        %v306 = vld [vmem:[%s156 + $0x2948] sm:$0xff]
        %v307 = vld [vmem:[%s156 + $0x2a00] sm:$0xff]
        %v308 = vld [vmem:[%s156 + $0x2a08] sm:$0xff]
        %v309 = vld [vmem:[%s156 + $0x2ac0] sm:$0xff]
        %v310 = vld [vmem:[%s156 + $0x2ac8] sm:$0xff]
        %v311 = vld [vmem:[%s156 + $0x2b80] sm:$0xff]
        %v312 = vld [vmem:[%s156 + $0x2b88] sm:$0xff]
        %v313 = vld [vmem:[%s156 + $0x2c40] sm:$0xff]
        %v314 = vld [vmem:[%s156 + $0x2c48] sm:$0xff]
        %v315 = vld [vmem:[%s156 + $0x2d00] sm:$0xff]
        %v316 = vld [vmem:[%s156 + $0x2d08] sm:$0xff]
        %v317 = vld [vmem:[%s156 + $0x2dc0] sm:$0xff]
        %v318 = vld [vmem:[%s156 + $0x2dc8] sm:$0xff]
        %v319 = vld [vmem:[%s156 + $0x2e80] sm:$0xff]
        %v320 = vld [vmem:[%s156 + $0x2e88] sm:$0xff]
        %v321 = vld [vmem:[%s156 + $0x2f40] sm:$0xff]
        %v322 = vld [vmem:[%s156 + $0x2f48] sm:$0xff]
        %v323 = vld [vmem:[%s156 + $0x3000] sm:$0xff]
        %v324 = vld [vmem:[%s156 + $0x3008] sm:$0xff]
        %v325 = vld [vmem:[%s156 + $0x30c0] sm:$0xff]
        %v326 = vld [vmem:[%s156 + $0x30c8] sm:$0xff]
        %v327 = vstv %s194
        %v328 = vmul.f32 %v327, %v195
        %v329 = vmul.f32 %v327, %v196
        %v330 = vmul.f32 %v327, %v197
        %v331 = vmul.f32 %v327, %v198
        %v332 = vmul.f32 %v327, %v199
        %v333 = vmul.f32 %v327, %v200
        %v334 = vmul.f32 %v327, %v201
        %v335 = vmul.f32 %v327, %v202
        %v336 = vmul.f32 %v327, %v203
        %v337 = vmul.f32 %v327, %v204
        %v338 = vmul.f32 %v327, %v205
        %v339 = vmul.f32 %v327, %v206
        %v340 = vmul.f32 %v327, %v207
        %v341 = vmul.f32 %v327, %v208
        %v342 = vmul.f32 %v327, %v209
        %v343 = vmul.f32 %v327, %v210
        %v344 = vmul.f32 %v327, %v211
        %v345 = vmul.f32 %v327, %v212
        %v346 = vmul.f32 %v327, %v213
        %v347 = vmul.f32 %v327, %v214
        %v348 = vmul.f32 %v327, %v215
        %v349 = vmul.f32 %v327, %v216
        %v350 = vmul.f32 %v327, %v217
        %v351 = vmul.f32 %v327, %v218
        %v352 = vmul.f32 %v327, %v219
        %v353 = vmul.f32 %v327, %v220
        %v354 = vmul.f32 %v327, %v221
        %v355 = vmul.f32 %v327, %v222
        %v356 = vmul.f32 %v327, %v223
        %v357 = vmul.f32 %v327, %v224
        %v358 = vmul.f32 %v327, %v225
        %v359 = vmul.f32 %v327, %v226
        %v360 = vmul.f32 %v327, %v227
        %v361 = vmul.f32 %v327, %v228
        %v362 = vmul.f32 %v327, %v229
        %v363 = vmul.f32 %v327, %v230
        %v364 = vmul.f32 %v327, %v231
        %v365 = vmul.f32 %v327, %v232
        %v366 = vmul.f32 %v327, %v233
        %v367 = vmul.f32 %v327, %v234
        %v368 = vmul.f32 %v327, %v235
        %v369 = vmul.f32 %v327, %v236
        %v370 = vmul.f32 %v327, %v237
        %v371 = vmul.f32 %v327, %v238
        %v372 = vmul.f32 %v327, %v239
        %v373 = vmul.f32 %v327, %v240
        %v374 = vmul.f32 %v327, %v241
        %v375 = vmul.f32 %v327, %v242
        %v376 = vmul.f32 %v327, %v243
        %v377 = vmul.f32 %v327, %v244
        %v378 = vmul.f32 %v327, %v245
        %v379 = vmul.f32 %v327, %v246
        %v380 = vmul.f32 %v327, %v247
        %v381 = vmul.f32 %v327, %v248
        %v382 = vmul.f32 %v327, %v249
        %v383 = vmul.f32 %v327, %v250
        %v384 = vmul.f32 %v327, %v251
        %v385 = vmul.f32 %v327, %v252
        %v386 = vmul.f32 %v327, %v253
        %v387 = vmul.f32 %v327, %v254
        %v388 = vmul.f32 %v327, %v255
        %v389 = vmul.f32 %v327, %v256
        %v390 = vmul.f32 %v327, %v257
        %v391 = vmul.f32 %v327, %v258
        %v392 = vmul.f32 %v327, %v259
        %v393 = vmul.f32 %v327, %v260
        %v394 = vmul.f32 %v327, %v261
        %v395 = vmul.f32 %v327, %v262
        %v396 = vmul.f32 %v327, %v263
        %v397 = vmul.f32 %v327, %v264
        %v398 = vmul.f32 %v327, %v265
        %v399 = vmul.f32 %v327, %v266
        %v400 = vmul.f32 %v327, %v267
        %v401 = vmul.f32 %v327, %v268
        %v402 = vmul.f32 %v327, %v269
        %v403 = vmul.f32 %v327, %v270
        %v404 = vmul.f32 %v327, %v271
        %v405 = vmul.f32 %v327, %v272
        %v406 = vmul.f32 %v327, %v273
        %v407 = vmul.f32 %v327, %v274
        %v408 = vmul.f32 %v327, %v275
        %v409 = vmul.f32 %v327, %v276
        %v410 = vmul.f32 %v327, %v277
        %v411 = vmul.f32 %v327, %v278
        %v412 = vmul.f32 %v327, %v279
        %v413 = vmul.f32 %v327, %v280
        %v414 = vmul.f32 %v327, %v281
        %v415 = vmul.f32 %v327, %v282
        %v416 = vmul.f32 %v327, %v283
        %v417 = vmul.f32 %v327, %v284
        %v418 = vmul.f32 %v327, %v285
        %v419 = vmul.f32 %v327, %v286
        %v420 = vmul.f32 %v327, %v287
        %v421 = vmul.f32 %v327, %v288
        %v422 = vmul.f32 %v327, %v289
        %v423 = vmul.f32 %v327, %v290
        %v424 = vmul.f32 %v327, %v291
        %v425 = vmul.f32 %v327, %v292
        %v426 = vmul.f32 %v327, %v293
        %v427 = vmul.f32 %v327, %v294
        %v428 = vmul.f32 %v327, %v295
        %v429 = vmul.f32 %v327, %v296
        %v430 = vmul.f32 %v327, %v297
        %v431 = vmul.f32 %v327, %v298
        %v432 = vmul.f32 %v327, %v299
        %v433 = vmul.f32 %v327, %v300
        %v434 = vmul.f32 %v327, %v301
        %v435 = vmul.f32 %v327, %v302
        %v436 = vmul.f32 %v327, %v303
        %v437 = vmul.f32 %v327, %v304
        %v438 = vmul.f32 %v327, %v305
        %v439 = vmul.f32 %v327, %v306
        %v440 = vmul.f32 %v327, %v307
        %v441 = vmul.f32 %v327, %v308
        %v442 = vmul.f32 %v327, %v309
        %v443 = vmul.f32 %v327, %v310
        %v444 = vmul.f32 %v327, %v311
        %v445 = vmul.f32 %v327, %v312
        %v446 = vmul.f32 %v327, %v313
        %v447 = vmul.f32 %v327, %v314
        %v448 = vmul.f32 %v327, %v315
        %v449 = vmul.f32 %v327, %v316
        %v450 = vmul.f32 %v327, %v317
        %v451 = vmul.f32 %v327, %v318
        %v452 = vmul.f32 %v327, %v319
        %v453 = vmul.f32 %v327, %v320
        %v454 = vmul.f32 %v327, %v321
        %v455 = vmul.f32 %v327, %v322
        %v456 = vmul.f32 %v327, %v323
        %v457 = vmul.f32 %v327, %v324
        %v458 = vmul.f32 %v327, %v325
        %v459 = vmul.f32 %v327, %v326
        %s460 = sld [smem:[#allocation6 + $0x1]]
        %v461 = vld [vmem:[%s156 + $0x10] sm:$0xff]
        %v462 = vld [vmem:[%s156 + $0x18] sm:$0xff]
        %v463 = vld [vmem:[%s156 + $0xd0] sm:$0xff]
        %v464 = vld [vmem:[%s156 + $0xd8] sm:$0xff]
        %v465 = vld [vmem:[%s156 + $0x190] sm:$0xff]
        %v466 = vld [vmem:[%s156 + $0x198] sm:$0xff]
        %v467 = vld [vmem:[%s156 + $0x250] sm:$0xff]
        %v468 = vld [vmem:[%s156 + $0x258] sm:$0xff]
        %v469 = vld [vmem:[%s156 + $0x310] sm:$0xff]
        %v470 = vld [vmem:[%s156 + $0x318] sm:$0xff]
        %v471 = vld [vmem:[%s156 + $0x3d0] sm:$0xff]
        %v472 = vld [vmem:[%s156 + $0x3d8] sm:$0xff]
        %v473 = vld [vmem:[%s156 + $0x490] sm:$0xff]
        %v474 = vld [vmem:[%s156 + $0x498] sm:$0xff]
        %v475 = vld [vmem:[%s156 + $0x550] sm:$0xff]
        %v476 = vld [vmem:[%s156 + $0x558] sm:$0xff]
        %v477 = vld [vmem:[%s156 + $0x610] sm:$0xff]
        %v478 = vld [vmem:[%s156 + $0x618] sm:$0xff]
        %v479 = vld [vmem:[%s156 + $0x6d0] sm:$0xff]
        %v480 = vld [vmem:[%s156 + $0x6d8] sm:$0xff]
        %v481 = vld [vmem:[%s156 + $0x790] sm:$0xff]
        %v482 = vld [vmem:[%s156 + $0x798] sm:$0xff]
        %v483 = vld [vmem:[%s156 + $0x850] sm:$0xff]
        %v484 = vld [vmem:[%s156 + $0x858] sm:$0xff]
        %v485 = vld [vmem:[%s156 + $0x910] sm:$0xff]
        %v486 = vld [vmem:[%s156 + $0x918] sm:$0xff]
        %v487 = vld [vmem:[%s156 + $0x9d0] sm:$0xff]
        %v488 = vld [vmem:[%s156 + $0x9d8] sm:$0xff]
        %v489 = vld [vmem:[%s156 + $0xa90] sm:$0xff]
        %v490 = vld [vmem:[%s156 + $0xa98] sm:$0xff]
        %v491 = vld [vmem:[%s156 + $0xb50] sm:$0xff]
        %v492 = vld [vmem:[%s156 + $0xb58] sm:$0xff]
        %v493 = vld [vmem:[%s156 + $0xc10] sm:$0xff]
        %v494 = vld [vmem:[%s156 + $0xc18] sm:$0xff]
        %v495 = vld [vmem:[%s156 + $0xcd0] sm:$0xff]
        %v496 = vld [vmem:[%s156 + $0xcd8] sm:$0xff]
        %v497 = vld [vmem:[%s156 + $0xd90] sm:$0xff]
        %v498 = vld [vmem:[%s156 + $0xd98] sm:$0xff]
        %v499 = vld [vmem:[%s156 + $0xe50] sm:$0xff]
        %v500 = vld [vmem:[%s156 + $0xe58] sm:$0xff]
        %v501 = vld [vmem:[%s156 + $0xf10] sm:$0xff]
        %v502 = vld [vmem:[%s156 + $0xf18] sm:$0xff]
        %v503 = vld [vmem:[%s156 + $0xfd0] sm:$0xff]
        %v504 = vld [vmem:[%s156 + $0xfd8] sm:$0xff]
        %v505 = vld [vmem:[%s156 + $0x1090] sm:$0xff]
        %v506 = vld [vmem:[%s156 + $0x1098] sm:$0xff]
        %v507 = vld [vmem:[%s156 + $0x1150] sm:$0xff]
        %v508 = vld [vmem:[%s156 + $0x1158] sm:$0xff]
        %v509 = vld [vmem:[%s156 + $0x1210] sm:$0xff]
        %v510 = vld [vmem:[%s156 + $0x1218] sm:$0xff]
        %v511 = vld [vmem:[%s156 + $0x12d0] sm:$0xff]
        %v512 = vld [vmem:[%s156 + $0x12d8] sm:$0xff]
        %v513 = vld [vmem:[%s156 + $0x1390] sm:$0xff]
        %v514 = vld [vmem:[%s156 + $0x1398] sm:$0xff]
        %v515 = vld [vmem:[%s156 + $0x1450] sm:$0xff]
        %v516 = vld [vmem:[%s156 + $0x1458] sm:$0xff]
        %v517 = vld [vmem:[%s156 + $0x1510] sm:$0xff]
        %v518 = vld [vmem:[%s156 + $0x1518] sm:$0xff]
        %v519 = vld [vmem:[%s156 + $0x15d0] sm:$0xff]
        %v520 = vld [vmem:[%s156 + $0x15d8] sm:$0xff]
        %v521 = vld [vmem:[%s156 + $0x1690] sm:$0xff]
        %v522 = vld [vmem:[%s156 + $0x1698] sm:$0xff]
        %v523 = vld [vmem:[%s156 + $0x1750] sm:$0xff]
        %v524 = vld [vmem:[%s156 + $0x1758] sm:$0xff]
        %v525 = vld [vmem:[%s156 + $0x1810] sm:$0xff]
        %v526 = vld [vmem:[%s156 + $0x1818] sm:$0xff]
        %v527 = vld [vmem:[%s156 + $0x18d0] sm:$0xff]
        %v528 = vld [vmem:[%s156 + $0x18d8] sm:$0xff]
        %v529 = vld [vmem:[%s156 + $0x1990] sm:$0xff]
        %v530 = vld [vmem:[%s156 + $0x1998] sm:$0xff]
        %v531 = vld [vmem:[%s156 + $0x1a50] sm:$0xff]
        %v532 = vld [vmem:[%s156 + $0x1a58] sm:$0xff]
        %v533 = vld [vmem:[%s156 + $0x1b10] sm:$0xff]
        %v534 = vld [vmem:[%s156 + $0x1b18] sm:$0xff]
        %v535 = vld [vmem:[%s156 + $0x1bd0] sm:$0xff]
        %v536 = vld [vmem:[%s156 + $0x1bd8] sm:$0xff]
        %v537 = vld [vmem:[%s156 + $0x1c90] sm:$0xff]
        %v538 = vld [vmem:[%s156 + $0x1c98] sm:$0xff]
        %v539 = vld [vmem:[%s156 + $0x1d50] sm:$0xff]
        %v540 = vld [vmem:[%s156 + $0x1d58] sm:$0xff]
        %v541 = vld [vmem:[%s156 + $0x1e10] sm:$0xff]
        %v542 = vld [vmem:[%s156 + $0x1e18] sm:$0xff]
        %v543 = vld [vmem:[%s156 + $0x1ed0] sm:$0xff]
        %v544 = vld [vmem:[%s156 + $0x1ed8] sm:$0xff]
        %v545 = vld [vmem:[%s156 + $0x1f90] sm:$0xff]
        %v546 = vld [vmem:[%s156 + $0x1f98] sm:$0xff]
        %v547 = vld [vmem:[%s156 + $0x2050] sm:$0xff]
        %v548 = vld [vmem:[%s156 + $0x2058] sm:$0xff]
        %v549 = vld [vmem:[%s156 + $0x2110] sm:$0xff]
        %v550 = vld [vmem:[%s156 + $0x2118] sm:$0xff]
        %v551 = vld [vmem:[%s156 + $0x21d0] sm:$0xff]
        %v552 = vld [vmem:[%s156 + $0x21d8] sm:$0xff]
        %v553 = vld [vmem:[%s156 + $0x2290] sm:$0xff]
        %v554 = vld [vmem:[%s156 + $0x2298] sm:$0xff]
        %v555 = vld [vmem:[%s156 + $0x2350] sm:$0xff]
        %v556 = vld [vmem:[%s156 + $0x2358] sm:$0xff]
        %v557 = vld [vmem:[%s156 + $0x2410] sm:$0xff]
        %v558 = vld [vmem:[%s156 + $0x2418] sm:$0xff]
        %v559 = vld [vmem:[%s156 + $0x24d0] sm:$0xff]
        %v560 = vld [vmem:[%s156 + $0x24d8] sm:$0xff]
        %v561 = vld [vmem:[%s156 + $0x2590] sm:$0xff]
        %v562 = vld [vmem:[%s156 + $0x2598] sm:$0xff]
        %v563 = vld [vmem:[%s156 + $0x2650] sm:$0xff]
        %v564 = vld [vmem:[%s156 + $0x2658] sm:$0xff]
        %v565 = vld [vmem:[%s156 + $0x2710] sm:$0xff]
        %v566 = vld [vmem:[%s156 + $0x2718] sm:$0xff]
        %v567 = vld [vmem:[%s156 + $0x27d0] sm:$0xff]
        %v568 = vld [vmem:[%s156 + $0x27d8] sm:$0xff]
        %v569 = vld [vmem:[%s156 + $0x2890] sm:$0xff]
        %v570 = vld [vmem:[%s156 + $0x2898] sm:$0xff]
        %v571 = vld [vmem:[%s156 + $0x2950] sm:$0xff]
        %v572 = vld [vmem:[%s156 + $0x2958] sm:$0xff]
        %v573 = vld [vmem:[%s156 + $0x2a10] sm:$0xff]
        %v574 = vld [vmem:[%s156 + $0x2a18] sm:$0xff]
        %v575 = vld [vmem:[%s156 + $0x2ad0] sm:$0xff]
        %v576 = vld [vmem:[%s156 + $0x2ad8] sm:$0xff]
        %v577 = vld [vmem:[%s156 + $0x2b90] sm:$0xff]
        %v578 = vld [vmem:[%s156 + $0x2b98] sm:$0xff]
        %v579 = vld [vmem:[%s156 + $0x2c50] sm:$0xff]
        %v580 = vld [vmem:[%s156 + $0x2c58] sm:$0xff]
        %v581 = vld [vmem:[%s156 + $0x2d10] sm:$0xff]
        %v582 = vld [vmem:[%s156 + $0x2d18] sm:$0xff]
        %v583 = vld [vmem:[%s156 + $0x2dd0] sm:$0xff]
        %v584 = vld [vmem:[%s156 + $0x2dd8] sm:$0xff]
        %v585 = vld [vmem:[%s156 + $0x2e90] sm:$0xff]
        %v586 = vld [vmem:[%s156 + $0x2e98] sm:$0xff]
        %v587 = vld [vmem:[%s156 + $0x2f50] sm:$0xff]
        %v588 = vld [vmem:[%s156 + $0x2f58] sm:$0xff]
        %v589 = vld [vmem:[%s156 + $0x3010] sm:$0xff]
        %v590 = vld [vmem:[%s156 + $0x3018] sm:$0xff]
        %v591 = vld [vmem:[%s156 + $0x30d0] sm:$0xff]
        %v592 = vld [vmem:[%s156 + $0x30d8] sm:$0xff]
        %v593 = vstv %s460
        %v594 = vmul.f32 %v593, %v461
        %v595 = vmul.f32 %v593, %v462
        %v596 = vmul.f32 %v593, %v463
        %v597 = vmul.f32 %v593, %v464
        %v598 = vmul.f32 %v593, %v465
        %v599 = vmul.f32 %v593, %v466
        %v600 = vmul.f32 %v593, %v467
        %v601 = vmul.f32 %v593, %v468
        %v602 = vmul.f32 %v593, %v469
        %v603 = vmul.f32 %v593, %v470
        %v604 = vmul.f32 %v593, %v471
        %v605 = vmul.f32 %v593, %v472
        %v606 = vmul.f32 %v593, %v473
        %v607 = vmul.f32 %v593, %v474
        %v608 = vmul.f32 %v593, %v475
        %v609 = vmul.f32 %v593, %v476
        %v610 = vmul.f32 %v593, %v477
        %v611 = vmul.f32 %v593, %v478
        %v612 = vmul.f32 %v593, %v479
        %v613 = vmul.f32 %v593, %v480
        %v614 = vmul.f32 %v593, %v481
        %v615 = vmul.f32 %v593, %v482
        %v616 = vmul.f32 %v593, %v483
        %v617 = vmul.f32 %v593, %v484
        %v618 = vmul.f32 %v593, %v485
        %v619 = vmul.f32 %v593, %v486
        %v620 = vmul.f32 %v593, %v487
        %v621 = vmul.f32 %v593, %v488
        %v622 = vmul.f32 %v593, %v489
        %v623 = vmul.f32 %v593, %v490
        %v624 = vmul.f32 %v593, %v491
        %v625 = vmul.f32 %v593, %v492
        %v626 = vmul.f32 %v593, %v493
        %v627 = vmul.f32 %v593, %v494
        %v628 = vmul.f32 %v593, %v495
        %v629 = vmul.f32 %v593, %v496
        %v630 = vmul.f32 %v593, %v497
        %v631 = vmul.f32 %v593, %v498
        %v632 = vmul.f32 %v593, %v499
        %v633 = vmul.f32 %v593, %v500
        %v634 = vmul.f32 %v593, %v501
        %v635 = vmul.f32 %v593, %v502
        %v636 = vmul.f32 %v593, %v503
        %v637 = vmul.f32 %v593, %v504
        %v638 = vmul.f32 %v593, %v505
        %v639 = vmul.f32 %v593, %v506
        %v640 = vmul.f32 %v593, %v507
        %v641 = vmul.f32 %v593, %v508
        %v642 = vmul.f32 %v593, %v509
        %v643 = vmul.f32 %v593, %v510
        %v644 = vmul.f32 %v593, %v511
        %v645 = vmul.f32 %v593, %v512
        %v646 = vmul.f32 %v593, %v513
        %v647 = vmul.f32 %v593, %v514
        %v648 = vmul.f32 %v593, %v515
        %v649 = vmul.f32 %v593, %v516
        %v650 = vmul.f32 %v593, %v517
        %v651 = vmul.f32 %v593, %v518
        %v652 = vmul.f32 %v593, %v519
        %v653 = vmul.f32 %v593, %v520
        %v654 = vmul.f32 %v593, %v521
        %v655 = vmul.f32 %v593, %v522
        %v656 = vmul.f32 %v593, %v523
        %v657 = vmul.f32 %v593, %v524
        %v658 = vmul.f32 %v593, %v525
        %v659 = vmul.f32 %v593, %v526
        %v660 = vmul.f32 %v593, %v527
        %v661 = vmul.f32 %v593, %v528
        %v662 = vmul.f32 %v593, %v529
        %v663 = vmul.f32 %v593, %v530
        %v664 = vmul.f32 %v593, %v531
        %v665 = vmul.f32 %v593, %v532
        %v666 = vmul.f32 %v593, %v533
        %v667 = vmul.f32 %v593, %v534
        %v668 = vmul.f32 %v593, %v535
        %v669 = vmul.f32 %v593, %v536
        %v670 = vmul.f32 %v593, %v537
        %v671 = vmul.f32 %v593, %v538
        %v672 = vmul.f32 %v593, %v539
        %v673 = vmul.f32 %v593, %v540
        %v674 = vmul.f32 %v593, %v541
        %v675 = vmul.f32 %v593, %v542
        %v676 = vmul.f32 %v593, %v543
        %v677 = vmul.f32 %v593, %v544
        %v678 = vmul.f32 %v593, %v545
        %v679 = vmul.f32 %v593, %v546
        %v680 = vmul.f32 %v593, %v547
        %v681 = vmul.f32 %v593, %v548
        %v682 = vmul.f32 %v593, %v549
        %v683 = vmul.f32 %v593, %v550
        %v684 = vmul.f32 %v593, %v551
        %v685 = vmul.f32 %v593, %v552
        %v686 = vmul.f32 %v593, %v553
        %v687 = vmul.f32 %v593, %v554
        %v688 = vmul.f32 %v593, %v555
        %v689 = vmul.f32 %v593, %v556
        %v690 = vmul.f32 %v593, %v557
        %v691 = vmul.f32 %v593, %v558
        %v692 = vmul.f32 %v593, %v559
        %v693 = vmul.f32 %v593, %v560
        %v694 = vmul.f32 %v593, %v561
        %v695 = vmul.f32 %v593, %v562
        %v696 = vmul.f32 %v593, %v563
        %v697 = vmul.f32 %v593, %v564
        %v698 = vmul.f32 %v593, %v565
        %v699 = vmul.f32 %v593, %v566
        %v700 = vmul.f32 %v593, %v567
        %v701 = vmul.f32 %v593, %v568
        %v702 = vmul.f32 %v593, %v569
        %v703 = vmul.f32 %v593, %v570
        %v704 = vmul.f32 %v593, %v571
        %v705 = vmul.f32 %v593, %v572
        %v706 = vmul.f32 %v593, %v573
        %v707 = vmul.f32 %v593, %v574
        %v708 = vmul.f32 %v593, %v575
        %v709 = vmul.f32 %v593, %v576
        %v710 = vmul.f32 %v593, %v577
        %v711 = vmul.f32 %v593, %v578
        %v712 = vmul.f32 %v593, %v579
        %v713 = vmul.f32 %v593, %v580
        %v714 = vmul.f32 %v593, %v581
        %v715 = vmul.f32 %v593, %v582
        %v716 = vmul.f32 %v593, %v583
        %v717 = vmul.f32 %v593, %v584
        %v718 = vmul.f32 %v593, %v585
        %v719 = vmul.f32 %v593, %v586
        %v720 = vmul.f32 %v593, %v587
        %v721 = vmul.f32 %v593, %v588
        %v722 = vmul.f32 %v593, %v589
        %v723 = vmul.f32 %v593, %v590
        %v724 = vmul.f32 %v593, %v591
        %v725 = vmul.f32 %v593, %v592
        %v726 = vadd.f32 %v328, %v594
        %v727 = vadd.f32 %v329, %v595
        %v728 = vadd.f32 %v330, %v596
        %v729 = vadd.f32 %v331, %v597
        %v730 = vadd.f32 %v332, %v598
        %v731 = vadd.f32 %v333, %v599
        %v732 = vadd.f32 %v334, %v600
        %v733 = vadd.f32 %v335, %v601
        %v734 = vadd.f32 %v336, %v602
        %v735 = vadd.f32 %v337, %v603
        %v736 = vadd.f32 %v338, %v604
        %v737 = vadd.f32 %v339, %v605
        %v738 = vadd.f32 %v340, %v606
        %v739 = vadd.f32 %v341, %v607
        %v740 = vadd.f32 %v342, %v608
        %v741 = vadd.f32 %v343, %v609
        %v742 = vadd.f32 %v344, %v610
        %v743 = vadd.f32 %v345, %v611
        %v744 = vadd.f32 %v346, %v612
        %v745 = vadd.f32 %v347, %v613
        %v746 = vadd.f32 %v348, %v614
        %v747 = vadd.f32 %v349, %v615
        %v748 = vadd.f32 %v350, %v616
        %v749 = vadd.f32 %v351, %v617
        %v750 = vadd.f32 %v352, %v618
        %v751 = vadd.f32 %v353, %v619
        %v752 = vadd.f32 %v354, %v620
        %v753 = vadd.f32 %v355, %v621
        %v754 = vadd.f32 %v356, %v622
        %v755 = vadd.f32 %v357, %v623
        %v756 = vadd.f32 %v358, %v624
        %v757 = vadd.f32 %v359, %v625
        %v758 = vadd.f32 %v360, %v626
        %v759 = vadd.f32 %v361, %v627
        %v760 = vadd.f32 %v362, %v628
        %v761 = vadd.f32 %v363, %v629
        %v762 = vadd.f32 %v364, %v630
        %v763 = vadd.f32 %v365, %v631
        %v764 = vadd.f32 %v366, %v632
        %v765 = vadd.f32 %v367, %v633
        %v766 = vadd.f32 %v368, %v634
        %v767 = vadd.f32 %v369, %v635
        %v768 = vadd.f32 %v370, %v636
        %v769 = vadd.f32 %v371, %v637
        %v770 = vadd.f32 %v372, %v638
        %v771 = vadd.f32 %v373, %v639
        %v772 = vadd.f32 %v374, %v640
        %v773 = vadd.f32 %v375, %v641
        %v774 = vadd.f32 %v376, %v642
        %v775 = vadd.f32 %v377, %v643
        %v776 = vadd.f32 %v378, %v644
        %v777 = vadd.f32 %v379, %v645
        %v778 = vadd.f32 %v380, %v646
        %v779 = vadd.f32 %v381, %v647
        %v780 = vadd.f32 %v382, %v648
        %v781 = vadd.f32 %v383, %v649
        %v782 = vadd.f32 %v384, %v650
        %v783 = vadd.f32 %v385, %v651
        %v784 = vadd.f32 %v386, %v652
        %v785 = vadd.f32 %v387, %v653
        %v786 = vadd.f32 %v388, %v654
        %v787 = vadd.f32 %v389, %v655
        %v788 = vadd.f32 %v390, %v656
        %v789 = vadd.f32 %v391, %v657
        %v790 = vadd.f32 %v392, %v658
        %v791 = vadd.f32 %v393, %v659
        %v792 = vadd.f32 %v394, %v660
        %v793 = vadd.f32 %v395, %v661
        %v794 = vadd.f32 %v396, %v662
        %v795 = vadd.f32 %v397, %v663
        %v796 = vadd.f32 %v398, %v664
        %v797 = vadd.f32 %v399, %v665
        %v798 = vadd.f32 %v400, %v666
        %v799 = vadd.f32 %v401, %v667
        %v800 = vadd.f32 %v402, %v668
        %v801 = vadd.f32 %v403, %v669
        %v802 = vadd.f32 %v404, %v670
        %v803 = vadd.f32 %v405, %v671
        %v804 = vadd.f32 %v406, %v672
        %v805 = vadd.f32 %v407, %v673
        %v806 = vadd.f32 %v408, %v674
        %v807 = vadd.f32 %v409, %v675
        %v808 = vadd.f32 %v410, %v676
        %v809 = vadd.f32 %v411, %v677
        %v810 = vadd.f32 %v412, %v678
        %v811 = vadd.f32 %v413, %v679
        %v812 = vadd.f32 %v414, %v680
        %v813 = vadd.f32 %v415, %v681
        %v814 = vadd.f32 %v416, %v682
        %v815 = vadd.f32 %v417, %v683
        %v816 = vadd.f32 %v418, %v684
        %v817 = vadd.f32 %v419, %v685
        %v818 = vadd.f32 %v420, %v686
        %v819 = vadd.f32 %v421, %v687
        %v820 = vadd.f32 %v422, %v688
        %v821 = vadd.f32 %v423, %v689
        %v822 = vadd.f32 %v424, %v690
        %v823 = vadd.f32 %v425, %v691
        %v824 = vadd.f32 %v426, %v692
        %v825 = vadd.f32 %v427, %v693
        %v826 = vadd.f32 %v428, %v694
        %v827 = vadd.f32 %v429, %v695
        %v828 = vadd.f32 %v430, %v696
        %v829 = vadd.f32 %v431, %v697
        %v830 = vadd.f32 %v432, %v698
        %v831 = vadd.f32 %v433, %v699
        %v832 = vadd.f32 %v434, %v700
        %v833 = vadd.f32 %v435, %v701
        %v834 = vadd.f32 %v436, %v702
        %v835 = vadd.f32 %v437, %v703
        %v836 = vadd.f32 %v438, %v704
        %v837 = vadd.f32 %v439, %v705
        %v838 = vadd.f32 %v440, %v706
        %v839 = vadd.f32 %v441, %v707
        %v840 = vadd.f32 %v442, %v708
        %v841 = vadd.f32 %v443, %v709
        %v842 = vadd.f32 %v444, %v710
        %v843 = vadd.f32 %v445, %v711
        %v844 = vadd.f32 %v446, %v712
        %v845 = vadd.f32 %v447, %v713
        %v846 = vadd.f32 %v448, %v714
        %v847 = vadd.f32 %v449, %v715
        %v848 = vadd.f32 %v450, %v716
        %v849 = vadd.f32 %v451, %v717
        %v850 = vadd.f32 %v452, %v718
        %v851 = vadd.f32 %v453, %v719
        %v852 = vadd.f32 %v454, %v720
        %v853 = vadd.f32 %v455, %v721
        %v854 = vadd.f32 %v456, %v722
        %v855 = vadd.f32 %v457, %v723
        %v856 = vadd.f32 %v458, %v724
        %v857 = vadd.f32 %v459, %v725
        %s858 = sld [smem:[#allocation6 + $0x2]]
        %v859 = vld [vmem:[%s156 + $0x20] sm:$0xff]
        %v860 = vld [vmem:[%s156 + $0x28] sm:$0xff]
        %v861 = vld [vmem:[%s156 + $0xe0] sm:$0xff]
        %v862 = vld [vmem:[%s156 + $0xe8] sm:$0xff]
        %v863 = vld [vmem:[%s156 + $0x1a0] sm:$0xff]
        %v864 = vld [vmem:[%s156 + $0x1a8] sm:$0xff]
        %v865 = vld [vmem:[%s156 + $0x260] sm:$0xff]
        %v866 = vld [vmem:[%s156 + $0x268] sm:$0xff]
        %v867 = vld [vmem:[%s156 + $0x320] sm:$0xff]
        %v868 = vld [vmem:[%s156 + $0x328] sm:$0xff]
        %v869 = vld [vmem:[%s156 + $0x3e0] sm:$0xff]
        %v870 = vld [vmem:[%s156 + $0x3e8] sm:$0xff]
        %v871 = vld [vmem:[%s156 + $0x4a0] sm:$0xff]
        %v872 = vld [vmem:[%s156 + $0x4a8] sm:$0xff]
        %v873 = vld [vmem:[%s156 + $0x560] sm:$0xff]
        %v874 = vld [vmem:[%s156 + $0x568] sm:$0xff]
        %v875 = vld [vmem:[%s156 + $0x620] sm:$0xff]
        %v876 = vld [vmem:[%s156 + $0x628] sm:$0xff]
        %v877 = vld [vmem:[%s156 + $0x6e0] sm:$0xff]
        %v878 = vld [vmem:[%s156 + $0x6e8] sm:$0xff]
        %v879 = vld [vmem:[%s156 + $0x7a0] sm:$0xff]
        %v880 = vld [vmem:[%s156 + $0x7a8] sm:$0xff]
        %v881 = vld [vmem:[%s156 + $0x860] sm:$0xff]
        %v882 = vld [vmem:[%s156 + $0x868] sm:$0xff]
        %v883 = vld [vmem:[%s156 + $0x920] sm:$0xff]
        %v884 = vld [vmem:[%s156 + $0x928] sm:$0xff]
        %v885 = vld [vmem:[%s156 + $0x9e0] sm:$0xff]
        %v886 = vld [vmem:[%s156 + $0x9e8] sm:$0xff]
        %v887 = vld [vmem:[%s156 + $0xaa0] sm:$0xff]
        %v888 = vld [vmem:[%s156 + $0xaa8] sm:$0xff]
        %v889 = vld [vmem:[%s156 + $0xb60] sm:$0xff]
        %v890 = vld [vmem:[%s156 + $0xb68] sm:$0xff]
        %v891 = vld [vmem:[%s156 + $0xc20] sm:$0xff]
        %v892 = vld [vmem:[%s156 + $0xc28] sm:$0xff]
        %v893 = vld [vmem:[%s156 + $0xce0] sm:$0xff]
        %v894 = vld [vmem:[%s156 + $0xce8] sm:$0xff]
        %v895 = vld [vmem:[%s156 + $0xda0] sm:$0xff]
        %v896 = vld [vmem:[%s156 + $0xda8] sm:$0xff]
        %v897 = vld [vmem:[%s156 + $0xe60] sm:$0xff]
        %v898 = vld [vmem:[%s156 + $0xe68] sm:$0xff]
        %v899 = vld [vmem:[%s156 + $0xf20] sm:$0xff]
        %v900 = vld [vmem:[%s156 + $0xf28] sm:$0xff]
        %v901 = vld [vmem:[%s156 + $0xfe0] sm:$0xff]
        %v902 = vld [vmem:[%s156 + $0xfe8] sm:$0xff]
        %v903 = vld [vmem:[%s156 + $0x10a0] sm:$0xff]
        %v904 = vld [vmem:[%s156 + $0x10a8] sm:$0xff]
        %v905 = vld [vmem:[%s156 + $0x1160] sm:$0xff]
        %v906 = vld [vmem:[%s156 + $0x1168] sm:$0xff]
        %v907 = vld [vmem:[%s156 + $0x1220] sm:$0xff]
        %v908 = vld [vmem:[%s156 + $0x1228] sm:$0xff]
        %v909 = vld [vmem:[%s156 + $0x12e0] sm:$0xff]
        %v910 = vld [vmem:[%s156 + $0x12e8] sm:$0xff]
        %v911 = vld [vmem:[%s156 + $0x13a0] sm:$0xff]
        %v912 = vld [vmem:[%s156 + $0x13a8] sm:$0xff]
        %v913 = vld [vmem:[%s156 + $0x1460] sm:$0xff]
        %v914 = vld [vmem:[%s156 + $0x1468] sm:$0xff]
        %v915 = vld [vmem:[%s156 + $0x1520] sm:$0xff]
        %v916 = vld [vmem:[%s156 + $0x1528] sm:$0xff]
        %v917 = vld [vmem:[%s156 + $0x15e0] sm:$0xff]
        %v918 = vld [vmem:[%s156 + $0x15e8] sm:$0xff]
        %v919 = vld [vmem:[%s156 + $0x16a0] sm:$0xff]
        %v920 = vld [vmem:[%s156 + $0x16a8] sm:$0xff]
        %v921 = vld [vmem:[%s156 + $0x1760] sm:$0xff]
        %v922 = vld [vmem:[%s156 + $0x1768] sm:$0xff]
        %v923 = vld [vmem:[%s156 + $0x1820] sm:$0xff]
        %v924 = vld [vmem:[%s156 + $0x1828] sm:$0xff]
        %v925 = vld [vmem:[%s156 + $0x18e0] sm:$0xff]
        %v926 = vld [vmem:[%s156 + $0x18e8] sm:$0xff]
        %v927 = vld [vmem:[%s156 + $0x19a0] sm:$0xff]
        %v928 = vld [vmem:[%s156 + $0x19a8] sm:$0xff]
        %v929 = vld [vmem:[%s156 + $0x1a60] sm:$0xff]
        %v930 = vld [vmem:[%s156 + $0x1a68] sm:$0xff]
        %v931 = vld [vmem:[%s156 + $0x1b20] sm:$0xff]
        %v932 = vld [vmem:[%s156 + $0x1b28] sm:$0xff]
        %v933 = vld [vmem:[%s156 + $0x1be0] sm:$0xff]
        %v934 = vld [vmem:[%s156 + $0x1be8] sm:$0xff]
        %v935 = vld [vmem:[%s156 + $0x1ca0] sm:$0xff]
        %v936 = vld [vmem:[%s156 + $0x1ca8] sm:$0xff]
        %v937 = vld [vmem:[%s156 + $0x1d60] sm:$0xff]
        %v938 = vld [vmem:[%s156 + $0x1d68] sm:$0xff]
        %v939 = vld [vmem:[%s156 + $0x1e20] sm:$0xff]
        %v940 = vld [vmem:[%s156 + $0x1e28] sm:$0xff]
        %v941 = vld [vmem:[%s156 + $0x1ee0] sm:$0xff]
        %v942 = vld [vmem:[%s156 + $0x1ee8] sm:$0xff]
        %v943 = vld [vmem:[%s156 + $0x1fa0] sm:$0xff]
        %v944 = vld [vmem:[%s156 + $0x1fa8] sm:$0xff]
        %v945 = vld [vmem:[%s156 + $0x2060] sm:$0xff]
        %v946 = vld [vmem:[%s156 + $0x2068] sm:$0xff]
        %v947 = vld [vmem:[%s156 + $0x2120] sm:$0xff]
        %v948 = vld [vmem:[%s156 + $0x2128] sm:$0xff]
        %v949 = vld [vmem:[%s156 + $0x21e0] sm:$0xff]
        %v950 = vld [vmem:[%s156 + $0x21e8] sm:$0xff]
        %v951 = vld [vmem:[%s156 + $0x22a0] sm:$0xff]
        %v952 = vld [vmem:[%s156 + $0x22a8] sm:$0xff]
        %v953 = vld [vmem:[%s156 + $0x2360] sm:$0xff]
        %v954 = vld [vmem:[%s156 + $0x2368] sm:$0xff]
        %v955 = vld [vmem:[%s156 + $0x2420] sm:$0xff]
        %v956 = vld [vmem:[%s156 + $0x2428] sm:$0xff]
        %v957 = vld [vmem:[%s156 + $0x24e0] sm:$0xff]
        %v958 = vld [vmem:[%s156 + $0x24e8] sm:$0xff]
        %v959 = vld [vmem:[%s156 + $0x25a0] sm:$0xff]
        %v960 = vld [vmem:[%s156 + $0x25a8] sm:$0xff]
        %v961 = vld [vmem:[%s156 + $0x2660] sm:$0xff]
        %v962 = vld [vmem:[%s156 + $0x2668] sm:$0xff]
        %v963 = vld [vmem:[%s156 + $0x2720] sm:$0xff]
        %v964 = vld [vmem:[%s156 + $0x2728] sm:$0xff]
        %v965 = vld [vmem:[%s156 + $0x27e0] sm:$0xff]
        %v966 = vld [vmem:[%s156 + $0x27e8] sm:$0xff]
        %v967 = vld [vmem:[%s156 + $0x28a0] sm:$0xff]
        %v968 = vld [vmem:[%s156 + $0x28a8] sm:$0xff]
        %v969 = vld [vmem:[%s156 + $0x2960] sm:$0xff]
        %v970 = vld [vmem:[%s156 + $0x2968] sm:$0xff]
        %v971 = vld [vmem:[%s156 + $0x2a20] sm:$0xff]
        %v972 = vld [vmem:[%s156 + $0x2a28] sm:$0xff]
        %v973 = vld [vmem:[%s156 + $0x2ae0] sm:$0xff]
        %v974 = vld [vmem:[%s156 + $0x2ae8] sm:$0xff]
        %v975 = vld [vmem:[%s156 + $0x2ba0] sm:$0xff]
        %v976 = vld [vmem:[%s156 + $0x2ba8] sm:$0xff]
        %v977 = vld [vmem:[%s156 + $0x2c60] sm:$0xff]
        %v978 = vld [vmem:[%s156 + $0x2c68] sm:$0xff]
        %v979 = vld [vmem:[%s156 + $0x2d20] sm:$0xff]
        %v980 = vld [vmem:[%s156 + $0x2d28] sm:$0xff]
        %v981 = vld [vmem:[%s156 + $0x2de0] sm:$0xff]
        %v982 = vld [vmem:[%s156 + $0x2de8] sm:$0xff]
        %v983 = vld [vmem:[%s156 + $0x2ea0] sm:$0xff]
        %v984 = vld [vmem:[%s156 + $0x2ea8] sm:$0xff]
        %v985 = vld [vmem:[%s156 + $0x2f60] sm:$0xff]
        %v986 = vld [vmem:[%s156 + $0x2f68] sm:$0xff]
        %v987 = vld [vmem:[%s156 + $0x3020] sm:$0xff]
        %v988 = vld [vmem:[%s156 + $0x3028] sm:$0xff]
        %v989 = vld [vmem:[%s156 + $0x30e0] sm:$0xff]
        %v990 = vld [vmem:[%s156 + $0x30e8] sm:$0xff]
        %v991 = vstv %s858
        %v992 = vmul.f32 %v991, %v859
        %v993 = vmul.f32 %v991, %v860
        %v994 = vmul.f32 %v991, %v861
        %v995 = vmul.f32 %v991, %v862
        %v996 = vmul.f32 %v991, %v863
        %v997 = vmul.f32 %v991, %v864
        %v998 = vmul.f32 %v991, %v865
        %v999 = vmul.f32 %v991, %v866
        %v1000 = vmul.f32 %v991, %v867
        %v1001 = vmul.f32 %v991, %v868
        %v1002 = vmul.f32 %v991, %v869
        %v1003 = vmul.f32 %v991, %v870
        %v1004 = vmul.f32 %v991, %v871
        %v1005 = vmul.f32 %v991, %v872
        %v1006 = vmul.f32 %v991, %v873
        %v1007 = vmul.f32 %v991, %v874
        %v1008 = vmul.f32 %v991, %v875
        %v1009 = vmul.f32 %v991, %v876
        %v1010 = vmul.f32 %v991, %v877
        %v1011 = vmul.f32 %v991, %v878
        %v1012 = vmul.f32 %v991, %v879
        %v1013 = vmul.f32 %v991, %v880
        %v1014 = vmul.f32 %v991, %v881
        %v1015 = vmul.f32 %v991, %v882
        %v1016 = vmul.f32 %v991, %v883
        %v1017 = vmul.f32 %v991, %v884
        %v1018 = vmul.f32 %v991, %v885
        %v1019 = vmul.f32 %v991, %v886
        %v1020 = vmul.f32 %v991, %v887
        %v1021 = vmul.f32 %v991, %v888
        %v1022 = vmul.f32 %v991, %v889
        %v1023 = vmul.f32 %v991, %v890
        %v1024 = vmul.f32 %v991, %v891
        %v1025 = vmul.f32 %v991, %v892
        %v1026 = vmul.f32 %v991, %v893
        %v1027 = vmul.f32 %v991, %v894
        %v1028 = vmul.f32 %v991, %v895
        %v1029 = vmul.f32 %v991, %v896
        %v1030 = vmul.f32 %v991, %v897
        %v1031 = vmul.f32 %v991, %v898
        %v1032 = vmul.f32 %v991, %v899
        %v1033 = vmul.f32 %v991, %v900
        %v1034 = vmul.f32 %v991, %v901
        %v1035 = vmul.f32 %v991, %v902
        %v1036 = vmul.f32 %v991, %v903
        %v1037 = vmul.f32 %v991, %v904
        %v1038 = vmul.f32 %v991, %v905
        %v1039 = vmul.f32 %v991, %v906
        %v1040 = vmul.f32 %v991, %v907
        %v1041 = vmul.f32 %v991, %v908
        %v1042 = vmul.f32 %v991, %v909
        %v1043 = vmul.f32 %v991, %v910
        %v1044 = vmul.f32 %v991, %v911
        %v1045 = vmul.f32 %v991, %v912
        %v1046 = vmul.f32 %v991, %v913
        %v1047 = vmul.f32 %v991, %v914
        %v1048 = vmul.f32 %v991, %v915
        %v1049 = vmul.f32 %v991, %v916
        %v1050 = vmul.f32 %v991, %v917
        %v1051 = vmul.f32 %v991, %v918
        %v1052 = vmul.f32 %v991, %v919
        %v1053 = vmul.f32 %v991, %v920
        %v1054 = vmul.f32 %v991, %v921
        %v1055 = vmul.f32 %v991, %v922
        %v1056 = vmul.f32 %v991, %v923
        %v1057 = vmul.f32 %v991, %v924
        %v1058 = vmul.f32 %v991, %v925
        %v1059 = vmul.f32 %v991, %v926
        %v1060 = vmul.f32 %v991, %v927
        %v1061 = vmul.f32 %v991, %v928
        %v1062 = vmul.f32 %v991, %v929
        %v1063 = vmul.f32 %v991, %v930
        %v1064 = vmul.f32 %v991, %v931
        %v1065 = vmul.f32 %v991, %v932
        %v1066 = vmul.f32 %v991, %v933
        %v1067 = vmul.f32 %v991, %v934
        %v1068 = vmul.f32 %v991, %v935
        %v1069 = vmul.f32 %v991, %v936
        %v1070 = vmul.f32 %v991, %v937
        %v1071 = vmul.f32 %v991, %v938
        %v1072 = vmul.f32 %v991, %v939
        %v1073 = vmul.f32 %v991, %v940
        %v1074 = vmul.f32 %v991, %v941
        %v1075 = vmul.f32 %v991, %v942
        %v1076 = vmul.f32 %v991, %v943
        %v1077 = vmul.f32 %v991, %v944
        %v1078 = vmul.f32 %v991, %v945
        %v1079 = vmul.f32 %v991, %v946
        %v1080 = vmul.f32 %v991, %v947
        %v1081 = vmul.f32 %v991, %v948
        %v1082 = vmul.f32 %v991, %v949
        %v1083 = vmul.f32 %v991, %v950
        %v1084 = vmul.f32 %v991, %v951
        %v1085 = vmul.f32 %v991, %v952
        %v1086 = vmul.f32 %v991, %v953
        %v1087 = vmul.f32 %v991, %v954
        %v1088 = vmul.f32 %v991, %v955
        %v1089 = vmul.f32 %v991, %v956
        %v1090 = vmul.f32 %v991, %v957
        %v1091 = vmul.f32 %v991, %v958
        %v1092 = vmul.f32 %v991, %v959
        %v1093 = vmul.f32 %v991, %v960
        %v1094 = vmul.f32 %v991, %v961
        %v1095 = vmul.f32 %v991, %v962
        %v1096 = vmul.f32 %v991, %v963
        %v1097 = vmul.f32 %v991, %v964
        %v1098 = vmul.f32 %v991, %v965
        %v1099 = vmul.f32 %v991, %v966
        %v1100 = vmul.f32 %v991, %v967
        %v1101 = vmul.f32 %v991, %v968
        %v1102 = vmul.f32 %v991, %v969
        %v1103 = vmul.f32 %v991, %v970
        %v1104 = vmul.f32 %v991, %v971
        %v1105 = vmul.f32 %v991, %v972
        %v1106 = vmul.f32 %v991, %v973
        %v1107 = vmul.f32 %v991, %v974
        %v1108 = vmul.f32 %v991, %v975
        %v1109 = vmul.f32 %v991, %v976
        %v1110 = vmul.f32 %v991, %v977
        %v1111 = vmul.f32 %v991, %v978
        %v1112 = vmul.f32 %v991, %v979
        %v1113 = vmul.f32 %v991, %v980
        %v1114 = vmul.f32 %v991, %v981
        %v1115 = vmul.f32 %v991, %v982
        %v1116 = vmul.f32 %v991, %v983
        %v1117 = vmul.f32 %v991, %v984
        %v1118 = vmul.f32 %v991, %v985
        %v1119 = vmul.f32 %v991, %v986
        %v1120 = vmul.f32 %v991, %v987
        %v1121 = vmul.f32 %v991, %v988
        %v1122 = vmul.f32 %v991, %v989
        %v1123 = vmul.f32 %v991, %v990
        %v1124 = vadd.f32 %v726, %v992
        %v1125 = vadd.f32 %v727, %v993
        %v1126 = vadd.f32 %v728, %v994
        %v1127 = vadd.f32 %v729, %v995
        %v1128 = vadd.f32 %v730, %v996
        %v1129 = vadd.f32 %v731, %v997
        %v1130 = vadd.f32 %v732, %v998
        %v1131 = vadd.f32 %v733, %v999
        %v1132 = vadd.f32 %v734, %v1000
        %v1133 = vadd.f32 %v735, %v1001
        %v1134 = vadd.f32 %v736, %v1002
        %v1135 = vadd.f32 %v737, %v1003
        %v1136 = vadd.f32 %v738, %v1004
        %v1137 = vadd.f32 %v739, %v1005
        %v1138 = vadd.f32 %v740, %v1006
        %v1139 = vadd.f32 %v741, %v1007
        %v1140 = vadd.f32 %v742, %v1008
        %v1141 = vadd.f32 %v743, %v1009
        %v1142 = vadd.f32 %v744, %v1010
        %v1143 = vadd.f32 %v745, %v1011
        %v1144 = vadd.f32 %v746, %v1012
        %v1145 = vadd.f32 %v747, %v1013
        %v1146 = vadd.f32 %v748, %v1014
        %v1147 = vadd.f32 %v749, %v1015
        %v1148 = vadd.f32 %v750, %v1016
        %v1149 = vadd.f32 %v751, %v1017
        %v1150 = vadd.f32 %v752, %v1018
        %v1151 = vadd.f32 %v753, %v1019
        %v1152 = vadd.f32 %v754, %v1020
        %v1153 = vadd.f32 %v755, %v1021
        %v1154 = vadd.f32 %v756, %v1022
        %v1155 = vadd.f32 %v757, %v1023
        %v1156 = vadd.f32 %v758, %v1024
        %v1157 = vadd.f32 %v759, %v1025
        %v1158 = vadd.f32 %v760, %v1026
        %v1159 = vadd.f32 %v761, %v1027
        %v1160 = vadd.f32 %v762, %v1028
        %v1161 = vadd.f32 %v763, %v1029
        %v1162 = vadd.f32 %v764, %v1030
        %v1163 = vadd.f32 %v765, %v1031
        %v1164 = vadd.f32 %v766, %v1032
        %v1165 = vadd.f32 %v767, %v1033
        %v1166 = vadd.f32 %v768, %v1034
        %v1167 = vadd.f32 %v769, %v1035
        %v1168 = vadd.f32 %v770, %v1036
        %v1169 = vadd.f32 %v771, %v1037
        %v1170 = vadd.f32 %v772, %v1038
        %v1171 = vadd.f32 %v773, %v1039
        %v1172 = vadd.f32 %v774, %v1040
        %v1173 = vadd.f32 %v775, %v1041
        %v1174 = vadd.f32 %v776, %v1042
        %v1175 = vadd.f32 %v777, %v1043
        %v1176 = vadd.f32 %v778, %v1044
        %v1177 = vadd.f32 %v779, %v1045
        %v1178 = vadd.f32 %v780, %v1046
        %v1179 = vadd.f32 %v781, %v1047
        %v1180 = vadd.f32 %v782, %v1048
        %v1181 = vadd.f32 %v783, %v1049
        %v1182 = vadd.f32 %v784, %v1050
        %v1183 = vadd.f32 %v785, %v1051
        %v1184 = vadd.f32 %v786, %v1052
        %v1185 = vadd.f32 %v787, %v1053
        %v1186 = vadd.f32 %v788, %v1054
        %v1187 = vadd.f32 %v789, %v1055
        %v1188 = vadd.f32 %v790, %v1056
        %v1189 = vadd.f32 %v791, %v1057
        %v1190 = vadd.f32 %v792, %v1058
        %v1191 = vadd.f32 %v793, %v1059
        %v1192 = vadd.f32 %v794, %v1060
        %v1193 = vadd.f32 %v795, %v1061
        %v1194 = vadd.f32 %v796, %v1062
        %v1195 = vadd.f32 %v797, %v1063
        %v1196 = vadd.f32 %v798, %v1064
        %v1197 = vadd.f32 %v799, %v1065
        %v1198 = vadd.f32 %v800, %v1066
        %v1199 = vadd.f32 %v801, %v1067
        %v1200 = vadd.f32 %v802, %v1068
        %v1201 = vadd.f32 %v803, %v1069
        %v1202 = vadd.f32 %v804, %v1070
        %v1203 = vadd.f32 %v805, %v1071
        %v1204 = vadd.f32 %v806, %v1072
        %v1205 = vadd.f32 %v807, %v1073
        %v1206 = vadd.f32 %v808, %v1074
        %v1207 = vadd.f32 %v809, %v1075
        %v1208 = vadd.f32 %v810, %v1076
        %v1209 = vadd.f32 %v811, %v1077
        %v1210 = vadd.f32 %v812, %v1078
        %v1211 = vadd.f32 %v813, %v1079
        %v1212 = vadd.f32 %v814, %v1080
        %v1213 = vadd.f32 %v815, %v1081
        %v1214 = vadd.f32 %v816, %v1082
        %v1215 = vadd.f32 %v817, %v1083
        %v1216 = vadd.f32 %v818, %v1084
        %v1217 = vadd.f32 %v819, %v1085
        %v1218 = vadd.f32 %v820, %v1086
        %v1219 = vadd.f32 %v821, %v1087
        %v1220 = vadd.f32 %v822, %v1088
        %v1221 = vadd.f32 %v823, %v1089
        %v1222 = vadd.f32 %v824, %v1090
        %v1223 = vadd.f32 %v825, %v1091
        %v1224 = vadd.f32 %v826, %v1092
        %v1225 = vadd.f32 %v827, %v1093
        %v1226 = vadd.f32 %v828, %v1094
        %v1227 = vadd.f32 %v829, %v1095
        %v1228 = vadd.f32 %v830, %v1096
        %v1229 = vadd.f32 %v831, %v1097
        %v1230 = vadd.f32 %v832, %v1098
        %v1231 = vadd.f32 %v833, %v1099
        %v1232 = vadd.f32 %v834, %v1100
        %v1233 = vadd.f32 %v835, %v1101
        %v1234 = vadd.f32 %v836, %v1102
        %v1235 = vadd.f32 %v837, %v1103
        %v1236 = vadd.f32 %v838, %v1104
        %v1237 = vadd.f32 %v839, %v1105
        %v1238 = vadd.f32 %v840, %v1106
        %v1239 = vadd.f32 %v841, %v1107
        %v1240 = vadd.f32 %v842, %v1108
        %v1241 = vadd.f32 %v843, %v1109
        %v1242 = vadd.f32 %v844, %v1110
        %v1243 = vadd.f32 %v845, %v1111
        %v1244 = vadd.f32 %v846, %v1112
        %v1245 = vadd.f32 %v847, %v1113
        %v1246 = vadd.f32 %v848, %v1114
        %v1247 = vadd.f32 %v849, %v1115
        %v1248 = vadd.f32 %v850, %v1116
        %v1249 = vadd.f32 %v851, %v1117
        %v1250 = vadd.f32 %v852, %v1118
        %v1251 = vadd.f32 %v853, %v1119
        %v1252 = vadd.f32 %v854, %v1120
        %v1253 = vadd.f32 %v855, %v1121
        %v1254 = vadd.f32 %v856, %v1122
        %v1255 = vadd.f32 %v857, %v1123
        %s1256 = sld [smem:[#allocation6 + $0x3]]
        %v1257 = vld [vmem:[%s156 + $0x30] sm:$0xff]
        %v1258 = vld [vmem:[%s156 + $0x38] sm:$0xff]
        %v1259 = vld [vmem:[%s156 + $0xf0] sm:$0xff]
        %v1260 = vld [vmem:[%s156 + $0xf8] sm:$0xff]
        %v1261 = vld [vmem:[%s156 + $0x1b0] sm:$0xff]
        %v1262 = vld [vmem:[%s156 + $0x1b8] sm:$0xff]
        %v1263 = vld [vmem:[%s156 + $0x270] sm:$0xff]
        %v1264 = vld [vmem:[%s156 + $0x278] sm:$0xff]
        %v1265 = vld [vmem:[%s156 + $0x330] sm:$0xff]
        %v1266 = vld [vmem:[%s156 + $0x338] sm:$0xff]
        %v1267 = vld [vmem:[%s156 + $0x3f0] sm:$0xff]
        %v1268 = vld [vmem:[%s156 + $0x3f8] sm:$0xff]
        %v1269 = vld [vmem:[%s156 + $0x4b0] sm:$0xff]
        %v1270 = vld [vmem:[%s156 + $0x4b8] sm:$0xff]
        %v1271 = vld [vmem:[%s156 + $0x570] sm:$0xff]
        %v1272 = vld [vmem:[%s156 + $0x578] sm:$0xff]
        %v1273 = vld [vmem:[%s156 + $0x630] sm:$0xff]
        %v1274 = vld [vmem:[%s156 + $0x638] sm:$0xff]
        %v1275 = vld [vmem:[%s156 + $0x6f0] sm:$0xff]
        %v1276 = vld [vmem:[%s156 + $0x6f8] sm:$0xff]
        %v1277 = vld [vmem:[%s156 + $0x7b0] sm:$0xff]
        %v1278 = vld [vmem:[%s156 + $0x7b8] sm:$0xff]
        %v1279 = vld [vmem:[%s156 + $0x870] sm:$0xff]
        %v1280 = vld [vmem:[%s156 + $0x878] sm:$0xff]
        %v1281 = vld [vmem:[%s156 + $0x930] sm:$0xff]
        %v1282 = vld [vmem:[%s156 + $0x938] sm:$0xff]
        %v1283 = vld [vmem:[%s156 + $0x9f0] sm:$0xff]
        %v1284 = vld [vmem:[%s156 + $0x9f8] sm:$0xff]
        %v1285 = vld [vmem:[%s156 + $0xab0] sm:$0xff]
        %v1286 = vld [vmem:[%s156 + $0xab8] sm:$0xff]
        %v1287 = vld [vmem:[%s156 + $0xb70] sm:$0xff]
        %v1288 = vld [vmem:[%s156 + $0xb78] sm:$0xff]
        %v1289 = vld [vmem:[%s156 + $0xc30] sm:$0xff]
        %v1290 = vld [vmem:[%s156 + $0xc38] sm:$0xff]
        %v1291 = vld [vmem:[%s156 + $0xcf0] sm:$0xff]
        %v1292 = vld [vmem:[%s156 + $0xcf8] sm:$0xff]
        %v1293 = vld [vmem:[%s156 + $0xdb0] sm:$0xff]
        %v1294 = vld [vmem:[%s156 + $0xdb8] sm:$0xff]
        %v1295 = vld [vmem:[%s156 + $0xe70] sm:$0xff]
        %v1296 = vld [vmem:[%s156 + $0xe78] sm:$0xff]
        %v1297 = vld [vmem:[%s156 + $0xf30] sm:$0xff]
        %v1298 = vld [vmem:[%s156 + $0xf38] sm:$0xff]
        %v1299 = vld [vmem:[%s156 + $0xff0] sm:$0xff]
        %v1300 = vld [vmem:[%s156 + $0xff8] sm:$0xff]
        %v1301 = vld [vmem:[%s156 + $0x10b0] sm:$0xff]
        %v1302 = vld [vmem:[%s156 + $0x10b8] sm:$0xff]
        %v1303 = vld [vmem:[%s156 + $0x1170] sm:$0xff]
        %v1304 = vld [vmem:[%s156 + $0x1178] sm:$0xff]
        %v1305 = vld [vmem:[%s156 + $0x1230] sm:$0xff]
        %v1306 = vld [vmem:[%s156 + $0x1238] sm:$0xff]
        %v1307 = vld [vmem:[%s156 + $0x12f0] sm:$0xff]
        %v1308 = vld [vmem:[%s156 + $0x12f8] sm:$0xff]
        %v1309 = vld [vmem:[%s156 + $0x13b0] sm:$0xff]
        %v1310 = vld [vmem:[%s156 + $0x13b8] sm:$0xff]
        %v1311 = vld [vmem:[%s156 + $0x1470] sm:$0xff]
        %v1312 = vld [vmem:[%s156 + $0x1478] sm:$0xff]
        %v1313 = vld [vmem:[%s156 + $0x1530] sm:$0xff]
        %v1314 = vld [vmem:[%s156 + $0x1538] sm:$0xff]
        %v1315 = vld [vmem:[%s156 + $0x15f0] sm:$0xff]
        %v1316 = vld [vmem:[%s156 + $0x15f8] sm:$0xff]
        %v1317 = vld [vmem:[%s156 + $0x16b0] sm:$0xff]
        %v1318 = vld [vmem:[%s156 + $0x16b8] sm:$0xff]
        %v1319 = vld [vmem:[%s156 + $0x1770] sm:$0xff]
        %v1320 = vld [vmem:[%s156 + $0x1778] sm:$0xff]
        %v1321 = vld [vmem:[%s156 + $0x1830] sm:$0xff]
        %v1322 = vld [vmem:[%s156 + $0x1838] sm:$0xff]
        %v1323 = vld [vmem:[%s156 + $0x18f0] sm:$0xff]
        %v1324 = vld [vmem:[%s156 + $0x18f8] sm:$0xff]
        %v1325 = vld [vmem:[%s156 + $0x19b0] sm:$0xff]
        %v1326 = vld [vmem:[%s156 + $0x19b8] sm:$0xff]
        %v1327 = vld [vmem:[%s156 + $0x1a70] sm:$0xff]
        %v1328 = vld [vmem:[%s156 + $0x1a78] sm:$0xff]
        %v1329 = vld [vmem:[%s156 + $0x1b30] sm:$0xff]
        %v1330 = vld [vmem:[%s156 + $0x1b38] sm:$0xff]
        %v1331 = vld [vmem:[%s156 + $0x1bf0] sm:$0xff]
        %v1332 = vld [vmem:[%s156 + $0x1bf8] sm:$0xff]
        %v1333 = vld [vmem:[%s156 + $0x1cb0] sm:$0xff]
        %v1334 = vld [vmem:[%s156 + $0x1cb8] sm:$0xff]
        %v1335 = vld [vmem:[%s156 + $0x1d70] sm:$0xff]
        %v1336 = vld [vmem:[%s156 + $0x1d78] sm:$0xff]
        %v1337 = vld [vmem:[%s156 + $0x1e30] sm:$0xff]
        %v1338 = vld [vmem:[%s156 + $0x1e38] sm:$0xff]
        %v1339 = vld [vmem:[%s156 + $0x1ef0] sm:$0xff]
        %v1340 = vld [vmem:[%s156 + $0x1ef8] sm:$0xff]
        %v1341 = vld [vmem:[%s156 + $0x1fb0] sm:$0xff]
        %v1342 = vld [vmem:[%s156 + $0x1fb8] sm:$0xff]
        %v1343 = vld [vmem:[%s156 + $0x2070] sm:$0xff]
        %v1344 = vld [vmem:[%s156 + $0x2078] sm:$0xff]
        %v1345 = vld [vmem:[%s156 + $0x2130] sm:$0xff]
        %v1346 = vld [vmem:[%s156 + $0x2138] sm:$0xff]
        %v1347 = vld [vmem:[%s156 + $0x21f0] sm:$0xff]
        %v1348 = vld [vmem:[%s156 + $0x21f8] sm:$0xff]
        %v1349 = vld [vmem:[%s156 + $0x22b0] sm:$0xff]
        %v1350 = vld [vmem:[%s156 + $0x22b8] sm:$0xff]
        %v1351 = vld [vmem:[%s156 + $0x2370] sm:$0xff]
        %v1352 = vld [vmem:[%s156 + $0x2378] sm:$0xff]
        %v1353 = vld [vmem:[%s156 + $0x2430] sm:$0xff]
        %v1354 = vld [vmem:[%s156 + $0x2438] sm:$0xff]
        %v1355 = vld [vmem:[%s156 + $0x24f0] sm:$0xff]
        %v1356 = vld [vmem:[%s156 + $0x24f8] sm:$0xff]
        %v1357 = vld [vmem:[%s156 + $0x25b0] sm:$0xff]
        %v1358 = vld [vmem:[%s156 + $0x25b8] sm:$0xff]
        %v1359 = vld [vmem:[%s156 + $0x2670] sm:$0xff]
        %v1360 = vld [vmem:[%s156 + $0x2678] sm:$0xff]
        %v1361 = vld [vmem:[%s156 + $0x2730] sm:$0xff]
        %v1362 = vld [vmem:[%s156 + $0x2738] sm:$0xff]
        %v1363 = vld [vmem:[%s156 + $0x27f0] sm:$0xff]
        %v1364 = vld [vmem:[%s156 + $0x27f8] sm:$0xff]
        %v1365 = vld [vmem:[%s156 + $0x28b0] sm:$0xff]
        %v1366 = vld [vmem:[%s156 + $0x28b8] sm:$0xff]
        %v1367 = vld [vmem:[%s156 + $0x2970] sm:$0xff]
        %v1368 = vld [vmem:[%s156 + $0x2978] sm:$0xff]
        %v1369 = vld [vmem:[%s156 + $0x2a30] sm:$0xff]
        %v1370 = vld [vmem:[%s156 + $0x2a38] sm:$0xff]
        %v1371 = vld [vmem:[%s156 + $0x2af0] sm:$0xff]
        %v1372 = vld [vmem:[%s156 + $0x2af8] sm:$0xff]
        %v1373 = vld [vmem:[%s156 + $0x2bb0] sm:$0xff]
        %v1374 = vld [vmem:[%s156 + $0x2bb8] sm:$0xff]
        %v1375 = vld [vmem:[%s156 + $0x2c70] sm:$0xff]
        %v1376 = vld [vmem:[%s156 + $0x2c78] sm:$0xff]
        %v1377 = vld [vmem:[%s156 + $0x2d30] sm:$0xff]
        %v1378 = vld [vmem:[%s156 + $0x2d38] sm:$0xff]
        %v1379 = vld [vmem:[%s156 + $0x2df0] sm:$0xff]
        %v1380 = vld [vmem:[%s156 + $0x2df8] sm:$0xff]
        %v1381 = vld [vmem:[%s156 + $0x2eb0] sm:$0xff]
        %v1382 = vld [vmem:[%s156 + $0x2eb8] sm:$0xff]
        %v1383 = vld [vmem:[%s156 + $0x2f70] sm:$0xff]
        %v1384 = vld [vmem:[%s156 + $0x2f78] sm:$0xff]
        %v1385 = vld [vmem:[%s156 + $0x3030] sm:$0xff]
        %v1386 = vld [vmem:[%s156 + $0x3038] sm:$0xff]
        %v1387 = vld [vmem:[%s156 + $0x30f0] sm:$0xff]
        %v1388 = vld [vmem:[%s156 + $0x30f8] sm:$0xff]
        %v1389 = vstv %s1256
        %v1390 = vmul.f32 %v1389, %v1257
        %v1391 = vmul.f32 %v1389, %v1258
        %v1392 = vmul.f32 %v1389, %v1259
        %v1393 = vmul.f32 %v1389, %v1260
        %v1394 = vmul.f32 %v1389, %v1261
        %v1395 = vmul.f32 %v1389, %v1262
        %v1396 = vmul.f32 %v1389, %v1263
        %v1397 = vmul.f32 %v1389, %v1264
        %v1398 = vmul.f32 %v1389, %v1265
        %v1399 = vmul.f32 %v1389, %v1266
        %v1400 = vmul.f32 %v1389, %v1267
        %v1401 = vmul.f32 %v1389, %v1268
        %v1402 = vmul.f32 %v1389, %v1269
        %v1403 = vmul.f32 %v1389, %v1270
        %v1404 = vmul.f32 %v1389, %v1271
        %v1405 = vmul.f32 %v1389, %v1272
        %v1406 = vmul.f32 %v1389, %v1273
        %v1407 = vmul.f32 %v1389, %v1274
        %v1408 = vmul.f32 %v1389, %v1275
        %v1409 = vmul.f32 %v1389, %v1276
        %v1410 = vmul.f32 %v1389, %v1277
        %v1411 = vmul.f32 %v1389, %v1278
        %v1412 = vmul.f32 %v1389, %v1279
        %v1413 = vmul.f32 %v1389, %v1280
        %v1414 = vmul.f32 %v1389, %v1281
        %v1415 = vmul.f32 %v1389, %v1282
        %v1416 = vmul.f32 %v1389, %v1283
        %v1417 = vmul.f32 %v1389, %v1284
        %v1418 = vmul.f32 %v1389, %v1285
        %v1419 = vmul.f32 %v1389, %v1286
        %v1420 = vmul.f32 %v1389, %v1287
        %v1421 = vmul.f32 %v1389, %v1288
        %v1422 = vmul.f32 %v1389, %v1289
        %v1423 = vmul.f32 %v1389, %v1290
        %v1424 = vmul.f32 %v1389, %v1291
        %v1425 = vmul.f32 %v1389, %v1292
        %v1426 = vmul.f32 %v1389, %v1293
        %v1427 = vmul.f32 %v1389, %v1294
        %v1428 = vmul.f32 %v1389, %v1295
        %v1429 = vmul.f32 %v1389, %v1296
        %v1430 = vmul.f32 %v1389, %v1297
        %v1431 = vmul.f32 %v1389, %v1298
        %v1432 = vmul.f32 %v1389, %v1299
        %v1433 = vmul.f32 %v1389, %v1300
        %v1434 = vmul.f32 %v1389, %v1301
        %v1435 = vmul.f32 %v1389, %v1302
        %v1436 = vmul.f32 %v1389, %v1303
        %v1437 = vmul.f32 %v1389, %v1304
        %v1438 = vmul.f32 %v1389, %v1305
        %v1439 = vmul.f32 %v1389, %v1306
        %v1440 = vmul.f32 %v1389, %v1307
        %v1441 = vmul.f32 %v1389, %v1308
        %v1442 = vmul.f32 %v1389, %v1309
        %v1443 = vmul.f32 %v1389, %v1310
        %v1444 = vmul.f32 %v1389, %v1311
        %v1445 = vmul.f32 %v1389, %v1312
        %v1446 = vmul.f32 %v1389, %v1313
        %v1447 = vmul.f32 %v1389, %v1314
        %v1448 = vmul.f32 %v1389, %v1315
        %v1449 = vmul.f32 %v1389, %v1316
        %v1450 = vmul.f32 %v1389, %v1317
        %v1451 = vmul.f32 %v1389, %v1318
        %v1452 = vmul.f32 %v1389, %v1319
        %v1453 = vmul.f32 %v1389, %v1320
        %v1454 = vmul.f32 %v1389, %v1321
        %v1455 = vmul.f32 %v1389, %v1322
        %v1456 = vmul.f32 %v1389, %v1323
        %v1457 = vmul.f32 %v1389, %v1324
        %v1458 = vmul.f32 %v1389, %v1325
        %v1459 = vmul.f32 %v1389, %v1326
        %v1460 = vmul.f32 %v1389, %v1327
        %v1461 = vmul.f32 %v1389, %v1328
        %v1462 = vmul.f32 %v1389, %v1329
        %v1463 = vmul.f32 %v1389, %v1330
        %v1464 = vmul.f32 %v1389, %v1331
        %v1465 = vmul.f32 %v1389, %v1332
        %v1466 = vmul.f32 %v1389, %v1333
        %v1467 = vmul.f32 %v1389, %v1334
        %v1468 = vmul.f32 %v1389, %v1335
        %v1469 = vmul.f32 %v1389, %v1336
        %v1470 = vmul.f32 %v1389, %v1337
        %v1471 = vmul.f32 %v1389, %v1338
        %v1472 = vmul.f32 %v1389, %v1339
        %v1473 = vmul.f32 %v1389, %v1340
        %v1474 = vmul.f32 %v1389, %v1341
        %v1475 = vmul.f32 %v1389, %v1342
        %v1476 = vmul.f32 %v1389, %v1343
        %v1477 = vmul.f32 %v1389, %v1344
        %v1478 = vmul.f32 %v1389, %v1345
        %v1479 = vmul.f32 %v1389, %v1346
        %v1480 = vmul.f32 %v1389, %v1347
        %v1481 = vmul.f32 %v1389, %v1348
        %v1482 = vmul.f32 %v1389, %v1349
        %v1483 = vmul.f32 %v1389, %v1350
        %v1484 = vmul.f32 %v1389, %v1351
        %v1485 = vmul.f32 %v1389, %v1352
        %v1486 = vmul.f32 %v1389, %v1353
        %v1487 = vmul.f32 %v1389, %v1354
        %v1488 = vmul.f32 %v1389, %v1355
        %v1489 = vmul.f32 %v1389, %v1356
        %v1490 = vmul.f32 %v1389, %v1357
        %v1491 = vmul.f32 %v1389, %v1358
        %v1492 = vmul.f32 %v1389, %v1359
        %v1493 = vmul.f32 %v1389, %v1360
        %v1494 = vmul.f32 %v1389, %v1361
        %v1495 = vmul.f32 %v1389, %v1362
        %v1496 = vmul.f32 %v1389, %v1363
        %v1497 = vmul.f32 %v1389, %v1364
        %v1498 = vmul.f32 %v1389, %v1365
        %v1499 = vmul.f32 %v1389, %v1366
        %v1500 = vmul.f32 %v1389, %v1367
        %v1501 = vmul.f32 %v1389, %v1368
        %v1502 = vmul.f32 %v1389, %v1369
        %v1503 = vmul.f32 %v1389, %v1370
        %v1504 = vmul.f32 %v1389, %v1371
        %v1505 = vmul.f32 %v1389, %v1372
        %v1506 = vmul.f32 %v1389, %v1373
        %v1507 = vmul.f32 %v1389, %v1374
        %v1508 = vmul.f32 %v1389, %v1375
        %v1509 = vmul.f32 %v1389, %v1376
        %v1510 = vmul.f32 %v1389, %v1377
        %v1511 = vmul.f32 %v1389, %v1378
        %v1512 = vmul.f32 %v1389, %v1379
        %v1513 = vmul.f32 %v1389, %v1380
        %v1514 = vmul.f32 %v1389, %v1381
        %v1515 = vmul.f32 %v1389, %v1382
        %v1516 = vmul.f32 %v1389, %v1383
        %v1517 = vmul.f32 %v1389, %v1384
        %v1518 = vmul.f32 %v1389, %v1385
        %v1519 = vmul.f32 %v1389, %v1386
        %v1520 = vmul.f32 %v1389, %v1387
        %v1521 = vmul.f32 %v1389, %v1388
        %v1522 = vadd.f32 %v1124, %v1390
        %v1523 = vadd.f32 %v1125, %v1391
        %v1524 = vadd.f32 %v1126, %v1392
        %v1525 = vadd.f32 %v1127, %v1393
        %v1526 = vadd.f32 %v1128, %v1394
        %v1527 = vadd.f32 %v1129, %v1395
        %v1528 = vadd.f32 %v1130, %v1396
        %v1529 = vadd.f32 %v1131, %v1397
        %v1530 = vadd.f32 %v1132, %v1398
        %v1531 = vadd.f32 %v1133, %v1399
        %v1532 = vadd.f32 %v1134, %v1400
        %v1533 = vadd.f32 %v1135, %v1401
        %v1534 = vadd.f32 %v1136, %v1402
        %v1535 = vadd.f32 %v1137, %v1403
        %v1536 = vadd.f32 %v1138, %v1404
        %v1537 = vadd.f32 %v1139, %v1405
        %v1538 = vadd.f32 %v1140, %v1406
        %v1539 = vadd.f32 %v1141, %v1407
        %v1540 = vadd.f32 %v1142, %v1408
        %v1541 = vadd.f32 %v1143, %v1409
        %v1542 = vadd.f32 %v1144, %v1410
        %v1543 = vadd.f32 %v1145, %v1411
        %v1544 = vadd.f32 %v1146, %v1412
        %v1545 = vadd.f32 %v1147, %v1413
        %v1546 = vadd.f32 %v1148, %v1414
        %v1547 = vadd.f32 %v1149, %v1415
        %v1548 = vadd.f32 %v1150, %v1416
        %v1549 = vadd.f32 %v1151, %v1417
        %v1550 = vadd.f32 %v1152, %v1418
        %v1551 = vadd.f32 %v1153, %v1419
        %v1552 = vadd.f32 %v1154, %v1420
        %v1553 = vadd.f32 %v1155, %v1421
        %v1554 = vadd.f32 %v1156, %v1422
        %v1555 = vadd.f32 %v1157, %v1423
        %v1556 = vadd.f32 %v1158, %v1424
        %v1557 = vadd.f32 %v1159, %v1425
        %v1558 = vadd.f32 %v1160, %v1426
        %v1559 = vadd.f32 %v1161, %v1427
        %v1560 = vadd.f32 %v1162, %v1428
        %v1561 = vadd.f32 %v1163, %v1429
        %v1562 = vadd.f32 %v1164, %v1430
        %v1563 = vadd.f32 %v1165, %v1431
        %v1564 = vadd.f32 %v1166, %v1432
        %v1565 = vadd.f32 %v1167, %v1433
        %v1566 = vadd.f32 %v1168, %v1434
        %v1567 = vadd.f32 %v1169, %v1435
        %v1568 = vadd.f32 %v1170, %v1436
        %v1569 = vadd.f32 %v1171, %v1437
        %v1570 = vadd.f32 %v1172, %v1438
        %v1571 = vadd.f32 %v1173, %v1439
        %v1572 = vadd.f32 %v1174, %v1440
        %v1573 = vadd.f32 %v1175, %v1441
        %v1574 = vadd.f32 %v1176, %v1442
        %v1575 = vadd.f32 %v1177, %v1443
        %v1576 = vadd.f32 %v1178, %v1444
        %v1577 = vadd.f32 %v1179, %v1445
        %v1578 = vadd.f32 %v1180, %v1446
        %v1579 = vadd.f32 %v1181, %v1447
        %v1580 = vadd.f32 %v1182, %v1448
        %v1581 = vadd.f32 %v1183, %v1449
        %v1582 = vadd.f32 %v1184, %v1450
        %v1583 = vadd.f32 %v1185, %v1451
        %v1584 = vadd.f32 %v1186, %v1452
        %v1585 = vadd.f32 %v1187, %v1453
        %v1586 = vadd.f32 %v1188, %v1454
        %v1587 = vadd.f32 %v1189, %v1455
        %v1588 = vadd.f32 %v1190, %v1456
        %v1589 = vadd.f32 %v1191, %v1457
        %v1590 = vadd.f32 %v1192, %v1458
        %v1591 = vadd.f32 %v1193, %v1459
        %v1592 = vadd.f32 %v1194, %v1460
        %v1593 = vadd.f32 %v1195, %v1461
        %v1594 = vadd.f32 %v1196, %v1462
        %v1595 = vadd.f32 %v1197, %v1463
        %v1596 = vadd.f32 %v1198, %v1464
        %v1597 = vadd.f32 %v1199, %v1465
        %v1598 = vadd.f32 %v1200, %v1466
        %v1599 = vadd.f32 %v1201, %v1467
        %v1600 = vadd.f32 %v1202, %v1468
        %v1601 = vadd.f32 %v1203, %v1469
        %v1602 = vadd.f32 %v1204, %v1470
        %v1603 = vadd.f32 %v1205, %v1471
        %v1604 = vadd.f32 %v1206, %v1472
        %v1605 = vadd.f32 %v1207, %v1473
        %v1606 = vadd.f32 %v1208, %v1474
        %v1607 = vadd.f32 %v1209, %v1475
        %v1608 = vadd.f32 %v1210, %v1476
        %v1609 = vadd.f32 %v1211, %v1477
        %v1610 = vadd.f32 %v1212, %v1478
        %v1611 = vadd.f32 %v1213, %v1479
        %v1612 = vadd.f32 %v1214, %v1480
        %v1613 = vadd.f32 %v1215, %v1481
        %v1614 = vadd.f32 %v1216, %v1482
        %v1615 = vadd.f32 %v1217, %v1483
        %v1616 = vadd.f32 %v1218, %v1484
        %v1617 = vadd.f32 %v1219, %v1485
        %v1618 = vadd.f32 %v1220, %v1486
        %v1619 = vadd.f32 %v1221, %v1487
        %v1620 = vadd.f32 %v1222, %v1488
        %v1621 = vadd.f32 %v1223, %v1489
        %v1622 = vadd.f32 %v1224, %v1490
        %v1623 = vadd.f32 %v1225, %v1491
        %v1624 = vadd.f32 %v1226, %v1492
        %v1625 = vadd.f32 %v1227, %v1493
        %v1626 = vadd.f32 %v1228, %v1494
        %v1627 = vadd.f32 %v1229, %v1495
        %v1628 = vadd.f32 %v1230, %v1496
        %v1629 = vadd.f32 %v1231, %v1497
        %v1630 = vadd.f32 %v1232, %v1498
        %v1631 = vadd.f32 %v1233, %v1499
        %v1632 = vadd.f32 %v1234, %v1500
        %v1633 = vadd.f32 %v1235, %v1501
        %v1634 = vadd.f32 %v1236, %v1502
        %v1635 = vadd.f32 %v1237, %v1503
        %v1636 = vadd.f32 %v1238, %v1504
        %v1637 = vadd.f32 %v1239, %v1505
        %v1638 = vadd.f32 %v1240, %v1506
        %v1639 = vadd.f32 %v1241, %v1507
        %v1640 = vadd.f32 %v1242, %v1508
        %v1641 = vadd.f32 %v1243, %v1509
        %v1642 = vadd.f32 %v1244, %v1510
        %v1643 = vadd.f32 %v1245, %v1511
        %v1644 = vadd.f32 %v1246, %v1512
        %v1645 = vadd.f32 %v1247, %v1513
        %v1646 = vadd.f32 %v1248, %v1514
        %v1647 = vadd.f32 %v1249, %v1515
        %v1648 = vadd.f32 %v1250, %v1516
        %v1649 = vadd.f32 %v1251, %v1517
        %v1650 = vadd.f32 %v1252, %v1518
        %v1651 = vadd.f32 %v1253, %v1519
        %v1652 = vadd.f32 %v1254, %v1520
        %v1653 = vadd.f32 %v1255, %v1521
        %s1654 = sld [smem:[#allocation6 + $0x4]]
        %v1655 = vld [vmem:[%s156 + $0x40] sm:$0xff]
        %v1656 = vld [vmem:[%s156 + $0x48] sm:$0xff]
        %v1657 = vld [vmem:[%s156 + $0x100] sm:$0xff]
        %v1658 = vld [vmem:[%s156 + $0x108] sm:$0xff]
        %v1659 = vld [vmem:[%s156 + $0x1c0] sm:$0xff]
        %v1660 = vld [vmem:[%s156 + $0x1c8] sm:$0xff]
        %v1661 = vld [vmem:[%s156 + $0x280] sm:$0xff]
        %v1662 = vld [vmem:[%s156 + $0x288] sm:$0xff]
        %v1663 = vld [vmem:[%s156 + $0x340] sm:$0xff]
        %v1664 = vld [vmem:[%s156 + $0x348] sm:$0xff]
        %v1665 = vld [vmem:[%s156 + $0x400] sm:$0xff]
        %v1666 = vld [vmem:[%s156 + $0x408] sm:$0xff]
        %v1667 = vld [vmem:[%s156 + $0x4c0] sm:$0xff]
        %v1668 = vld [vmem:[%s156 + $0x4c8] sm:$0xff]
        %v1669 = vld [vmem:[%s156 + $0x580] sm:$0xff]
        %v1670 = vld [vmem:[%s156 + $0x588] sm:$0xff]
        %v1671 = vld [vmem:[%s156 + $0x640] sm:$0xff]
        %v1672 = vld [vmem:[%s156 + $0x648] sm:$0xff]
        %v1673 = vld [vmem:[%s156 + $0x700] sm:$0xff]
        %v1674 = vld [vmem:[%s156 + $0x708] sm:$0xff]
        %v1675 = vld [vmem:[%s156 + $0x7c0] sm:$0xff]
        %v1676 = vld [vmem:[%s156 + $0x7c8] sm:$0xff]
        %v1677 = vld [vmem:[%s156 + $0x880] sm:$0xff]
        %v1678 = vld [vmem:[%s156 + $0x888] sm:$0xff]
        %v1679 = vld [vmem:[%s156 + $0x940] sm:$0xff]
        %v1680 = vld [vmem:[%s156 + $0x948] sm:$0xff]
        %v1681 = vld [vmem:[%s156 + $0xa00] sm:$0xff]
        %v1682 = vld [vmem:[%s156 + $0xa08] sm:$0xff]
        %v1683 = vld [vmem:[%s156 + $0xac0] sm:$0xff]
        %v1684 = vld [vmem:[%s156 + $0xac8] sm:$0xff]
        %v1685 = vld [vmem:[%s156 + $0xb80] sm:$0xff]
        %v1686 = vld [vmem:[%s156 + $0xb88] sm:$0xff]
        %v1687 = vld [vmem:[%s156 + $0xc40] sm:$0xff]
        %v1688 = vld [vmem:[%s156 + $0xc48] sm:$0xff]
        %v1689 = vld [vmem:[%s156 + $0xd00] sm:$0xff]
        %v1690 = vld [vmem:[%s156 + $0xd08] sm:$0xff]
        %v1691 = vld [vmem:[%s156 + $0xdc0] sm:$0xff]
        %v1692 = vld [vmem:[%s156 + $0xdc8] sm:$0xff]
        %v1693 = vld [vmem:[%s156 + $0xe80] sm:$0xff]
        %v1694 = vld [vmem:[%s156 + $0xe88] sm:$0xff]
        %v1695 = vld [vmem:[%s156 + $0xf40] sm:$0xff]
        %v1696 = vld [vmem:[%s156 + $0xf48] sm:$0xff]
        %v1697 = vld [vmem:[%s156 + $0x1000] sm:$0xff]
        %v1698 = vld [vmem:[%s156 + $0x1008] sm:$0xff]
        %v1699 = vld [vmem:[%s156 + $0x10c0] sm:$0xff]
        %v1700 = vld [vmem:[%s156 + $0x10c8] sm:$0xff]
        %v1701 = vld [vmem:[%s156 + $0x1180] sm:$0xff]
        %v1702 = vld [vmem:[%s156 + $0x1188] sm:$0xff]
        %v1703 = vld [vmem:[%s156 + $0x1240] sm:$0xff]
        %v1704 = vld [vmem:[%s156 + $0x1248] sm:$0xff]
        %v1705 = vld [vmem:[%s156 + $0x1300] sm:$0xff]
        %v1706 = vld [vmem:[%s156 + $0x1308] sm:$0xff]
        %v1707 = vld [vmem:[%s156 + $0x13c0] sm:$0xff]
        %v1708 = vld [vmem:[%s156 + $0x13c8] sm:$0xff]
        %v1709 = vld [vmem:[%s156 + $0x1480] sm:$0xff]
        %v1710 = vld [vmem:[%s156 + $0x1488] sm:$0xff]
        %v1711 = vld [vmem:[%s156 + $0x1540] sm:$0xff]
        %v1712 = vld [vmem:[%s156 + $0x1548] sm:$0xff]
        %v1713 = vld [vmem:[%s156 + $0x1600] sm:$0xff]
        %v1714 = vld [vmem:[%s156 + $0x1608] sm:$0xff]
        %v1715 = vld [vmem:[%s156 + $0x16c0] sm:$0xff]
        %v1716 = vld [vmem:[%s156 + $0x16c8] sm:$0xff]
        %v1717 = vld [vmem:[%s156 + $0x1780] sm:$0xff]
        %v1718 = vld [vmem:[%s156 + $0x1788] sm:$0xff]
        %v1719 = vld [vmem:[%s156 + $0x1840] sm:$0xff]
        %v1720 = vld [vmem:[%s156 + $0x1848] sm:$0xff]
        %v1721 = vld [vmem:[%s156 + $0x1900] sm:$0xff]
        %v1722 = vld [vmem:[%s156 + $0x1908] sm:$0xff]
        %v1723 = vld [vmem:[%s156 + $0x19c0] sm:$0xff]
        %v1724 = vld [vmem:[%s156 + $0x19c8] sm:$0xff]
        %v1725 = vld [vmem:[%s156 + $0x1a80] sm:$0xff]
        %v1726 = vld [vmem:[%s156 + $0x1a88] sm:$0xff]
        %v1727 = vld [vmem:[%s156 + $0x1b40] sm:$0xff]
        %v1728 = vld [vmem:[%s156 + $0x1b48] sm:$0xff]
        %v1729 = vld [vmem:[%s156 + $0x1c00] sm:$0xff]
        %v1730 = vld [vmem:[%s156 + $0x1c08] sm:$0xff]
        %v1731 = vld [vmem:[%s156 + $0x1cc0] sm:$0xff]
        %v1732 = vld [vmem:[%s156 + $0x1cc8] sm:$0xff]
        %v1733 = vld [vmem:[%s156 + $0x1d80] sm:$0xff]
        %v1734 = vld [vmem:[%s156 + $0x1d88] sm:$0xff]
        %v1735 = vld [vmem:[%s156 + $0x1e40] sm:$0xff]
        %v1736 = vld [vmem:[%s156 + $0x1e48] sm:$0xff]
        %v1737 = vld [vmem:[%s156 + $0x1f00] sm:$0xff]
        %v1738 = vld [vmem:[%s156 + $0x1f08] sm:$0xff]
        %v1739 = vld [vmem:[%s156 + $0x1fc0] sm:$0xff]
        %v1740 = vld [vmem:[%s156 + $0x1fc8] sm:$0xff]
        %v1741 = vld [vmem:[%s156 + $0x2080] sm:$0xff]
        %v1742 = vld [vmem:[%s156 + $0x2088] sm:$0xff]
        %v1743 = vld [vmem:[%s156 + $0x2140] sm:$0xff]
        %v1744 = vld [vmem:[%s156 + $0x2148] sm:$0xff]
        %v1745 = vld [vmem:[%s156 + $0x2200] sm:$0xff]
        %v1746 = vld [vmem:[%s156 + $0x2208] sm:$0xff]
        %v1747 = vld [vmem:[%s156 + $0x22c0] sm:$0xff]
        %v1748 = vld [vmem:[%s156 + $0x22c8] sm:$0xff]
        %v1749 = vld [vmem:[%s156 + $0x2380] sm:$0xff]
        %v1750 = vld [vmem:[%s156 + $0x2388] sm:$0xff]
        %v1751 = vld [vmem:[%s156 + $0x2440] sm:$0xff]
        %v1752 = vld [vmem:[%s156 + $0x2448] sm:$0xff]
        %v1753 = vld [vmem:[%s156 + $0x2500] sm:$0xff]
        %v1754 = vld [vmem:[%s156 + $0x2508] sm:$0xff]
        %v1755 = vld [vmem:[%s156 + $0x25c0] sm:$0xff]
        %v1756 = vld [vmem:[%s156 + $0x25c8] sm:$0xff]
        %v1757 = vld [vmem:[%s156 + $0x2680] sm:$0xff]
        %v1758 = vld [vmem:[%s156 + $0x2688] sm:$0xff]
        %v1759 = vld [vmem:[%s156 + $0x2740] sm:$0xff]
        %v1760 = vld [vmem:[%s156 + $0x2748] sm:$0xff]
        %v1761 = vld [vmem:[%s156 + $0x2800] sm:$0xff]
        %v1762 = vld [vmem:[%s156 + $0x2808] sm:$0xff]
        %v1763 = vld [vmem:[%s156 + $0x28c0] sm:$0xff]
        %v1764 = vld [vmem:[%s156 + $0x28c8] sm:$0xff]
        %v1765 = vld [vmem:[%s156 + $0x2980] sm:$0xff]
        %v1766 = vld [vmem:[%s156 + $0x2988] sm:$0xff]
        %v1767 = vld [vmem:[%s156 + $0x2a40] sm:$0xff]
        %v1768 = vld [vmem:[%s156 + $0x2a48] sm:$0xff]
        %v1769 = vld [vmem:[%s156 + $0x2b00] sm:$0xff]
        %v1770 = vld [vmem:[%s156 + $0x2b08] sm:$0xff]
        %v1771 = vld [vmem:[%s156 + $0x2bc0] sm:$0xff]
        %v1772 = vld [vmem:[%s156 + $0x2bc8] sm:$0xff]
        %v1773 = vld [vmem:[%s156 + $0x2c80] sm:$0xff]
        %v1774 = vld [vmem:[%s156 + $0x2c88] sm:$0xff]
        %v1775 = vld [vmem:[%s156 + $0x2d40] sm:$0xff]
        %v1776 = vld [vmem:[%s156 + $0x2d48] sm:$0xff]
        %v1777 = vld [vmem:[%s156 + $0x2e00] sm:$0xff]
        %v1778 = vld [vmem:[%s156 + $0x2e08] sm:$0xff]
        %v1779 = vld [vmem:[%s156 + $0x2ec0] sm:$0xff]
        %v1780 = vld [vmem:[%s156 + $0x2ec8] sm:$0xff]
        %v1781 = vld [vmem:[%s156 + $0x2f80] sm:$0xff]
        %v1782 = vld [vmem:[%s156 + $0x2f88] sm:$0xff]
        %v1783 = vld [vmem:[%s156 + $0x3040] sm:$0xff]
        %v1784 = vld [vmem:[%s156 + $0x3048] sm:$0xff]
        %v1785 = vld [vmem:[%s156 + $0x3100] sm:$0xff]
        %v1786 = vld [vmem:[%s156 + $0x3108] sm:$0xff]
        %v1787 = vstv %s1654
        %v1788 = vmul.f32 %v1787, %v1655
        %v1789 = vmul.f32 %v1787, %v1656
        %v1790 = vmul.f32 %v1787, %v1657
        %v1791 = vmul.f32 %v1787, %v1658
        %v1792 = vmul.f32 %v1787, %v1659
        %v1793 = vmul.f32 %v1787, %v1660
        %v1794 = vmul.f32 %v1787, %v1661
        %v1795 = vmul.f32 %v1787, %v1662
        %v1796 = vmul.f32 %v1787, %v1663
        %v1797 = vmul.f32 %v1787, %v1664
        %v1798 = vmul.f32 %v1787, %v1665
        %v1799 = vmul.f32 %v1787, %v1666
        %v1800 = vmul.f32 %v1787, %v1667
        %v1801 = vmul.f32 %v1787, %v1668
        %v1802 = vmul.f32 %v1787, %v1669
        %v1803 = vmul.f32 %v1787, %v1670
        %v1804 = vmul.f32 %v1787, %v1671
        %v1805 = vmul.f32 %v1787, %v1672
        %v1806 = vmul.f32 %v1787, %v1673
        %v1807 = vmul.f32 %v1787, %v1674
        %v1808 = vmul.f32 %v1787, %v1675
        %v1809 = vmul.f32 %v1787, %v1676
        %v1810 = vmul.f32 %v1787, %v1677
        %v1811 = vmul.f32 %v1787, %v1678
        %v1812 = vmul.f32 %v1787, %v1679
        %v1813 = vmul.f32 %v1787, %v1680
        %v1814 = vmul.f32 %v1787, %v1681
        %v1815 = vmul.f32 %v1787, %v1682
        %v1816 = vmul.f32 %v1787, %v1683
        %v1817 = vmul.f32 %v1787, %v1684
        %v1818 = vmul.f32 %v1787, %v1685
        %v1819 = vmul.f32 %v1787, %v1686
        %v1820 = vmul.f32 %v1787, %v1687
        %v1821 = vmul.f32 %v1787, %v1688
        %v1822 = vmul.f32 %v1787, %v1689
        %v1823 = vmul.f32 %v1787, %v1690
        %v1824 = vmul.f32 %v1787, %v1691
        %v1825 = vmul.f32 %v1787, %v1692
        %v1826 = vmul.f32 %v1787, %v1693
        %v1827 = vmul.f32 %v1787, %v1694
        %v1828 = vmul.f32 %v1787, %v1695
        %v1829 = vmul.f32 %v1787, %v1696
        %v1830 = vmul.f32 %v1787, %v1697
        %v1831 = vmul.f32 %v1787, %v1698
        %v1832 = vmul.f32 %v1787, %v1699
        %v1833 = vmul.f32 %v1787, %v1700
        %v1834 = vmul.f32 %v1787, %v1701
        %v1835 = vmul.f32 %v1787, %v1702
        %v1836 = vmul.f32 %v1787, %v1703
        %v1837 = vmul.f32 %v1787, %v1704
        %v1838 = vmul.f32 %v1787, %v1705
        %v1839 = vmul.f32 %v1787, %v1706
        %v1840 = vmul.f32 %v1787, %v1707
        %v1841 = vmul.f32 %v1787, %v1708
        %v1842 = vmul.f32 %v1787, %v1709
        %v1843 = vmul.f32 %v1787, %v1710
        %v1844 = vmul.f32 %v1787, %v1711
        %v1845 = vmul.f32 %v1787, %v1712
        %v1846 = vmul.f32 %v1787, %v1713
        %v1847 = vmul.f32 %v1787, %v1714
        %v1848 = vmul.f32 %v1787, %v1715
        %v1849 = vmul.f32 %v1787, %v1716
        %v1850 = vmul.f32 %v1787, %v1717
        %v1851 = vmul.f32 %v1787, %v1718
        %v1852 = vmul.f32 %v1787, %v1719
        %v1853 = vmul.f32 %v1787, %v1720
        %v1854 = vmul.f32 %v1787, %v1721
        %v1855 = vmul.f32 %v1787, %v1722
        %v1856 = vmul.f32 %v1787, %v1723
        %v1857 = vmul.f32 %v1787, %v1724
        %v1858 = vmul.f32 %v1787, %v1725
        %v1859 = vmul.f32 %v1787, %v1726
        %v1860 = vmul.f32 %v1787, %v1727
        %v1861 = vmul.f32 %v1787, %v1728
        %v1862 = vmul.f32 %v1787, %v1729
        %v1863 = vmul.f32 %v1787, %v1730
        %v1864 = vmul.f32 %v1787, %v1731
        %v1865 = vmul.f32 %v1787, %v1732
        %v1866 = vmul.f32 %v1787, %v1733
        %v1867 = vmul.f32 %v1787, %v1734
        %v1868 = vmul.f32 %v1787, %v1735
        %v1869 = vmul.f32 %v1787, %v1736
        %v1870 = vmul.f32 %v1787, %v1737
        %v1871 = vmul.f32 %v1787, %v1738
        %v1872 = vmul.f32 %v1787, %v1739
        %v1873 = vmul.f32 %v1787, %v1740
        %v1874 = vmul.f32 %v1787, %v1741
        %v1875 = vmul.f32 %v1787, %v1742
        %v1876 = vmul.f32 %v1787, %v1743
        %v1877 = vmul.f32 %v1787, %v1744
        %v1878 = vmul.f32 %v1787, %v1745
        %v1879 = vmul.f32 %v1787, %v1746
        %v1880 = vmul.f32 %v1787, %v1747
        %v1881 = vmul.f32 %v1787, %v1748
        %v1882 = vmul.f32 %v1787, %v1749
        %v1883 = vmul.f32 %v1787, %v1750
        %v1884 = vmul.f32 %v1787, %v1751
        %v1885 = vmul.f32 %v1787, %v1752
        %v1886 = vmul.f32 %v1787, %v1753
        %v1887 = vmul.f32 %v1787, %v1754
        %v1888 = vmul.f32 %v1787, %v1755
        %v1889 = vmul.f32 %v1787, %v1756
        %v1890 = vmul.f32 %v1787, %v1757
        %v1891 = vmul.f32 %v1787, %v1758
        %v1892 = vmul.f32 %v1787, %v1759
        %v1893 = vmul.f32 %v1787, %v1760
        %v1894 = vmul.f32 %v1787, %v1761
        %v1895 = vmul.f32 %v1787, %v1762
        %v1896 = vmul.f32 %v1787, %v1763
        %v1897 = vmul.f32 %v1787, %v1764
        %v1898 = vmul.f32 %v1787, %v1765
        %v1899 = vmul.f32 %v1787, %v1766
        %v1900 = vmul.f32 %v1787, %v1767
        %v1901 = vmul.f32 %v1787, %v1768
        %v1902 = vmul.f32 %v1787, %v1769
        %v1903 = vmul.f32 %v1787, %v1770
        %v1904 = vmul.f32 %v1787, %v1771
        %v1905 = vmul.f32 %v1787, %v1772
        %v1906 = vmul.f32 %v1787, %v1773
        %v1907 = vmul.f32 %v1787, %v1774
        %v1908 = vmul.f32 %v1787, %v1775
        %v1909 = vmul.f32 %v1787, %v1776
        %v1910 = vmul.f32 %v1787, %v1777
        %v1911 = vmul.f32 %v1787, %v1778
        %v1912 = vmul.f32 %v1787, %v1779
        %v1913 = vmul.f32 %v1787, %v1780
        %v1914 = vmul.f32 %v1787, %v1781
        %v1915 = vmul.f32 %v1787, %v1782
        %v1916 = vmul.f32 %v1787, %v1783
        %v1917 = vmul.f32 %v1787, %v1784
        %v1918 = vmul.f32 %v1787, %v1785
        %v1919 = vmul.f32 %v1787, %v1786
        %v1920 = vadd.f32 %v1522, %v1788
        %v1921 = vadd.f32 %v1523, %v1789
        %v1922 = vadd.f32 %v1524, %v1790
        %v1923 = vadd.f32 %v1525, %v1791
        %v1924 = vadd.f32 %v1526, %v1792
        %v1925 = vadd.f32 %v1527, %v1793
        %v1926 = vadd.f32 %v1528, %v1794
        %v1927 = vadd.f32 %v1529, %v1795
        %v1928 = vadd.f32 %v1530, %v1796
        %v1929 = vadd.f32 %v1531, %v1797
        %v1930 = vadd.f32 %v1532, %v1798
        %v1931 = vadd.f32 %v1533, %v1799
        %v1932 = vadd.f32 %v1534, %v1800
        %v1933 = vadd.f32 %v1535, %v1801
        %v1934 = vadd.f32 %v1536, %v1802
        %v1935 = vadd.f32 %v1537, %v1803
        %v1936 = vadd.f32 %v1538, %v1804
        %v1937 = vadd.f32 %v1539, %v1805
        %v1938 = vadd.f32 %v1540, %v1806
        %v1939 = vadd.f32 %v1541, %v1807
        %v1940 = vadd.f32 %v1542, %v1808
        %v1941 = vadd.f32 %v1543, %v1809
        %v1942 = vadd.f32 %v1544, %v1810
        %v1943 = vadd.f32 %v1545, %v1811
        %v1944 = vadd.f32 %v1546, %v1812
        %v1945 = vadd.f32 %v1547, %v1813
        %v1946 = vadd.f32 %v1548, %v1814
        %v1947 = vadd.f32 %v1549, %v1815
        %v1948 = vadd.f32 %v1550, %v1816
        %v1949 = vadd.f32 %v1551, %v1817
        %v1950 = vadd.f32 %v1552, %v1818
        %v1951 = vadd.f32 %v1553, %v1819
        %v1952 = vadd.f32 %v1554, %v1820
        %v1953 = vadd.f32 %v1555, %v1821
        %v1954 = vadd.f32 %v1556, %v1822
        %v1955 = vadd.f32 %v1557, %v1823
        %v1956 = vadd.f32 %v1558, %v1824
        %v1957 = vadd.f32 %v1559, %v1825
        %v1958 = vadd.f32 %v1560, %v1826
        %v1959 = vadd.f32 %v1561, %v1827
        %v1960 = vadd.f32 %v1562, %v1828
        %v1961 = vadd.f32 %v1563, %v1829
        %v1962 = vadd.f32 %v1564, %v1830
        %v1963 = vadd.f32 %v1565, %v1831
        %v1964 = vadd.f32 %v1566, %v1832
        %v1965 = vadd.f32 %v1567, %v1833
        %v1966 = vadd.f32 %v1568, %v1834
        %v1967 = vadd.f32 %v1569, %v1835
        %v1968 = vadd.f32 %v1570, %v1836
        %v1969 = vadd.f32 %v1571, %v1837
        %v1970 = vadd.f32 %v1572, %v1838
        %v1971 = vadd.f32 %v1573, %v1839
        %v1972 = vadd.f32 %v1574, %v1840
        %v1973 = vadd.f32 %v1575, %v1841
        %v1974 = vadd.f32 %v1576, %v1842
        %v1975 = vadd.f32 %v1577, %v1843
        %v1976 = vadd.f32 %v1578, %v1844
        %v1977 = vadd.f32 %v1579, %v1845
        %v1978 = vadd.f32 %v1580, %v1846
        %v1979 = vadd.f32 %v1581, %v1847
        %v1980 = vadd.f32 %v1582, %v1848
        %v1981 = vadd.f32 %v1583, %v1849
        %v1982 = vadd.f32 %v1584, %v1850
        %v1983 = vadd.f32 %v1585, %v1851
        %v1984 = vadd.f32 %v1586, %v1852
        %v1985 = vadd.f32 %v1587, %v1853
        %v1986 = vadd.f32 %v1588, %v1854
        %v1987 = vadd.f32 %v1589, %v1855
        %v1988 = vadd.f32 %v1590, %v1856
        %v1989 = vadd.f32 %v1591, %v1857
        %v1990 = vadd.f32 %v1592, %v1858
        %v1991 = vadd.f32 %v1593, %v1859
        %v1992 = vadd.f32 %v1594, %v1860
        %v1993 = vadd.f32 %v1595, %v1861
        %v1994 = vadd.f32 %v1596, %v1862
        %v1995 = vadd.f32 %v1597, %v1863
        %v1996 = vadd.f32 %v1598, %v1864
        %v1997 = vadd.f32 %v1599, %v1865
        %v1998 = vadd.f32 %v1600, %v1866
        %v1999 = vadd.f32 %v1601, %v1867
        %v2000 = vadd.f32 %v1602, %v1868
        %v2001 = vadd.f32 %v1603, %v1869
        %v2002 = vadd.f32 %v1604, %v1870
        %v2003 = vadd.f32 %v1605, %v1871
        %v2004 = vadd.f32 %v1606, %v1872
        %v2005 = vadd.f32 %v1607, %v1873
        %v2006 = vadd.f32 %v1608, %v1874
        %v2007 = vadd.f32 %v1609, %v1875
        %v2008 = vadd.f32 %v1610, %v1876
        %v2009 = vadd.f32 %v1611, %v1877
        %v2010 = vadd.f32 %v1612, %v1878
        %v2011 = vadd.f32 %v1613, %v1879
        %v2012 = vadd.f32 %v1614, %v1880
        %v2013 = vadd.f32 %v1615, %v1881
        %v2014 = vadd.f32 %v1616, %v1882
        %v2015 = vadd.f32 %v1617, %v1883
        %v2016 = vadd.f32 %v1618, %v1884
        %v2017 = vadd.f32 %v1619, %v1885
        %v2018 = vadd.f32 %v1620, %v1886
        %v2019 = vadd.f32 %v1621, %v1887
        %v2020 = vadd.f32 %v1622, %v1888
        %v2021 = vadd.f32 %v1623, %v1889
        %v2022 = vadd.f32 %v1624, %v1890
        %v2023 = vadd.f32 %v1625, %v1891
        %v2024 = vadd.f32 %v1626, %v1892
        %v2025 = vadd.f32 %v1627, %v1893
        %v2026 = vadd.f32 %v1628, %v1894
        %v2027 = vadd.f32 %v1629, %v1895
        %v2028 = vadd.f32 %v1630, %v1896
        %v2029 = vadd.f32 %v1631, %v1897
        %v2030 = vadd.f32 %v1632, %v1898
        %v2031 = vadd.f32 %v1633, %v1899
        %v2032 = vadd.f32 %v1634, %v1900
        %v2033 = vadd.f32 %v1635, %v1901
        %v2034 = vadd.f32 %v1636, %v1902
        %v2035 = vadd.f32 %v1637, %v1903
        %v2036 = vadd.f32 %v1638, %v1904
        %v2037 = vadd.f32 %v1639, %v1905
        %v2038 = vadd.f32 %v1640, %v1906
        %v2039 = vadd.f32 %v1641, %v1907
        %v2040 = vadd.f32 %v1642, %v1908
        %v2041 = vadd.f32 %v1643, %v1909
        %v2042 = vadd.f32 %v1644, %v1910
        %v2043 = vadd.f32 %v1645, %v1911
        %v2044 = vadd.f32 %v1646, %v1912
        %v2045 = vadd.f32 %v1647, %v1913
        %v2046 = vadd.f32 %v1648, %v1914
        %v2047 = vadd.f32 %v1649, %v1915
        %v2048 = vadd.f32 %v1650, %v1916
        %v2049 = vadd.f32 %v1651, %v1917
        %v2050 = vadd.f32 %v1652, %v1918
        %v2051 = vadd.f32 %v1653, %v1919
        %s2052 = sld [smem:[#allocation6 + $0x5]]
        %v2053 = vld [vmem:[%s156 + $0x50] sm:$0xff]
        %v2054 = vld [vmem:[%s156 + $0x58] sm:$0xff]
        %v2055 = vld [vmem:[%s156 + $0x110] sm:$0xff]
        %v2056 = vld [vmem:[%s156 + $0x118] sm:$0xff]
        %v2057 = vld [vmem:[%s156 + $0x1d0] sm:$0xff]
        %v2058 = vld [vmem:[%s156 + $0x1d8] sm:$0xff]
        %v2059 = vld [vmem:[%s156 + $0x290] sm:$0xff]
        %v2060 = vld [vmem:[%s156 + $0x298] sm:$0xff]
        %v2061 = vld [vmem:[%s156 + $0x350] sm:$0xff]
        %v2062 = vld [vmem:[%s156 + $0x358] sm:$0xff]
        %v2063 = vld [vmem:[%s156 + $0x410] sm:$0xff]
        %v2064 = vld [vmem:[%s156 + $0x418] sm:$0xff]
        %v2065 = vld [vmem:[%s156 + $0x4d0] sm:$0xff]
        %v2066 = vld [vmem:[%s156 + $0x4d8] sm:$0xff]
        %v2067 = vld [vmem:[%s156 + $0x590] sm:$0xff]
        %v2068 = vld [vmem:[%s156 + $0x598] sm:$0xff]
        %v2069 = vld [vmem:[%s156 + $0x650] sm:$0xff]
        %v2070 = vld [vmem:[%s156 + $0x658] sm:$0xff]
        %v2071 = vld [vmem:[%s156 + $0x710] sm:$0xff]
        %v2072 = vld [vmem:[%s156 + $0x718] sm:$0xff]
        %v2073 = vld [vmem:[%s156 + $0x7d0] sm:$0xff]
        %v2074 = vld [vmem:[%s156 + $0x7d8] sm:$0xff]
        %v2075 = vld [vmem:[%s156 + $0x890] sm:$0xff]
        %v2076 = vld [vmem:[%s156 + $0x898] sm:$0xff]
        %v2077 = vld [vmem:[%s156 + $0x950] sm:$0xff]
        %v2078 = vld [vmem:[%s156 + $0x958] sm:$0xff]
        %v2079 = vld [vmem:[%s156 + $0xa10] sm:$0xff]
        %v2080 = vld [vmem:[%s156 + $0xa18] sm:$0xff]
        %v2081 = vld [vmem:[%s156 + $0xad0] sm:$0xff]
        %v2082 = vld [vmem:[%s156 + $0xad8] sm:$0xff]
        %v2083 = vld [vmem:[%s156 + $0xb90] sm:$0xff]
        %v2084 = vld [vmem:[%s156 + $0xb98] sm:$0xff]
        %v2085 = vld [vmem:[%s156 + $0xc50] sm:$0xff]
        %v2086 = vld [vmem:[%s156 + $0xc58] sm:$0xff]
        %v2087 = vld [vmem:[%s156 + $0xd10] sm:$0xff]
        %v2088 = vld [vmem:[%s156 + $0xd18] sm:$0xff]
        %v2089 = vld [vmem:[%s156 + $0xdd0] sm:$0xff]
        %v2090 = vld [vmem:[%s156 + $0xdd8] sm:$0xff]
        %v2091 = vld [vmem:[%s156 + $0xe90] sm:$0xff]
        %v2092 = vld [vmem:[%s156 + $0xe98] sm:$0xff]
        %v2093 = vld [vmem:[%s156 + $0xf50] sm:$0xff]
        %v2094 = vld [vmem:[%s156 + $0xf58] sm:$0xff]
        %v2095 = vld [vmem:[%s156 + $0x1010] sm:$0xff]
        %v2096 = vld [vmem:[%s156 + $0x1018] sm:$0xff]
        %v2097 = vld [vmem:[%s156 + $0x10d0] sm:$0xff]
        %v2098 = vld [vmem:[%s156 + $0x10d8] sm:$0xff]
        %v2099 = vld [vmem:[%s156 + $0x1190] sm:$0xff]
        %v2100 = vld [vmem:[%s156 + $0x1198] sm:$0xff]
        %v2101 = vld [vmem:[%s156 + $0x1250] sm:$0xff]
        %v2102 = vld [vmem:[%s156 + $0x1258] sm:$0xff]
        %v2103 = vld [vmem:[%s156 + $0x1310] sm:$0xff]
        %v2104 = vld [vmem:[%s156 + $0x1318] sm:$0xff]
        %v2105 = vld [vmem:[%s156 + $0x13d0] sm:$0xff]
        %v2106 = vld [vmem:[%s156 + $0x13d8] sm:$0xff]
        %v2107 = vld [vmem:[%s156 + $0x1490] sm:$0xff]
        %v2108 = vld [vmem:[%s156 + $0x1498] sm:$0xff]
        %v2109 = vld [vmem:[%s156 + $0x1550] sm:$0xff]
        %v2110 = vld [vmem:[%s156 + $0x1558] sm:$0xff]
        %v2111 = vld [vmem:[%s156 + $0x1610] sm:$0xff]
        %v2112 = vld [vmem:[%s156 + $0x1618] sm:$0xff]
        %v2113 = vld [vmem:[%s156 + $0x16d0] sm:$0xff]
        %v2114 = vld [vmem:[%s156 + $0x16d8] sm:$0xff]
        %v2115 = vld [vmem:[%s156 + $0x1790] sm:$0xff]
        %v2116 = vld [vmem:[%s156 + $0x1798] sm:$0xff]
        %v2117 = vld [vmem:[%s156 + $0x1850] sm:$0xff]
        %v2118 = vld [vmem:[%s156 + $0x1858] sm:$0xff]
        %v2119 = vld [vmem:[%s156 + $0x1910] sm:$0xff]
        %v2120 = vld [vmem:[%s156 + $0x1918] sm:$0xff]
        %v2121 = vld [vmem:[%s156 + $0x19d0] sm:$0xff]
        %v2122 = vld [vmem:[%s156 + $0x19d8] sm:$0xff]
        %v2123 = vld [vmem:[%s156 + $0x1a90] sm:$0xff]
        %v2124 = vld [vmem:[%s156 + $0x1a98] sm:$0xff]
        %v2125 = vld [vmem:[%s156 + $0x1b50] sm:$0xff]
        %v2126 = vld [vmem:[%s156 + $0x1b58] sm:$0xff]
        %v2127 = vld [vmem:[%s156 + $0x1c10] sm:$0xff]
        %v2128 = vld [vmem:[%s156 + $0x1c18] sm:$0xff]
        %v2129 = vld [vmem:[%s156 + $0x1cd0] sm:$0xff]
        %v2130 = vld [vmem:[%s156 + $0x1cd8] sm:$0xff]
        %v2131 = vld [vmem:[%s156 + $0x1d90] sm:$0xff]
        %v2132 = vld [vmem:[%s156 + $0x1d98] sm:$0xff]
        %v2133 = vld [vmem:[%s156 + $0x1e50] sm:$0xff]
        %v2134 = vld [vmem:[%s156 + $0x1e58] sm:$0xff]
        %v2135 = vld [vmem:[%s156 + $0x1f10] sm:$0xff]
        %v2136 = vld [vmem:[%s156 + $0x1f18] sm:$0xff]
        %v2137 = vld [vmem:[%s156 + $0x1fd0] sm:$0xff]
        %v2138 = vld [vmem:[%s156 + $0x1fd8] sm:$0xff]
        %v2139 = vld [vmem:[%s156 + $0x2090] sm:$0xff]
        %v2140 = vld [vmem:[%s156 + $0x2098] sm:$0xff]
        %v2141 = vld [vmem:[%s156 + $0x2150] sm:$0xff]
        %v2142 = vld [vmem:[%s156 + $0x2158] sm:$0xff]
        %v2143 = vld [vmem:[%s156 + $0x2210] sm:$0xff]
        %v2144 = vld [vmem:[%s156 + $0x2218] sm:$0xff]
        %v2145 = vld [vmem:[%s156 + $0x22d0] sm:$0xff]
        %v2146 = vld [vmem:[%s156 + $0x22d8] sm:$0xff]
        %v2147 = vld [vmem:[%s156 + $0x2390] sm:$0xff]
        %v2148 = vld [vmem:[%s156 + $0x2398] sm:$0xff]
        %v2149 = vld [vmem:[%s156 + $0x2450] sm:$0xff]
        %v2150 = vld [vmem:[%s156 + $0x2458] sm:$0xff]
        %v2151 = vld [vmem:[%s156 + $0x2510] sm:$0xff]
        %v2152 = vld [vmem:[%s156 + $0x2518] sm:$0xff]
        %v2153 = vld [vmem:[%s156 + $0x25d0] sm:$0xff]
        %v2154 = vld [vmem:[%s156 + $0x25d8] sm:$0xff]
        %v2155 = vld [vmem:[%s156 + $0x2690] sm:$0xff]
        %v2156 = vld [vmem:[%s156 + $0x2698] sm:$0xff]
        %v2157 = vld [vmem:[%s156 + $0x2750] sm:$0xff]
        %v2158 = vld [vmem:[%s156 + $0x2758] sm:$0xff]
        %v2159 = vld [vmem:[%s156 + $0x2810] sm:$0xff]
        %v2160 = vld [vmem:[%s156 + $0x2818] sm:$0xff]
        %v2161 = vld [vmem:[%s156 + $0x28d0] sm:$0xff]
        %v2162 = vld [vmem:[%s156 + $0x28d8] sm:$0xff]
        %v2163 = vld [vmem:[%s156 + $0x2990] sm:$0xff]
        %v2164 = vld [vmem:[%s156 + $0x2998] sm:$0xff]
        %v2165 = vld [vmem:[%s156 + $0x2a50] sm:$0xff]
        %v2166 = vld [vmem:[%s156 + $0x2a58] sm:$0xff]
        %v2167 = vld [vmem:[%s156 + $0x2b10] sm:$0xff]
        %v2168 = vld [vmem:[%s156 + $0x2b18] sm:$0xff]
        %v2169 = vld [vmem:[%s156 + $0x2bd0] sm:$0xff]
        %v2170 = vld [vmem:[%s156 + $0x2bd8] sm:$0xff]
        %v2171 = vld [vmem:[%s156 + $0x2c90] sm:$0xff]
        %v2172 = vld [vmem:[%s156 + $0x2c98] sm:$0xff]
        %v2173 = vld [vmem:[%s156 + $0x2d50] sm:$0xff]
        %v2174 = vld [vmem:[%s156 + $0x2d58] sm:$0xff]
        %v2175 = vld [vmem:[%s156 + $0x2e10] sm:$0xff]
        %v2176 = vld [vmem:[%s156 + $0x2e18] sm:$0xff]
        %v2177 = vld [vmem:[%s156 + $0x2ed0] sm:$0xff]
        %v2178 = vld [vmem:[%s156 + $0x2ed8] sm:$0xff]
        %v2179 = vld [vmem:[%s156 + $0x2f90] sm:$0xff]
        %v2180 = vld [vmem:[%s156 + $0x2f98] sm:$0xff]
        %v2181 = vld [vmem:[%s156 + $0x3050] sm:$0xff]
        %v2182 = vld [vmem:[%s156 + $0x3058] sm:$0xff]
        %v2183 = vld [vmem:[%s156 + $0x3110] sm:$0xff]
        %v2184 = vld [vmem:[%s156 + $0x3118] sm:$0xff]
        %v2185 = vstv %s2052
        %v2186 = vmul.f32 %v2185, %v2053
        %v2187 = vmul.f32 %v2185, %v2054
        %v2188 = vmul.f32 %v2185, %v2055
        %v2189 = vmul.f32 %v2185, %v2056
        %v2190 = vmul.f32 %v2185, %v2057
        %v2191 = vmul.f32 %v2185, %v2058
        %v2192 = vmul.f32 %v2185, %v2059
        %v2193 = vmul.f32 %v2185, %v2060
        %v2194 = vmul.f32 %v2185, %v2061
        %v2195 = vmul.f32 %v2185, %v2062
        %v2196 = vmul.f32 %v2185, %v2063
        %v2197 = vmul.f32 %v2185, %v2064
        %v2198 = vmul.f32 %v2185, %v2065
        %v2199 = vmul.f32 %v2185, %v2066
        %v2200 = vmul.f32 %v2185, %v2067
        %v2201 = vmul.f32 %v2185, %v2068
        %v2202 = vmul.f32 %v2185, %v2069
        %v2203 = vmul.f32 %v2185, %v2070
        %v2204 = vmul.f32 %v2185, %v2071
        %v2205 = vmul.f32 %v2185, %v2072
        %v2206 = vmul.f32 %v2185, %v2073
        %v2207 = vmul.f32 %v2185, %v2074
        %v2208 = vmul.f32 %v2185, %v2075
        %v2209 = vmul.f32 %v2185, %v2076
        %v2210 = vmul.f32 %v2185, %v2077
        %v2211 = vmul.f32 %v2185, %v2078
        %v2212 = vmul.f32 %v2185, %v2079
        %v2213 = vmul.f32 %v2185, %v2080
        %v2214 = vmul.f32 %v2185, %v2081
        %v2215 = vmul.f32 %v2185, %v2082
        %v2216 = vmul.f32 %v2185, %v2083
        %v2217 = vmul.f32 %v2185, %v2084
        %v2218 = vmul.f32 %v2185, %v2085
        %v2219 = vmul.f32 %v2185, %v2086
        %v2220 = vmul.f32 %v2185, %v2087
        %v2221 = vmul.f32 %v2185, %v2088
        %v2222 = vmul.f32 %v2185, %v2089
        %v2223 = vmul.f32 %v2185, %v2090
        %v2224 = vmul.f32 %v2185, %v2091
        %v2225 = vmul.f32 %v2185, %v2092
        %v2226 = vmul.f32 %v2185, %v2093
        %v2227 = vmul.f32 %v2185, %v2094
        %v2228 = vmul.f32 %v2185, %v2095
        %v2229 = vmul.f32 %v2185, %v2096
        %v2230 = vmul.f32 %v2185, %v2097
        %v2231 = vmul.f32 %v2185, %v2098
        %v2232 = vmul.f32 %v2185, %v2099
        %v2233 = vmul.f32 %v2185, %v2100
        %v2234 = vmul.f32 %v2185, %v2101
        %v2235 = vmul.f32 %v2185, %v2102
        %v2236 = vmul.f32 %v2185, %v2103
        %v2237 = vmul.f32 %v2185, %v2104
        %v2238 = vmul.f32 %v2185, %v2105
        %v2239 = vmul.f32 %v2185, %v2106
        %v2240 = vmul.f32 %v2185, %v2107
        %v2241 = vmul.f32 %v2185, %v2108
        %v2242 = vmul.f32 %v2185, %v2109
        %v2243 = vmul.f32 %v2185, %v2110
        %v2244 = vmul.f32 %v2185, %v2111
        %v2245 = vmul.f32 %v2185, %v2112
        %v2246 = vmul.f32 %v2185, %v2113
        %v2247 = vmul.f32 %v2185, %v2114
        %v2248 = vmul.f32 %v2185, %v2115
        %v2249 = vmul.f32 %v2185, %v2116
        %v2250 = vmul.f32 %v2185, %v2117
        %v2251 = vmul.f32 %v2185, %v2118
        %v2252 = vmul.f32 %v2185, %v2119
        %v2253 = vmul.f32 %v2185, %v2120
        %v2254 = vmul.f32 %v2185, %v2121
        %v2255 = vmul.f32 %v2185, %v2122
        %v2256 = vmul.f32 %v2185, %v2123
        %v2257 = vmul.f32 %v2185, %v2124
        %v2258 = vmul.f32 %v2185, %v2125
        %v2259 = vmul.f32 %v2185, %v2126
        %v2260 = vmul.f32 %v2185, %v2127
        %v2261 = vmul.f32 %v2185, %v2128
        %v2262 = vmul.f32 %v2185, %v2129
        %v2263 = vmul.f32 %v2185, %v2130
        %v2264 = vmul.f32 %v2185, %v2131
        %v2265 = vmul.f32 %v2185, %v2132
        %v2266 = vmul.f32 %v2185, %v2133
        %v2267 = vmul.f32 %v2185, %v2134
        %v2268 = vmul.f32 %v2185, %v2135
        %v2269 = vmul.f32 %v2185, %v2136
        %v2270 = vmul.f32 %v2185, %v2137
        %v2271 = vmul.f32 %v2185, %v2138
        %v2272 = vmul.f32 %v2185, %v2139
        %v2273 = vmul.f32 %v2185, %v2140
        %v2274 = vmul.f32 %v2185, %v2141
        %v2275 = vmul.f32 %v2185, %v2142
        %v2276 = vmul.f32 %v2185, %v2143
        %v2277 = vmul.f32 %v2185, %v2144
        %v2278 = vmul.f32 %v2185, %v2145
        %v2279 = vmul.f32 %v2185, %v2146
        %v2280 = vmul.f32 %v2185, %v2147
        %v2281 = vmul.f32 %v2185, %v2148
        %v2282 = vmul.f32 %v2185, %v2149
        %v2283 = vmul.f32 %v2185, %v2150
        %v2284 = vmul.f32 %v2185, %v2151
        %v2285 = vmul.f32 %v2185, %v2152
        %v2286 = vmul.f32 %v2185, %v2153
        %v2287 = vmul.f32 %v2185, %v2154
        %v2288 = vmul.f32 %v2185, %v2155
        %v2289 = vmul.f32 %v2185, %v2156
        %v2290 = vmul.f32 %v2185, %v2157
        %v2291 = vmul.f32 %v2185, %v2158
        %v2292 = vmul.f32 %v2185, %v2159
        %v2293 = vmul.f32 %v2185, %v2160
        %v2294 = vmul.f32 %v2185, %v2161
        %v2295 = vmul.f32 %v2185, %v2162
        %v2296 = vmul.f32 %v2185, %v2163
        %v2297 = vmul.f32 %v2185, %v2164
        %v2298 = vmul.f32 %v2185, %v2165
        %v2299 = vmul.f32 %v2185, %v2166
        %v2300 = vmul.f32 %v2185, %v2167
        %v2301 = vmul.f32 %v2185, %v2168
        %v2302 = vmul.f32 %v2185, %v2169
        %v2303 = vmul.f32 %v2185, %v2170
        %v2304 = vmul.f32 %v2185, %v2171
        %v2305 = vmul.f32 %v2185, %v2172
        %v2306 = vmul.f32 %v2185, %v2173
        %v2307 = vmul.f32 %v2185, %v2174
        %v2308 = vmul.f32 %v2185, %v2175
        %v2309 = vmul.f32 %v2185, %v2176
        %v2310 = vmul.f32 %v2185, %v2177
        %v2311 = vmul.f32 %v2185, %v2178
        %v2312 = vmul.f32 %v2185, %v2179
        %v2313 = vmul.f32 %v2185, %v2180
        %v2314 = vmul.f32 %v2185, %v2181
        %v2315 = vmul.f32 %v2185, %v2182
        %v2316 = vmul.f32 %v2185, %v2183
        %v2317 = vmul.f32 %v2185, %v2184
        %v2318 = vadd.f32 %v1920, %v2186
        %v2319 = vadd.f32 %v1921, %v2187
        %v2320 = vadd.f32 %v1922, %v2188
        %v2321 = vadd.f32 %v1923, %v2189
        %v2322 = vadd.f32 %v1924, %v2190
        %v2323 = vadd.f32 %v1925, %v2191
        %v2324 = vadd.f32 %v1926, %v2192
        %v2325 = vadd.f32 %v1927, %v2193
        %v2326 = vadd.f32 %v1928, %v2194
        %v2327 = vadd.f32 %v1929, %v2195
        %v2328 = vadd.f32 %v1930, %v2196
        %v2329 = vadd.f32 %v1931, %v2197
        %v2330 = vadd.f32 %v1932, %v2198
        %v2331 = vadd.f32 %v1933, %v2199
        %v2332 = vadd.f32 %v1934, %v2200
        %v2333 = vadd.f32 %v1935, %v2201
        %v2334 = vadd.f32 %v1936, %v2202
        %v2335 = vadd.f32 %v1937, %v2203
        %v2336 = vadd.f32 %v1938, %v2204
        %v2337 = vadd.f32 %v1939, %v2205
        %v2338 = vadd.f32 %v1940, %v2206
        %v2339 = vadd.f32 %v1941, %v2207
        %v2340 = vadd.f32 %v1942, %v2208
        %v2341 = vadd.f32 %v1943, %v2209
        %v2342 = vadd.f32 %v1944, %v2210
        %v2343 = vadd.f32 %v1945, %v2211
        %v2344 = vadd.f32 %v1946, %v2212
        %v2345 = vadd.f32 %v1947, %v2213
        %v2346 = vadd.f32 %v1948, %v2214
        %v2347 = vadd.f32 %v1949, %v2215
        %v2348 = vadd.f32 %v1950, %v2216
        %v2349 = vadd.f32 %v1951, %v2217
        %v2350 = vadd.f32 %v1952, %v2218
        %v2351 = vadd.f32 %v1953, %v2219
        %v2352 = vadd.f32 %v1954, %v2220
        %v2353 = vadd.f32 %v1955, %v2221
        %v2354 = vadd.f32 %v1956, %v2222
        %v2355 = vadd.f32 %v1957, %v2223
        %v2356 = vadd.f32 %v1958, %v2224
        %v2357 = vadd.f32 %v1959, %v2225
        %v2358 = vadd.f32 %v1960, %v2226
        %v2359 = vadd.f32 %v1961, %v2227
        %v2360 = vadd.f32 %v1962, %v2228
        %v2361 = vadd.f32 %v1963, %v2229
        %v2362 = vadd.f32 %v1964, %v2230
        %v2363 = vadd.f32 %v1965, %v2231
        %v2364 = vadd.f32 %v1966, %v2232
        %v2365 = vadd.f32 %v1967, %v2233
        %v2366 = vadd.f32 %v1968, %v2234
        %v2367 = vadd.f32 %v1969, %v2235
        %v2368 = vadd.f32 %v1970, %v2236
        %v2369 = vadd.f32 %v1971, %v2237
        %v2370 = vadd.f32 %v1972, %v2238
        %v2371 = vadd.f32 %v1973, %v2239
        %v2372 = vadd.f32 %v1974, %v2240
        %v2373 = vadd.f32 %v1975, %v2241
        %v2374 = vadd.f32 %v1976, %v2242
        %v2375 = vadd.f32 %v1977, %v2243
        %v2376 = vadd.f32 %v1978, %v2244
        %v2377 = vadd.f32 %v1979, %v2245
        %v2378 = vadd.f32 %v1980, %v2246
        %v2379 = vadd.f32 %v1981, %v2247
        %v2380 = vadd.f32 %v1982, %v2248
        %v2381 = vadd.f32 %v1983, %v2249
        %v2382 = vadd.f32 %v1984, %v2250
        %v2383 = vadd.f32 %v1985, %v2251
        %v2384 = vadd.f32 %v1986, %v2252
        %v2385 = vadd.f32 %v1987, %v2253
        %v2386 = vadd.f32 %v1988, %v2254
        %v2387 = vadd.f32 %v1989, %v2255
        %v2388 = vadd.f32 %v1990, %v2256
        %v2389 = vadd.f32 %v1991, %v2257
        %v2390 = vadd.f32 %v1992, %v2258
        %v2391 = vadd.f32 %v1993, %v2259
        %v2392 = vadd.f32 %v1994, %v2260
        %v2393 = vadd.f32 %v1995, %v2261
        %v2394 = vadd.f32 %v1996, %v2262
        %v2395 = vadd.f32 %v1997, %v2263
        %v2396 = vadd.f32 %v1998, %v2264
        %v2397 = vadd.f32 %v1999, %v2265
        %v2398 = vadd.f32 %v2000, %v2266
        %v2399 = vadd.f32 %v2001, %v2267
        %v2400 = vadd.f32 %v2002, %v2268
        %v2401 = vadd.f32 %v2003, %v2269
        %v2402 = vadd.f32 %v2004, %v2270
        %v2403 = vadd.f32 %v2005, %v2271
        %v2404 = vadd.f32 %v2006, %v2272
        %v2405 = vadd.f32 %v2007, %v2273
        %v2406 = vadd.f32 %v2008, %v2274
        %v2407 = vadd.f32 %v2009, %v2275
        %v2408 = vadd.f32 %v2010, %v2276
        %v2409 = vadd.f32 %v2011, %v2277
        %v2410 = vadd.f32 %v2012, %v2278
        %v2411 = vadd.f32 %v2013, %v2279
        %v2412 = vadd.f32 %v2014, %v2280
        %v2413 = vadd.f32 %v2015, %v2281
        %v2414 = vadd.f32 %v2016, %v2282
        %v2415 = vadd.f32 %v2017, %v2283
        %v2416 = vadd.f32 %v2018, %v2284
        %v2417 = vadd.f32 %v2019, %v2285
        %v2418 = vadd.f32 %v2020, %v2286
        %v2419 = vadd.f32 %v2021, %v2287
        %v2420 = vadd.f32 %v2022, %v2288
        %v2421 = vadd.f32 %v2023, %v2289
        %v2422 = vadd.f32 %v2024, %v2290
        %v2423 = vadd.f32 %v2025, %v2291
        %v2424 = vadd.f32 %v2026, %v2292
        %v2425 = vadd.f32 %v2027, %v2293
        %v2426 = vadd.f32 %v2028, %v2294
        %v2427 = vadd.f32 %v2029, %v2295
        %v2428 = vadd.f32 %v2030, %v2296
        %v2429 = vadd.f32 %v2031, %v2297
        %v2430 = vadd.f32 %v2032, %v2298
        %v2431 = vadd.f32 %v2033, %v2299
        %v2432 = vadd.f32 %v2034, %v2300
        %v2433 = vadd.f32 %v2035, %v2301
        %v2434 = vadd.f32 %v2036, %v2302
        %v2435 = vadd.f32 %v2037, %v2303
        %v2436 = vadd.f32 %v2038, %v2304
        %v2437 = vadd.f32 %v2039, %v2305
        %v2438 = vadd.f32 %v2040, %v2306
        %v2439 = vadd.f32 %v2041, %v2307
        %v2440 = vadd.f32 %v2042, %v2308
        %v2441 = vadd.f32 %v2043, %v2309
        %v2442 = vadd.f32 %v2044, %v2310
        %v2443 = vadd.f32 %v2045, %v2311
        %v2444 = vadd.f32 %v2046, %v2312
        %v2445 = vadd.f32 %v2047, %v2313
        %v2446 = vadd.f32 %v2048, %v2314
        %v2447 = vadd.f32 %v2049, %v2315
        %v2448 = vadd.f32 %v2050, %v2316
        %v2449 = vadd.f32 %v2051, %v2317
        %s2450 = sld [smem:[#allocation6 + $0x6]]
        %v2451 = vld [vmem:[%s156 + $0x60] sm:$0xff]
        %v2452 = vld [vmem:[%s156 + $0x68] sm:$0xff]
        %v2453 = vld [vmem:[%s156 + $0x120] sm:$0xff]
        %v2454 = vld [vmem:[%s156 + $0x128] sm:$0xff]
        %v2455 = vld [vmem:[%s156 + $0x1e0] sm:$0xff]
        %v2456 = vld [vmem:[%s156 + $0x1e8] sm:$0xff]
        %v2457 = vld [vmem:[%s156 + $0x2a0] sm:$0xff]
        %v2458 = vld [vmem:[%s156 + $0x2a8] sm:$0xff]
        %v2459 = vld [vmem:[%s156 + $0x360] sm:$0xff]
        %v2460 = vld [vmem:[%s156 + $0x368] sm:$0xff]
        %v2461 = vld [vmem:[%s156 + $0x420] sm:$0xff]
        %v2462 = vld [vmem:[%s156 + $0x428] sm:$0xff]
        %v2463 = vld [vmem:[%s156 + $0x4e0] sm:$0xff]
        %v2464 = vld [vmem:[%s156 + $0x4e8] sm:$0xff]
        %v2465 = vld [vmem:[%s156 + $0x5a0] sm:$0xff]
        %v2466 = vld [vmem:[%s156 + $0x5a8] sm:$0xff]
        %v2467 = vld [vmem:[%s156 + $0x660] sm:$0xff]
        %v2468 = vld [vmem:[%s156 + $0x668] sm:$0xff]
        %v2469 = vld [vmem:[%s156 + $0x720] sm:$0xff]
        %v2470 = vld [vmem:[%s156 + $0x728] sm:$0xff]
        %v2471 = vld [vmem:[%s156 + $0x7e0] sm:$0xff]
        %v2472 = vld [vmem:[%s156 + $0x7e8] sm:$0xff]
        %v2473 = vld [vmem:[%s156 + $0x8a0] sm:$0xff]
        %v2474 = vld [vmem:[%s156 + $0x8a8] sm:$0xff]
        %v2475 = vld [vmem:[%s156 + $0x960] sm:$0xff]
        %v2476 = vld [vmem:[%s156 + $0x968] sm:$0xff]
        %v2477 = vld [vmem:[%s156 + $0xa20] sm:$0xff]
        %v2478 = vld [vmem:[%s156 + $0xa28] sm:$0xff]
        %v2479 = vld [vmem:[%s156 + $0xae0] sm:$0xff]
        %v2480 = vld [vmem:[%s156 + $0xae8] sm:$0xff]
        %v2481 = vld [vmem:[%s156 + $0xba0] sm:$0xff]
        %v2482 = vld [vmem:[%s156 + $0xba8] sm:$0xff]
        %v2483 = vld [vmem:[%s156 + $0xc60] sm:$0xff]
        %v2484 = vld [vmem:[%s156 + $0xc68] sm:$0xff]
        %v2485 = vld [vmem:[%s156 + $0xd20] sm:$0xff]
        %v2486 = vld [vmem:[%s156 + $0xd28] sm:$0xff]
        %v2487 = vld [vmem:[%s156 + $0xde0] sm:$0xff]
        %v2488 = vld [vmem:[%s156 + $0xde8] sm:$0xff]
        %v2489 = vld [vmem:[%s156 + $0xea0] sm:$0xff]
        %v2490 = vld [vmem:[%s156 + $0xea8] sm:$0xff]
        %v2491 = vld [vmem:[%s156 + $0xf60] sm:$0xff]
        %v2492 = vld [vmem:[%s156 + $0xf68] sm:$0xff]
        %v2493 = vld [vmem:[%s156 + $0x1020] sm:$0xff]
        %v2494 = vld [vmem:[%s156 + $0x1028] sm:$0xff]
        %v2495 = vld [vmem:[%s156 + $0x10e0] sm:$0xff]
        %v2496 = vld [vmem:[%s156 + $0x10e8] sm:$0xff]
        %v2497 = vld [vmem:[%s156 + $0x11a0] sm:$0xff]
        %v2498 = vld [vmem:[%s156 + $0x11a8] sm:$0xff]
        %v2499 = vld [vmem:[%s156 + $0x1260] sm:$0xff]
        %v2500 = vld [vmem:[%s156 + $0x1268] sm:$0xff]
        %v2501 = vld [vmem:[%s156 + $0x1320] sm:$0xff]
        %v2502 = vld [vmem:[%s156 + $0x1328] sm:$0xff]
        %v2503 = vld [vmem:[%s156 + $0x13e0] sm:$0xff]
        %v2504 = vld [vmem:[%s156 + $0x13e8] sm:$0xff]
        %v2505 = vld [vmem:[%s156 + $0x14a0] sm:$0xff]
        %v2506 = vld [vmem:[%s156 + $0x14a8] sm:$0xff]
        %v2507 = vld [vmem:[%s156 + $0x1560] sm:$0xff]
        %v2508 = vld [vmem:[%s156 + $0x1568] sm:$0xff]
        %v2509 = vld [vmem:[%s156 + $0x1620] sm:$0xff]
        %v2510 = vld [vmem:[%s156 + $0x1628] sm:$0xff]
        %v2511 = vld [vmem:[%s156 + $0x16e0] sm:$0xff]
        %v2512 = vld [vmem:[%s156 + $0x16e8] sm:$0xff]
        %v2513 = vld [vmem:[%s156 + $0x17a0] sm:$0xff]
        %v2514 = vld [vmem:[%s156 + $0x17a8] sm:$0xff]
        %v2515 = vld [vmem:[%s156 + $0x1860] sm:$0xff]
        %v2516 = vld [vmem:[%s156 + $0x1868] sm:$0xff]
        %v2517 = vld [vmem:[%s156 + $0x1920] sm:$0xff]
        %v2518 = vld [vmem:[%s156 + $0x1928] sm:$0xff]
        %v2519 = vld [vmem:[%s156 + $0x19e0] sm:$0xff]
        %v2520 = vld [vmem:[%s156 + $0x19e8] sm:$0xff]
        %v2521 = vld [vmem:[%s156 + $0x1aa0] sm:$0xff]
        %v2522 = vld [vmem:[%s156 + $0x1aa8] sm:$0xff]
        %v2523 = vld [vmem:[%s156 + $0x1b60] sm:$0xff]
        %v2524 = vld [vmem:[%s156 + $0x1b68] sm:$0xff]
        %v2525 = vld [vmem:[%s156 + $0x1c20] sm:$0xff]
        %v2526 = vld [vmem:[%s156 + $0x1c28] sm:$0xff]
        %v2527 = vld [vmem:[%s156 + $0x1ce0] sm:$0xff]
        %v2528 = vld [vmem:[%s156 + $0x1ce8] sm:$0xff]
        %v2529 = vld [vmem:[%s156 + $0x1da0] sm:$0xff]
        %v2530 = vld [vmem:[%s156 + $0x1da8] sm:$0xff]
        %v2531 = vld [vmem:[%s156 + $0x1e60] sm:$0xff]
        %v2532 = vld [vmem:[%s156 + $0x1e68] sm:$0xff]
        %v2533 = vld [vmem:[%s156 + $0x1f20] sm:$0xff]
        %v2534 = vld [vmem:[%s156 + $0x1f28] sm:$0xff]
        %v2535 = vld [vmem:[%s156 + $0x1fe0] sm:$0xff]
        %v2536 = vld [vmem:[%s156 + $0x1fe8] sm:$0xff]
        %v2537 = vld [vmem:[%s156 + $0x20a0] sm:$0xff]
        %v2538 = vld [vmem:[%s156 + $0x20a8] sm:$0xff]
        %v2539 = vld [vmem:[%s156 + $0x2160] sm:$0xff]
        %v2540 = vld [vmem:[%s156 + $0x2168] sm:$0xff]
        %v2541 = vld [vmem:[%s156 + $0x2220] sm:$0xff]
        %v2542 = vld [vmem:[%s156 + $0x2228] sm:$0xff]
        %v2543 = vld [vmem:[%s156 + $0x22e0] sm:$0xff]
        %v2544 = vld [vmem:[%s156 + $0x22e8] sm:$0xff]
        %v2545 = vld [vmem:[%s156 + $0x23a0] sm:$0xff]
        %v2546 = vld [vmem:[%s156 + $0x23a8] sm:$0xff]
        %v2547 = vld [vmem:[%s156 + $0x2460] sm:$0xff]
        %v2548 = vld [vmem:[%s156 + $0x2468] sm:$0xff]
        %v2549 = vld [vmem:[%s156 + $0x2520] sm:$0xff]
        %v2550 = vld [vmem:[%s156 + $0x2528] sm:$0xff]
        %v2551 = vld [vmem:[%s156 + $0x25e0] sm:$0xff]
        %v2552 = vld [vmem:[%s156 + $0x25e8] sm:$0xff]
        %v2553 = vld [vmem:[%s156 + $0x26a0] sm:$0xff]
        %v2554 = vld [vmem:[%s156 + $0x26a8] sm:$0xff]
        %v2555 = vld [vmem:[%s156 + $0x2760] sm:$0xff]
        %v2556 = vld [vmem:[%s156 + $0x2768] sm:$0xff]
        %v2557 = vld [vmem:[%s156 + $0x2820] sm:$0xff]
        %v2558 = vld [vmem:[%s156 + $0x2828] sm:$0xff]
        %v2559 = vld [vmem:[%s156 + $0x28e0] sm:$0xff]
        %v2560 = vld [vmem:[%s156 + $0x28e8] sm:$0xff]
        %v2561 = vld [vmem:[%s156 + $0x29a0] sm:$0xff]
        %v2562 = vld [vmem:[%s156 + $0x29a8] sm:$0xff]
        %v2563 = vld [vmem:[%s156 + $0x2a60] sm:$0xff]
        %v2564 = vld [vmem:[%s156 + $0x2a68] sm:$0xff]
        %v2565 = vld [vmem:[%s156 + $0x2b20] sm:$0xff]
        %v2566 = vld [vmem:[%s156 + $0x2b28] sm:$0xff]
        %v2567 = vld [vmem:[%s156 + $0x2be0] sm:$0xff]
        %v2568 = vld [vmem:[%s156 + $0x2be8] sm:$0xff]
        %v2569 = vld [vmem:[%s156 + $0x2ca0] sm:$0xff]
        %v2570 = vld [vmem:[%s156 + $0x2ca8] sm:$0xff]
        %v2571 = vld [vmem:[%s156 + $0x2d60] sm:$0xff]
        %v2572 = vld [vmem:[%s156 + $0x2d68] sm:$0xff]
        %v2573 = vld [vmem:[%s156 + $0x2e20] sm:$0xff]
        %v2574 = vld [vmem:[%s156 + $0x2e28] sm:$0xff]
        %v2575 = vld [vmem:[%s156 + $0x2ee0] sm:$0xff]
        %v2576 = vld [vmem:[%s156 + $0x2ee8] sm:$0xff]
        %v2577 = vld [vmem:[%s156 + $0x2fa0] sm:$0xff]
        %v2578 = vld [vmem:[%s156 + $0x2fa8] sm:$0xff]
        %v2579 = vld [vmem:[%s156 + $0x3060] sm:$0xff]
        %v2580 = vld [vmem:[%s156 + $0x3068] sm:$0xff]
        %v2581 = vld [vmem:[%s156 + $0x3120] sm:$0xff]
        %v2582 = vld [vmem:[%s156 + $0x3128] sm:$0xff]
        %v2583 = vstv %s2450
        %v2584 = vmul.f32 %v2583, %v2451
        %v2585 = vmul.f32 %v2583, %v2452
        %v2586 = vmul.f32 %v2583, %v2453
        %v2587 = vmul.f32 %v2583, %v2454
        %v2588 = vmul.f32 %v2583, %v2455
        %v2589 = vmul.f32 %v2583, %v2456
        %v2590 = vmul.f32 %v2583, %v2457
        %v2591 = vmul.f32 %v2583, %v2458
        %v2592 = vmul.f32 %v2583, %v2459
        %v2593 = vmul.f32 %v2583, %v2460
        %v2594 = vmul.f32 %v2583, %v2461
        %v2595 = vmul.f32 %v2583, %v2462
        %v2596 = vmul.f32 %v2583, %v2463
        %v2597 = vmul.f32 %v2583, %v2464
        %v2598 = vmul.f32 %v2583, %v2465
        %v2599 = vmul.f32 %v2583, %v2466
        %v2600 = vmul.f32 %v2583, %v2467
        %v2601 = vmul.f32 %v2583, %v2468
        %v2602 = vmul.f32 %v2583, %v2469
        %v2603 = vmul.f32 %v2583, %v2470
        %v2604 = vmul.f32 %v2583, %v2471
        %v2605 = vmul.f32 %v2583, %v2472
        %v2606 = vmul.f32 %v2583, %v2473
        %v2607 = vmul.f32 %v2583, %v2474
        %v2608 = vmul.f32 %v2583, %v2475
        %v2609 = vmul.f32 %v2583, %v2476
        %v2610 = vmul.f32 %v2583, %v2477
        %v2611 = vmul.f32 %v2583, %v2478
        %v2612 = vmul.f32 %v2583, %v2479
        %v2613 = vmul.f32 %v2583, %v2480
        %v2614 = vmul.f32 %v2583, %v2481
        %v2615 = vmul.f32 %v2583, %v2482
        %v2616 = vmul.f32 %v2583, %v2483
        %v2617 = vmul.f32 %v2583, %v2484
        %v2618 = vmul.f32 %v2583, %v2485
        %v2619 = vmul.f32 %v2583, %v2486
        %v2620 = vmul.f32 %v2583, %v2487
        %v2621 = vmul.f32 %v2583, %v2488
        %v2622 = vmul.f32 %v2583, %v2489
        %v2623 = vmul.f32 %v2583, %v2490
        %v2624 = vmul.f32 %v2583, %v2491
        %v2625 = vmul.f32 %v2583, %v2492
        %v2626 = vmul.f32 %v2583, %v2493
        %v2627 = vmul.f32 %v2583, %v2494
        %v2628 = vmul.f32 %v2583, %v2495
        %v2629 = vmul.f32 %v2583, %v2496
        %v2630 = vmul.f32 %v2583, %v2497
        %v2631 = vmul.f32 %v2583, %v2498
        %v2632 = vmul.f32 %v2583, %v2499
        %v2633 = vmul.f32 %v2583, %v2500
        %v2634 = vmul.f32 %v2583, %v2501
        %v2635 = vmul.f32 %v2583, %v2502
        %v2636 = vmul.f32 %v2583, %v2503
        %v2637 = vmul.f32 %v2583, %v2504
        %v2638 = vmul.f32 %v2583, %v2505
        %v2639 = vmul.f32 %v2583, %v2506
        %v2640 = vmul.f32 %v2583, %v2507
        %v2641 = vmul.f32 %v2583, %v2508
        %v2642 = vmul.f32 %v2583, %v2509
        %v2643 = vmul.f32 %v2583, %v2510
        %v2644 = vmul.f32 %v2583, %v2511
        %v2645 = vmul.f32 %v2583, %v2512
        %v2646 = vmul.f32 %v2583, %v2513
        %v2647 = vmul.f32 %v2583, %v2514
        %v2648 = vmul.f32 %v2583, %v2515
        %v2649 = vmul.f32 %v2583, %v2516
        %v2650 = vmul.f32 %v2583, %v2517
        %v2651 = vmul.f32 %v2583, %v2518
        %v2652 = vmul.f32 %v2583, %v2519
        %v2653 = vmul.f32 %v2583, %v2520
        %v2654 = vmul.f32 %v2583, %v2521
        %v2655 = vmul.f32 %v2583, %v2522
        %v2656 = vmul.f32 %v2583, %v2523
        %v2657 = vmul.f32 %v2583, %v2524
        %v2658 = vmul.f32 %v2583, %v2525
        %v2659 = vmul.f32 %v2583, %v2526
        %v2660 = vmul.f32 %v2583, %v2527
        %v2661 = vmul.f32 %v2583, %v2528
        %v2662 = vmul.f32 %v2583, %v2529
        %v2663 = vmul.f32 %v2583, %v2530
        %v2664 = vmul.f32 %v2583, %v2531
        %v2665 = vmul.f32 %v2583, %v2532
        %v2666 = vmul.f32 %v2583, %v2533
        %v2667 = vmul.f32 %v2583, %v2534
        %v2668 = vmul.f32 %v2583, %v2535
        %v2669 = vmul.f32 %v2583, %v2536
        %v2670 = vmul.f32 %v2583, %v2537
        %v2671 = vmul.f32 %v2583, %v2538
        %v2672 = vmul.f32 %v2583, %v2539
        %v2673 = vmul.f32 %v2583, %v2540
        %v2674 = vmul.f32 %v2583, %v2541
        %v2675 = vmul.f32 %v2583, %v2542
        %v2676 = vmul.f32 %v2583, %v2543
        %v2677 = vmul.f32 %v2583, %v2544
        %v2678 = vmul.f32 %v2583, %v2545
        %v2679 = vmul.f32 %v2583, %v2546
        %v2680 = vmul.f32 %v2583, %v2547
        %v2681 = vmul.f32 %v2583, %v2548
        %v2682 = vmul.f32 %v2583, %v2549
        %v2683 = vmul.f32 %v2583, %v2550
        %v2684 = vmul.f32 %v2583, %v2551
        %v2685 = vmul.f32 %v2583, %v2552
        %v2686 = vmul.f32 %v2583, %v2553
        %v2687 = vmul.f32 %v2583, %v2554
        %v2688 = vmul.f32 %v2583, %v2555
        %v2689 = vmul.f32 %v2583, %v2556
        %v2690 = vmul.f32 %v2583, %v2557
        %v2691 = vmul.f32 %v2583, %v2558
        %v2692 = vmul.f32 %v2583, %v2559
        %v2693 = vmul.f32 %v2583, %v2560
        %v2694 = vmul.f32 %v2583, %v2561
        %v2695 = vmul.f32 %v2583, %v2562
        %v2696 = vmul.f32 %v2583, %v2563
        %v2697 = vmul.f32 %v2583, %v2564
        %v2698 = vmul.f32 %v2583, %v2565
        %v2699 = vmul.f32 %v2583, %v2566
        %v2700 = vmul.f32 %v2583, %v2567
        %v2701 = vmul.f32 %v2583, %v2568
        %v2702 = vmul.f32 %v2583, %v2569
        %v2703 = vmul.f32 %v2583, %v2570
        %v2704 = vmul.f32 %v2583, %v2571
        %v2705 = vmul.f32 %v2583, %v2572
        %v2706 = vmul.f32 %v2583, %v2573
        %v2707 = vmul.f32 %v2583, %v2574
        %v2708 = vmul.f32 %v2583, %v2575
        %v2709 = vmul.f32 %v2583, %v2576
        %v2710 = vmul.f32 %v2583, %v2577
        %v2711 = vmul.f32 %v2583, %v2578
        %v2712 = vmul.f32 %v2583, %v2579
        %v2713 = vmul.f32 %v2583, %v2580
        %v2714 = vmul.f32 %v2583, %v2581
        %v2715 = vmul.f32 %v2583, %v2582
        %v2716 = vadd.f32 %v2318, %v2584
        %v2717 = vadd.f32 %v2319, %v2585
        %v2718 = vadd.f32 %v2320, %v2586
        %v2719 = vadd.f32 %v2321, %v2587
        %v2720 = vadd.f32 %v2322, %v2588
        %v2721 = vadd.f32 %v2323, %v2589
        %v2722 = vadd.f32 %v2324, %v2590
        %v2723 = vadd.f32 %v2325, %v2591
        %v2724 = vadd.f32 %v2326, %v2592
        %v2725 = vadd.f32 %v2327, %v2593
        %v2726 = vadd.f32 %v2328, %v2594
        %v2727 = vadd.f32 %v2329, %v2595
        %v2728 = vadd.f32 %v2330, %v2596
        %v2729 = vadd.f32 %v2331, %v2597
        %v2730 = vadd.f32 %v2332, %v2598
        %v2731 = vadd.f32 %v2333, %v2599
        %v2732 = vadd.f32 %v2334, %v2600
        %v2733 = vadd.f32 %v2335, %v2601
        %v2734 = vadd.f32 %v2336, %v2602
        %v2735 = vadd.f32 %v2337, %v2603
        %v2736 = vadd.f32 %v2338, %v2604
        %v2737 = vadd.f32 %v2339, %v2605
        %v2738 = vadd.f32 %v2340, %v2606
        %v2739 = vadd.f32 %v2341, %v2607
        %v2740 = vadd.f32 %v2342, %v2608
        %v2741 = vadd.f32 %v2343, %v2609
        %v2742 = vadd.f32 %v2344, %v2610
        %v2743 = vadd.f32 %v2345, %v2611
        %v2744 = vadd.f32 %v2346, %v2612
        %v2745 = vadd.f32 %v2347, %v2613
        %v2746 = vadd.f32 %v2348, %v2614
        %v2747 = vadd.f32 %v2349, %v2615
        %v2748 = vadd.f32 %v2350, %v2616
        %v2749 = vadd.f32 %v2351, %v2617
        %v2750 = vadd.f32 %v2352, %v2618
        %v2751 = vadd.f32 %v2353, %v2619
        %v2752 = vadd.f32 %v2354, %v2620
        %v2753 = vadd.f32 %v2355, %v2621
        %v2754 = vadd.f32 %v2356, %v2622
        %v2755 = vadd.f32 %v2357, %v2623
        %v2756 = vadd.f32 %v2358, %v2624
        %v2757 = vadd.f32 %v2359, %v2625
        %v2758 = vadd.f32 %v2360, %v2626
        %v2759 = vadd.f32 %v2361, %v2627
        %v2760 = vadd.f32 %v2362, %v2628
        %v2761 = vadd.f32 %v2363, %v2629
        %v2762 = vadd.f32 %v2364, %v2630
        %v2763 = vadd.f32 %v2365, %v2631
        %v2764 = vadd.f32 %v2366, %v2632
        %v2765 = vadd.f32 %v2367, %v2633
        %v2766 = vadd.f32 %v2368, %v2634
        %v2767 = vadd.f32 %v2369, %v2635
        %v2768 = vadd.f32 %v2370, %v2636
        %v2769 = vadd.f32 %v2371, %v2637
        %v2770 = vadd.f32 %v2372, %v2638
        %v2771 = vadd.f32 %v2373, %v2639
        %v2772 = vadd.f32 %v2374, %v2640
        %v2773 = vadd.f32 %v2375, %v2641
        %v2774 = vadd.f32 %v2376, %v2642
        %v2775 = vadd.f32 %v2377, %v2643
        %v2776 = vadd.f32 %v2378, %v2644
        %v2777 = vadd.f32 %v2379, %v2645
        %v2778 = vadd.f32 %v2380, %v2646
        %v2779 = vadd.f32 %v2381, %v2647
        %v2780 = vadd.f32 %v2382, %v2648
        %v2781 = vadd.f32 %v2383, %v2649
        %v2782 = vadd.f32 %v2384, %v2650
        %v2783 = vadd.f32 %v2385, %v2651
        %v2784 = vadd.f32 %v2386, %v2652
        %v2785 = vadd.f32 %v2387, %v2653
        %v2786 = vadd.f32 %v2388, %v2654
        %v2787 = vadd.f32 %v2389, %v2655
        %v2788 = vadd.f32 %v2390, %v2656
        %v2789 = vadd.f32 %v2391, %v2657
        %v2790 = vadd.f32 %v2392, %v2658
        %v2791 = vadd.f32 %v2393, %v2659
        %v2792 = vadd.f32 %v2394, %v2660
        %v2793 = vadd.f32 %v2395, %v2661
        %v2794 = vadd.f32 %v2396, %v2662
        %v2795 = vadd.f32 %v2397, %v2663
        %v2796 = vadd.f32 %v2398, %v2664
        %v2797 = vadd.f32 %v2399, %v2665
        %v2798 = vadd.f32 %v2400, %v2666
        %v2799 = vadd.f32 %v2401, %v2667
        %v2800 = vadd.f32 %v2402, %v2668
        %v2801 = vadd.f32 %v2403, %v2669
        %v2802 = vadd.f32 %v2404, %v2670
        %v2803 = vadd.f32 %v2405, %v2671
        %v2804 = vadd.f32 %v2406, %v2672
        %v2805 = vadd.f32 %v2407, %v2673
        %v2806 = vadd.f32 %v2408, %v2674
        %v2807 = vadd.f32 %v2409, %v2675
        %v2808 = vadd.f32 %v2410, %v2676
        %v2809 = vadd.f32 %v2411, %v2677
        %v2810 = vadd.f32 %v2412, %v2678
        %v2811 = vadd.f32 %v2413, %v2679
        %v2812 = vadd.f32 %v2414, %v2680
        %v2813 = vadd.f32 %v2415, %v2681
        %v2814 = vadd.f32 %v2416, %v2682
        %v2815 = vadd.f32 %v2417, %v2683
        %v2816 = vadd.f32 %v2418, %v2684
        %v2817 = vadd.f32 %v2419, %v2685
        %v2818 = vadd.f32 %v2420, %v2686
        %v2819 = vadd.f32 %v2421, %v2687
        %v2820 = vadd.f32 %v2422, %v2688
        %v2821 = vadd.f32 %v2423, %v2689
        %v2822 = vadd.f32 %v2424, %v2690
        %v2823 = vadd.f32 %v2425, %v2691
        %v2824 = vadd.f32 %v2426, %v2692
        %v2825 = vadd.f32 %v2427, %v2693
        %v2826 = vadd.f32 %v2428, %v2694
        %v2827 = vadd.f32 %v2429, %v2695
        %v2828 = vadd.f32 %v2430, %v2696
        %v2829 = vadd.f32 %v2431, %v2697
        %v2830 = vadd.f32 %v2432, %v2698
        %v2831 = vadd.f32 %v2433, %v2699
        %v2832 = vadd.f32 %v2434, %v2700
        %v2833 = vadd.f32 %v2435, %v2701
        %v2834 = vadd.f32 %v2436, %v2702
        %v2835 = vadd.f32 %v2437, %v2703
        %v2836 = vadd.f32 %v2438, %v2704
        %v2837 = vadd.f32 %v2439, %v2705
        %v2838 = vadd.f32 %v2440, %v2706
        %v2839 = vadd.f32 %v2441, %v2707
        %v2840 = vadd.f32 %v2442, %v2708
        %v2841 = vadd.f32 %v2443, %v2709
        %v2842 = vadd.f32 %v2444, %v2710
        %v2843 = vadd.f32 %v2445, %v2711
        %v2844 = vadd.f32 %v2446, %v2712
        %v2845 = vadd.f32 %v2447, %v2713
        %v2846 = vadd.f32 %v2448, %v2714
        %v2847 = vadd.f32 %v2449, %v2715
        %s2848 = sld [smem:[#allocation6 + $0x7]]
        %v2849 = vld [vmem:[%s156 + $0x70] sm:$0xff]
        %v2850 = vld [vmem:[%s156 + $0x78] sm:$0xff]
        %v2851 = vld [vmem:[%s156 + $0x130] sm:$0xff]
        %v2852 = vld [vmem:[%s156 + $0x138] sm:$0xff]
        %v2853 = vld [vmem:[%s156 + $0x1f0] sm:$0xff]
        %v2854 = vld [vmem:[%s156 + $0x1f8] sm:$0xff]
        %v2855 = vld [vmem:[%s156 + $0x2b0] sm:$0xff]
        %v2856 = vld [vmem:[%s156 + $0x2b8] sm:$0xff]
        %v2857 = vld [vmem:[%s156 + $0x370] sm:$0xff]
        %v2858 = vld [vmem:[%s156 + $0x378] sm:$0xff]
        %v2859 = vld [vmem:[%s156 + $0x430] sm:$0xff]
        %v2860 = vld [vmem:[%s156 + $0x438] sm:$0xff]
        %v2861 = vld [vmem:[%s156 + $0x4f0] sm:$0xff]
        %v2862 = vld [vmem:[%s156 + $0x4f8] sm:$0xff]
        %v2863 = vld [vmem:[%s156 + $0x5b0] sm:$0xff]
        %v2864 = vld [vmem:[%s156 + $0x5b8] sm:$0xff]
        %v2865 = vld [vmem:[%s156 + $0x670] sm:$0xff]
        %v2866 = vld [vmem:[%s156 + $0x678] sm:$0xff]
        %v2867 = vld [vmem:[%s156 + $0x730] sm:$0xff]
        %v2868 = vld [vmem:[%s156 + $0x738] sm:$0xff]
        %v2869 = vld [vmem:[%s156 + $0x7f0] sm:$0xff]
        %v2870 = vld [vmem:[%s156 + $0x7f8] sm:$0xff]
        %v2871 = vld [vmem:[%s156 + $0x8b0] sm:$0xff]
        %v2872 = vld [vmem:[%s156 + $0x8b8] sm:$0xff]
        %v2873 = vld [vmem:[%s156 + $0x970] sm:$0xff]
        %v2874 = vld [vmem:[%s156 + $0x978] sm:$0xff]
        %v2875 = vld [vmem:[%s156 + $0xa30] sm:$0xff]
        %v2876 = vld [vmem:[%s156 + $0xa38] sm:$0xff]
        %v2877 = vld [vmem:[%s156 + $0xaf0] sm:$0xff]
        %v2878 = vld [vmem:[%s156 + $0xaf8] sm:$0xff]
        %v2879 = vld [vmem:[%s156 + $0xbb0] sm:$0xff]
        %v2880 = vld [vmem:[%s156 + $0xbb8] sm:$0xff]
        %v2881 = vld [vmem:[%s156 + $0xc70] sm:$0xff]
        %v2882 = vld [vmem:[%s156 + $0xc78] sm:$0xff]
        %v2883 = vld [vmem:[%s156 + $0xd30] sm:$0xff]
        %v2884 = vld [vmem:[%s156 + $0xd38] sm:$0xff]
        %v2885 = vld [vmem:[%s156 + $0xdf0] sm:$0xff]
        %v2886 = vld [vmem:[%s156 + $0xdf8] sm:$0xff]
        %v2887 = vld [vmem:[%s156 + $0xeb0] sm:$0xff]
        %v2888 = vld [vmem:[%s156 + $0xeb8] sm:$0xff]
        %v2889 = vld [vmem:[%s156 + $0xf70] sm:$0xff]
        %v2890 = vld [vmem:[%s156 + $0xf78] sm:$0xff]
        %v2891 = vld [vmem:[%s156 + $0x1030] sm:$0xff]
        %v2892 = vld [vmem:[%s156 + $0x1038] sm:$0xff]
        %v2893 = vld [vmem:[%s156 + $0x10f0] sm:$0xff]
        %v2894 = vld [vmem:[%s156 + $0x10f8] sm:$0xff]
        %v2895 = vld [vmem:[%s156 + $0x11b0] sm:$0xff]
        %v2896 = vld [vmem:[%s156 + $0x11b8] sm:$0xff]
        %v2897 = vld [vmem:[%s156 + $0x1270] sm:$0xff]
        %v2898 = vld [vmem:[%s156 + $0x1278] sm:$0xff]
        %v2899 = vld [vmem:[%s156 + $0x1330] sm:$0xff]
        %v2900 = vld [vmem:[%s156 + $0x1338] sm:$0xff]
        %v2901 = vld [vmem:[%s156 + $0x13f0] sm:$0xff]
        %v2902 = vld [vmem:[%s156 + $0x13f8] sm:$0xff]
        %v2903 = vld [vmem:[%s156 + $0x14b0] sm:$0xff]
        %v2904 = vld [vmem:[%s156 + $0x14b8] sm:$0xff]
        %v2905 = vld [vmem:[%s156 + $0x1570] sm:$0xff]
        %v2906 = vld [vmem:[%s156 + $0x1578] sm:$0xff]
        %v2907 = vld [vmem:[%s156 + $0x1630] sm:$0xff]
        %v2908 = vld [vmem:[%s156 + $0x1638] sm:$0xff]
        %v2909 = vld [vmem:[%s156 + $0x16f0] sm:$0xff]
        %v2910 = vld [vmem:[%s156 + $0x16f8] sm:$0xff]
        %v2911 = vld [vmem:[%s156 + $0x17b0] sm:$0xff]
        %v2912 = vld [vmem:[%s156 + $0x17b8] sm:$0xff]
        %v2913 = vld [vmem:[%s156 + $0x1870] sm:$0xff]
        %v2914 = vld [vmem:[%s156 + $0x1878] sm:$0xff]
        %v2915 = vld [vmem:[%s156 + $0x1930] sm:$0xff]
        %v2916 = vld [vmem:[%s156 + $0x1938] sm:$0xff]
        %v2917 = vld [vmem:[%s156 + $0x19f0] sm:$0xff]
        %v2918 = vld [vmem:[%s156 + $0x19f8] sm:$0xff]
        %v2919 = vld [vmem:[%s156 + $0x1ab0] sm:$0xff]
        %v2920 = vld [vmem:[%s156 + $0x1ab8] sm:$0xff]
        %v2921 = vld [vmem:[%s156 + $0x1b70] sm:$0xff]
        %v2922 = vld [vmem:[%s156 + $0x1b78] sm:$0xff]
        %v2923 = vld [vmem:[%s156 + $0x1c30] sm:$0xff]
        %v2924 = vld [vmem:[%s156 + $0x1c38] sm:$0xff]
        %v2925 = vld [vmem:[%s156 + $0x1cf0] sm:$0xff]
        %v2926 = vld [vmem:[%s156 + $0x1cf8] sm:$0xff]
        %v2927 = vld [vmem:[%s156 + $0x1db0] sm:$0xff]
        %v2928 = vld [vmem:[%s156 + $0x1db8] sm:$0xff]
        %v2929 = vld [vmem:[%s156 + $0x1e70] sm:$0xff]
        %v2930 = vld [vmem:[%s156 + $0x1e78] sm:$0xff]
        %v2931 = vld [vmem:[%s156 + $0x1f30] sm:$0xff]
        %v2932 = vld [vmem:[%s156 + $0x1f38] sm:$0xff]
        %v2933 = vld [vmem:[%s156 + $0x1ff0] sm:$0xff]
        %v2934 = vld [vmem:[%s156 + $0x1ff8] sm:$0xff]
        %v2935 = vld [vmem:[%s156 + $0x20b0] sm:$0xff]
        %v2936 = vld [vmem:[%s156 + $0x20b8] sm:$0xff]
        %v2937 = vld [vmem:[%s156 + $0x2170] sm:$0xff]
        %v2938 = vld [vmem:[%s156 + $0x2178] sm:$0xff]
        %v2939 = vld [vmem:[%s156 + $0x2230] sm:$0xff]
        %v2940 = vld [vmem:[%s156 + $0x2238] sm:$0xff]
        %v2941 = vld [vmem:[%s156 + $0x22f0] sm:$0xff]
        %v2942 = vld [vmem:[%s156 + $0x22f8] sm:$0xff]
        %v2943 = vld [vmem:[%s156 + $0x23b0] sm:$0xff]
        %v2944 = vld [vmem:[%s156 + $0x23b8] sm:$0xff]
        %v2945 = vld [vmem:[%s156 + $0x2470] sm:$0xff]
        %v2946 = vld [vmem:[%s156 + $0x2478] sm:$0xff]
        %v2947 = vld [vmem:[%s156 + $0x2530] sm:$0xff]
        %v2948 = vld [vmem:[%s156 + $0x2538] sm:$0xff]
        %v2949 = vld [vmem:[%s156 + $0x25f0] sm:$0xff]
        %v2950 = vld [vmem:[%s156 + $0x25f8] sm:$0xff]
        %v2951 = vld [vmem:[%s156 + $0x26b0] sm:$0xff]
        %v2952 = vld [vmem:[%s156 + $0x26b8] sm:$0xff]
        %v2953 = vld [vmem:[%s156 + $0x2770] sm:$0xff]
        %v2954 = vld [vmem:[%s156 + $0x2778] sm:$0xff]
        %v2955 = vld [vmem:[%s156 + $0x2830] sm:$0xff]
        %v2956 = vld [vmem:[%s156 + $0x2838] sm:$0xff]
        %v2957 = vld [vmem:[%s156 + $0x28f0] sm:$0xff]
        %v2958 = vld [vmem:[%s156 + $0x28f8] sm:$0xff]
        %v2959 = vld [vmem:[%s156 + $0x29b0] sm:$0xff]
        %v2960 = vld [vmem:[%s156 + $0x29b8] sm:$0xff]
        %v2961 = vld [vmem:[%s156 + $0x2a70] sm:$0xff]
        %v2962 = vld [vmem:[%s156 + $0x2a78] sm:$0xff]
        %v2963 = vld [vmem:[%s156 + $0x2b30] sm:$0xff]
        %v2964 = vld [vmem:[%s156 + $0x2b38] sm:$0xff]
        %v2965 = vld [vmem:[%s156 + $0x2bf0] sm:$0xff]
        %v2966 = vld [vmem:[%s156 + $0x2bf8] sm:$0xff]
        %v2967 = vld [vmem:[%s156 + $0x2cb0] sm:$0xff]
        %v2968 = vld [vmem:[%s156 + $0x2cb8] sm:$0xff]
        %v2969 = vld [vmem:[%s156 + $0x2d70] sm:$0xff]
        %v2970 = vld [vmem:[%s156 + $0x2d78] sm:$0xff]
        %v2971 = vld [vmem:[%s156 + $0x2e30] sm:$0xff]
        %v2972 = vld [vmem:[%s156 + $0x2e38] sm:$0xff]
        %v2973 = vld [vmem:[%s156 + $0x2ef0] sm:$0xff]
        %v2974 = vld [vmem:[%s156 + $0x2ef8] sm:$0xff]
        %v2975 = vld [vmem:[%s156 + $0x2fb0] sm:$0xff]
        %v2976 = vld [vmem:[%s156 + $0x2fb8] sm:$0xff]
        %v2977 = vld [vmem:[%s156 + $0x3070] sm:$0xff]
        %v2978 = vld [vmem:[%s156 + $0x3078] sm:$0xff]
        %v2979 = vld [vmem:[%s156 + $0x3130] sm:$0xff]
        %v2980 = vld [vmem:[%s156 + $0x3138] sm:$0xff]
        %v2981 = vstv %s2848
        %v2982 = vmul.f32 %v2981, %v2849
        %v2983 = vmul.f32 %v2981, %v2850
        %v2984 = vmul.f32 %v2981, %v2851
        %v2985 = vmul.f32 %v2981, %v2852
        %v2986 = vmul.f32 %v2981, %v2853
        %v2987 = vmul.f32 %v2981, %v2854
        %v2988 = vmul.f32 %v2981, %v2855
        %v2989 = vmul.f32 %v2981, %v2856
        %v2990 = vmul.f32 %v2981, %v2857
        %v2991 = vmul.f32 %v2981, %v2858
        %v2992 = vmul.f32 %v2981, %v2859
        %v2993 = vmul.f32 %v2981, %v2860
        %v2994 = vmul.f32 %v2981, %v2861
        %v2995 = vmul.f32 %v2981, %v2862
        %v2996 = vmul.f32 %v2981, %v2863
        %v2997 = vmul.f32 %v2981, %v2864
        %v2998 = vmul.f32 %v2981, %v2865
        %v2999 = vmul.f32 %v2981, %v2866
        %v3000 = vmul.f32 %v2981, %v2867
        %v3001 = vmul.f32 %v2981, %v2868
        %v3002 = vmul.f32 %v2981, %v2869
        %v3003 = vmul.f32 %v2981, %v2870
        %v3004 = vmul.f32 %v2981, %v2871
        %v3005 = vmul.f32 %v2981, %v2872
        %v3006 = vmul.f32 %v2981, %v2873
        %v3007 = vmul.f32 %v2981, %v2874
        %v3008 = vmul.f32 %v2981, %v2875
        %v3009 = vmul.f32 %v2981, %v2876
        %v3010 = vmul.f32 %v2981, %v2877
        %v3011 = vmul.f32 %v2981, %v2878
        %v3012 = vmul.f32 %v2981, %v2879
        %v3013 = vmul.f32 %v2981, %v2880
        %v3014 = vmul.f32 %v2981, %v2881
        %v3015 = vmul.f32 %v2981, %v2882
        %v3016 = vmul.f32 %v2981, %v2883
        %v3017 = vmul.f32 %v2981, %v2884
        %v3018 = vmul.f32 %v2981, %v2885
        %v3019 = vmul.f32 %v2981, %v2886
        %v3020 = vmul.f32 %v2981, %v2887
        %v3021 = vmul.f32 %v2981, %v2888
        %v3022 = vmul.f32 %v2981, %v2889
        %v3023 = vmul.f32 %v2981, %v2890
        %v3024 = vmul.f32 %v2981, %v2891
        %v3025 = vmul.f32 %v2981, %v2892
        %v3026 = vmul.f32 %v2981, %v2893
        %v3027 = vmul.f32 %v2981, %v2894
        %v3028 = vmul.f32 %v2981, %v2895
        %v3029 = vmul.f32 %v2981, %v2896
        %v3030 = vmul.f32 %v2981, %v2897
        %v3031 = vmul.f32 %v2981, %v2898
        %v3032 = vmul.f32 %v2981, %v2899
        %v3033 = vmul.f32 %v2981, %v2900
        %v3034 = vmul.f32 %v2981, %v2901
        %v3035 = vmul.f32 %v2981, %v2902
        %v3036 = vmul.f32 %v2981, %v2903
        %v3037 = vmul.f32 %v2981, %v2904
        %v3038 = vmul.f32 %v2981, %v2905
        %v3039 = vmul.f32 %v2981, %v2906
        %v3040 = vmul.f32 %v2981, %v2907
        %v3041 = vmul.f32 %v2981, %v2908
        %v3042 = vmul.f32 %v2981, %v2909
        %v3043 = vmul.f32 %v2981, %v2910
        %v3044 = vmul.f32 %v2981, %v2911
        %v3045 = vmul.f32 %v2981, %v2912
        %v3046 = vmul.f32 %v2981, %v2913
        %v3047 = vmul.f32 %v2981, %v2914
        %v3048 = vmul.f32 %v2981, %v2915
        %v3049 = vmul.f32 %v2981, %v2916
        %v3050 = vmul.f32 %v2981, %v2917
        %v3051 = vmul.f32 %v2981, %v2918
        %v3052 = vmul.f32 %v2981, %v2919
        %v3053 = vmul.f32 %v2981, %v2920
        %v3054 = vmul.f32 %v2981, %v2921
        %v3055 = vmul.f32 %v2981, %v2922
        %v3056 = vmul.f32 %v2981, %v2923
        %v3057 = vmul.f32 %v2981, %v2924
        %v3058 = vmul.f32 %v2981, %v2925
        %v3059 = vmul.f32 %v2981, %v2926
        %v3060 = vmul.f32 %v2981, %v2927
        %v3061 = vmul.f32 %v2981, %v2928
        %v3062 = vmul.f32 %v2981, %v2929
        %v3063 = vmul.f32 %v2981, %v2930
        %v3064 = vmul.f32 %v2981, %v2931
        %v3065 = vmul.f32 %v2981, %v2932
        %v3066 = vmul.f32 %v2981, %v2933
        %v3067 = vmul.f32 %v2981, %v2934
        %v3068 = vmul.f32 %v2981, %v2935
        %v3069 = vmul.f32 %v2981, %v2936
        %v3070 = vmul.f32 %v2981, %v2937
        %v3071 = vmul.f32 %v2981, %v2938
        %v3072 = vmul.f32 %v2981, %v2939
        %v3073 = vmul.f32 %v2981, %v2940
        %v3074 = vmul.f32 %v2981, %v2941
        %v3075 = vmul.f32 %v2981, %v2942
        %v3076 = vmul.f32 %v2981, %v2943
        %v3077 = vmul.f32 %v2981, %v2944
        %v3078 = vmul.f32 %v2981, %v2945
        %v3079 = vmul.f32 %v2981, %v2946
        %v3080 = vmul.f32 %v2981, %v2947
        %v3081 = vmul.f32 %v2981, %v2948
        %v3082 = vmul.f32 %v2981, %v2949
        %v3083 = vmul.f32 %v2981, %v2950
        %v3084 = vmul.f32 %v2981, %v2951
        %v3085 = vmul.f32 %v2981, %v2952
        %v3086 = vmul.f32 %v2981, %v2953
        %v3087 = vmul.f32 %v2981, %v2954
        %v3088 = vmul.f32 %v2981, %v2955
        %v3089 = vmul.f32 %v2981, %v2956
        %v3090 = vmul.f32 %v2981, %v2957
        %v3091 = vmul.f32 %v2981, %v2958
        %v3092 = vmul.f32 %v2981, %v2959
        %v3093 = vmul.f32 %v2981, %v2960
        %v3094 = vmul.f32 %v2981, %v2961
        %v3095 = vmul.f32 %v2981, %v2962
        %v3096 = vmul.f32 %v2981, %v2963
        %v3097 = vmul.f32 %v2981, %v2964
        %v3098 = vmul.f32 %v2981, %v2965
        %v3099 = vmul.f32 %v2981, %v2966
        %v3100 = vmul.f32 %v2981, %v2967
        %v3101 = vmul.f32 %v2981, %v2968
        %v3102 = vmul.f32 %v2981, %v2969
        %v3103 = vmul.f32 %v2981, %v2970
        %v3104 = vmul.f32 %v2981, %v2971
        %v3105 = vmul.f32 %v2981, %v2972
        %v3106 = vmul.f32 %v2981, %v2973
        %v3107 = vmul.f32 %v2981, %v2974
        %v3108 = vmul.f32 %v2981, %v2975
        %v3109 = vmul.f32 %v2981, %v2976
        %v3110 = vmul.f32 %v2981, %v2977
        %v3111 = vmul.f32 %v2981, %v2978
        %v3112 = vmul.f32 %v2981, %v2979
        %v3113 = vmul.f32 %v2981, %v2980
        %v3114 = vadd.f32 %v2716, %v2982
        %v3115 = vadd.f32 %v2717, %v2983
        %v3116 = vadd.f32 %v2718, %v2984
        %v3117 = vadd.f32 %v2719, %v2985
        %v3118 = vadd.f32 %v2720, %v2986
        %v3119 = vadd.f32 %v2721, %v2987
        %v3120 = vadd.f32 %v2722, %v2988
        %v3121 = vadd.f32 %v2723, %v2989
        %v3122 = vadd.f32 %v2724, %v2990
        %v3123 = vadd.f32 %v2725, %v2991
        %v3124 = vadd.f32 %v2726, %v2992
        %v3125 = vadd.f32 %v2727, %v2993
        %v3126 = vadd.f32 %v2728, %v2994
        %v3127 = vadd.f32 %v2729, %v2995
        %v3128 = vadd.f32 %v2730, %v2996
        %v3129 = vadd.f32 %v2731, %v2997
        %v3130 = vadd.f32 %v2732, %v2998
        %v3131 = vadd.f32 %v2733, %v2999
        %v3132 = vadd.f32 %v2734, %v3000
        %v3133 = vadd.f32 %v2735, %v3001
        %v3134 = vadd.f32 %v2736, %v3002
        %v3135 = vadd.f32 %v2737, %v3003
        %v3136 = vadd.f32 %v2738, %v3004
        %v3137 = vadd.f32 %v2739, %v3005
        %v3138 = vadd.f32 %v2740, %v3006
        %v3139 = vadd.f32 %v2741, %v3007
        %v3140 = vadd.f32 %v2742, %v3008
        %v3141 = vadd.f32 %v2743, %v3009
        %v3142 = vadd.f32 %v2744, %v3010
        %v3143 = vadd.f32 %v2745, %v3011
        %v3144 = vadd.f32 %v2746, %v3012
        %v3145 = vadd.f32 %v2747, %v3013
        %v3146 = vadd.f32 %v2748, %v3014
        %v3147 = vadd.f32 %v2749, %v3015
        %v3148 = vadd.f32 %v2750, %v3016
        %v3149 = vadd.f32 %v2751, %v3017
        %v3150 = vadd.f32 %v2752, %v3018
        %v3151 = vadd.f32 %v2753, %v3019
        %v3152 = vadd.f32 %v2754, %v3020
        %v3153 = vadd.f32 %v2755, %v3021
        %v3154 = vadd.f32 %v2756, %v3022
        %v3155 = vadd.f32 %v2757, %v3023
        %v3156 = vadd.f32 %v2758, %v3024
        %v3157 = vadd.f32 %v2759, %v3025
        %v3158 = vadd.f32 %v2760, %v3026
        %v3159 = vadd.f32 %v2761, %v3027
        %v3160 = vadd.f32 %v2762, %v3028
        %v3161 = vadd.f32 %v2763, %v3029
        %v3162 = vadd.f32 %v2764, %v3030
        %v3163 = vadd.f32 %v2765, %v3031
        %v3164 = vadd.f32 %v2766, %v3032
        %v3165 = vadd.f32 %v2767, %v3033
        %v3166 = vadd.f32 %v2768, %v3034
        %v3167 = vadd.f32 %v2769, %v3035
        %v3168 = vadd.f32 %v2770, %v3036
        %v3169 = vadd.f32 %v2771, %v3037
        %v3170 = vadd.f32 %v2772, %v3038
        %v3171 = vadd.f32 %v2773, %v3039
        %v3172 = vadd.f32 %v2774, %v3040
        %v3173 = vadd.f32 %v2775, %v3041
        %v3174 = vadd.f32 %v2776, %v3042
        %v3175 = vadd.f32 %v2777, %v3043
        %v3176 = vadd.f32 %v2778, %v3044
        %v3177 = vadd.f32 %v2779, %v3045
        %v3178 = vadd.f32 %v2780, %v3046
        %v3179 = vadd.f32 %v2781, %v3047
        %v3180 = vadd.f32 %v2782, %v3048
        %v3181 = vadd.f32 %v2783, %v3049
        %v3182 = vadd.f32 %v2784, %v3050
        %v3183 = vadd.f32 %v2785, %v3051
        %v3184 = vadd.f32 %v2786, %v3052
        %v3185 = vadd.f32 %v2787, %v3053
        %v3186 = vadd.f32 %v2788, %v3054
        %v3187 = vadd.f32 %v2789, %v3055
        %v3188 = vadd.f32 %v2790, %v3056
        %v3189 = vadd.f32 %v2791, %v3057
        %v3190 = vadd.f32 %v2792, %v3058
        %v3191 = vadd.f32 %v2793, %v3059
        %v3192 = vadd.f32 %v2794, %v3060
        %v3193 = vadd.f32 %v2795, %v3061
        %v3194 = vadd.f32 %v2796, %v3062
        %v3195 = vadd.f32 %v2797, %v3063
        %v3196 = vadd.f32 %v2798, %v3064
        %v3197 = vadd.f32 %v2799, %v3065
        %v3198 = vadd.f32 %v2800, %v3066
        %v3199 = vadd.f32 %v2801, %v3067
        %v3200 = vadd.f32 %v2802, %v3068
        %v3201 = vadd.f32 %v2803, %v3069
        %v3202 = vadd.f32 %v2804, %v3070
        %v3203 = vadd.f32 %v2805, %v3071
        %v3204 = vadd.f32 %v2806, %v3072
        %v3205 = vadd.f32 %v2807, %v3073
        %v3206 = vadd.f32 %v2808, %v3074
        %v3207 = vadd.f32 %v2809, %v3075
        %v3208 = vadd.f32 %v2810, %v3076
        %v3209 = vadd.f32 %v2811, %v3077
        %v3210 = vadd.f32 %v2812, %v3078
        %v3211 = vadd.f32 %v2813, %v3079
        %v3212 = vadd.f32 %v2814, %v3080
        %v3213 = vadd.f32 %v2815, %v3081
        %v3214 = vadd.f32 %v2816, %v3082
        %v3215 = vadd.f32 %v2817, %v3083
        %v3216 = vadd.f32 %v2818, %v3084
        %v3217 = vadd.f32 %v2819, %v3085
        %v3218 = vadd.f32 %v2820, %v3086
        %v3219 = vadd.f32 %v2821, %v3087
        %v3220 = vadd.f32 %v2822, %v3088
        %v3221 = vadd.f32 %v2823, %v3089
        %v3222 = vadd.f32 %v2824, %v3090
        %v3223 = vadd.f32 %v2825, %v3091
        %v3224 = vadd.f32 %v2826, %v3092
        %v3225 = vadd.f32 %v2827, %v3093
        %v3226 = vadd.f32 %v2828, %v3094
        %v3227 = vadd.f32 %v2829, %v3095
        %v3228 = vadd.f32 %v2830, %v3096
        %v3229 = vadd.f32 %v2831, %v3097
        %v3230 = vadd.f32 %v2832, %v3098
        %v3231 = vadd.f32 %v2833, %v3099
        %v3232 = vadd.f32 %v2834, %v3100
        %v3233 = vadd.f32 %v2835, %v3101
        %v3234 = vadd.f32 %v2836, %v3102
        %v3235 = vadd.f32 %v2837, %v3103
        %v3236 = vadd.f32 %v2838, %v3104
        %v3237 = vadd.f32 %v2839, %v3105
        %v3238 = vadd.f32 %v2840, %v3106
        %v3239 = vadd.f32 %v2841, %v3107
        %v3240 = vadd.f32 %v2842, %v3108
        %v3241 = vadd.f32 %v2843, %v3109
        %v3242 = vadd.f32 %v2844, %v3110
        %v3243 = vadd.f32 %v2845, %v3111
        %v3244 = vadd.f32 %v2846, %v3112
        %v3245 = vadd.f32 %v2847, %v3113
        %s3246 = sld [smem:[#allocation6 + $0x8]]
        %v3247 = vld [vmem:[%s156 + $0x80] sm:$0xff]
        %v3248 = vld [vmem:[%s156 + $0x88] sm:$0xff]
        %v3249 = vld [vmem:[%s156 + $0x140] sm:$0xff]
        %v3250 = vld [vmem:[%s156 + $0x148] sm:$0xff]
        %v3251 = vld [vmem:[%s156 + $0x200] sm:$0xff]
        %v3252 = vld [vmem:[%s156 + $0x208] sm:$0xff]
        %v3253 = vld [vmem:[%s156 + $0x2c0] sm:$0xff]
        %v3254 = vld [vmem:[%s156 + $0x2c8] sm:$0xff]
        %v3255 = vld [vmem:[%s156 + $0x380] sm:$0xff]
        %v3256 = vld [vmem:[%s156 + $0x388] sm:$0xff]
        %v3257 = vld [vmem:[%s156 + $0x440] sm:$0xff]
        %v3258 = vld [vmem:[%s156 + $0x448] sm:$0xff]
        %v3259 = vld [vmem:[%s156 + $0x500] sm:$0xff]
        %v3260 = vld [vmem:[%s156 + $0x508] sm:$0xff]
        %v3261 = vld [vmem:[%s156 + $0x5c0] sm:$0xff]
        %v3262 = vld [vmem:[%s156 + $0x5c8] sm:$0xff]
        %v3263 = vld [vmem:[%s156 + $0x680] sm:$0xff]
        %v3264 = vld [vmem:[%s156 + $0x688] sm:$0xff]
        %v3265 = vld [vmem:[%s156 + $0x740] sm:$0xff]
        %v3266 = vld [vmem:[%s156 + $0x748] sm:$0xff]
        %v3267 = vld [vmem:[%s156 + $0x800] sm:$0xff]
        %v3268 = vld [vmem:[%s156 + $0x808] sm:$0xff]
        %v3269 = vld [vmem:[%s156 + $0x8c0] sm:$0xff]
        %v3270 = vld [vmem:[%s156 + $0x8c8] sm:$0xff]
        %v3271 = vld [vmem:[%s156 + $0x980] sm:$0xff]
        %v3272 = vld [vmem:[%s156 + $0x988] sm:$0xff]
        %v3273 = vld [vmem:[%s156 + $0xa40] sm:$0xff]
        %v3274 = vld [vmem:[%s156 + $0xa48] sm:$0xff]
        %v3275 = vld [vmem:[%s156 + $0xb00] sm:$0xff]
        %v3276 = vld [vmem:[%s156 + $0xb08] sm:$0xff]
        %v3277 = vld [vmem:[%s156 + $0xbc0] sm:$0xff]
        %v3278 = vld [vmem:[%s156 + $0xbc8] sm:$0xff]
        %v3279 = vld [vmem:[%s156 + $0xc80] sm:$0xff]
        %v3280 = vld [vmem:[%s156 + $0xc88] sm:$0xff]
        %v3281 = vld [vmem:[%s156 + $0xd40] sm:$0xff]
        %v3282 = vld [vmem:[%s156 + $0xd48] sm:$0xff]
        %v3283 = vld [vmem:[%s156 + $0xe00] sm:$0xff]
        %v3284 = vld [vmem:[%s156 + $0xe08] sm:$0xff]
        %v3285 = vld [vmem:[%s156 + $0xec0] sm:$0xff]
        %v3286 = vld [vmem:[%s156 + $0xec8] sm:$0xff]
        %v3287 = vld [vmem:[%s156 + $0xf80] sm:$0xff]
        %v3288 = vld [vmem:[%s156 + $0xf88] sm:$0xff]
        %v3289 = vld [vmem:[%s156 + $0x1040] sm:$0xff]
        %v3290 = vld [vmem:[%s156 + $0x1048] sm:$0xff]
        %v3291 = vld [vmem:[%s156 + $0x1100] sm:$0xff]
        %v3292 = vld [vmem:[%s156 + $0x1108] sm:$0xff]
        %v3293 = vld [vmem:[%s156 + $0x11c0] sm:$0xff]
        %v3294 = vld [vmem:[%s156 + $0x11c8] sm:$0xff]
        %v3295 = vld [vmem:[%s156 + $0x1280] sm:$0xff]
        %v3296 = vld [vmem:[%s156 + $0x1288] sm:$0xff]
        %v3297 = vld [vmem:[%s156 + $0x1340] sm:$0xff]
        %v3298 = vld [vmem:[%s156 + $0x1348] sm:$0xff]
        %v3299 = vld [vmem:[%s156 + $0x1400] sm:$0xff]
        %v3300 = vld [vmem:[%s156 + $0x1408] sm:$0xff]
        %v3301 = vld [vmem:[%s156 + $0x14c0] sm:$0xff]
        %v3302 = vld [vmem:[%s156 + $0x14c8] sm:$0xff]
        %v3303 = vld [vmem:[%s156 + $0x1580] sm:$0xff]
        %v3304 = vld [vmem:[%s156 + $0x1588] sm:$0xff]
        %v3305 = vld [vmem:[%s156 + $0x1640] sm:$0xff]
        %v3306 = vld [vmem:[%s156 + $0x1648] sm:$0xff]
        %v3307 = vld [vmem:[%s156 + $0x1700] sm:$0xff]
        %v3308 = vld [vmem:[%s156 + $0x1708] sm:$0xff]
        %v3309 = vld [vmem:[%s156 + $0x17c0] sm:$0xff]
        %v3310 = vld [vmem:[%s156 + $0x17c8] sm:$0xff]
        %v3311 = vld [vmem:[%s156 + $0x1880] sm:$0xff]
        %v3312 = vld [vmem:[%s156 + $0x1888] sm:$0xff]
        %v3313 = vld [vmem:[%s156 + $0x1940] sm:$0xff]
        %v3314 = vld [vmem:[%s156 + $0x1948] sm:$0xff]
        %v3315 = vld [vmem:[%s156 + $0x1a00] sm:$0xff]
        %v3316 = vld [vmem:[%s156 + $0x1a08] sm:$0xff]
        %v3317 = vld [vmem:[%s156 + $0x1ac0] sm:$0xff]
        %v3318 = vld [vmem:[%s156 + $0x1ac8] sm:$0xff]
        %v3319 = vld [vmem:[%s156 + $0x1b80] sm:$0xff]
        %v3320 = vld [vmem:[%s156 + $0x1b88] sm:$0xff]
        %v3321 = vld [vmem:[%s156 + $0x1c40] sm:$0xff]
        %v3322 = vld [vmem:[%s156 + $0x1c48] sm:$0xff]
        %v3323 = vld [vmem:[%s156 + $0x1d00] sm:$0xff]
        %v3324 = vld [vmem:[%s156 + $0x1d08] sm:$0xff]
        %v3325 = vld [vmem:[%s156 + $0x1dc0] sm:$0xff]
        %v3326 = vld [vmem:[%s156 + $0x1dc8] sm:$0xff]
        %v3327 = vld [vmem:[%s156 + $0x1e80] sm:$0xff]
        %v3328 = vld [vmem:[%s156 + $0x1e88] sm:$0xff]
        %v3329 = vld [vmem:[%s156 + $0x1f40] sm:$0xff]
        %v3330 = vld [vmem:[%s156 + $0x1f48] sm:$0xff]
        %v3331 = vld [vmem:[%s156 + $0x2000] sm:$0xff]
        %v3332 = vld [vmem:[%s156 + $0x2008] sm:$0xff]
        %v3333 = vld [vmem:[%s156 + $0x20c0] sm:$0xff]
        %v3334 = vld [vmem:[%s156 + $0x20c8] sm:$0xff]
        %v3335 = vld [vmem:[%s156 + $0x2180] sm:$0xff]
        %v3336 = vld [vmem:[%s156 + $0x2188] sm:$0xff]
        %v3337 = vld [vmem:[%s156 + $0x2240] sm:$0xff]
        %v3338 = vld [vmem:[%s156 + $0x2248] sm:$0xff]
        %v3339 = vld [vmem:[%s156 + $0x2300] sm:$0xff]
        %v3340 = vld [vmem:[%s156 + $0x2308] sm:$0xff]
        %v3341 = vld [vmem:[%s156 + $0x23c0] sm:$0xff]
        %v3342 = vld [vmem:[%s156 + $0x23c8] sm:$0xff]
        %v3343 = vld [vmem:[%s156 + $0x2480] sm:$0xff]
        %v3344 = vld [vmem:[%s156 + $0x2488] sm:$0xff]
        %v3345 = vld [vmem:[%s156 + $0x2540] sm:$0xff]
        %v3346 = vld [vmem:[%s156 + $0x2548] sm:$0xff]
        %v3347 = vld [vmem:[%s156 + $0x2600] sm:$0xff]
        %v3348 = vld [vmem:[%s156 + $0x2608] sm:$0xff]
        %v3349 = vld [vmem:[%s156 + $0x26c0] sm:$0xff]
        %v3350 = vld [vmem:[%s156 + $0x26c8] sm:$0xff]
        %v3351 = vld [vmem:[%s156 + $0x2780] sm:$0xff]
        %v3352 = vld [vmem:[%s156 + $0x2788] sm:$0xff]
        %v3353 = vld [vmem:[%s156 + $0x2840] sm:$0xff]
        %v3354 = vld [vmem:[%s156 + $0x2848] sm:$0xff]
        %v3355 = vld [vmem:[%s156 + $0x2900] sm:$0xff]
        %v3356 = vld [vmem:[%s156 + $0x2908] sm:$0xff]
        %v3357 = vld [vmem:[%s156 + $0x29c0] sm:$0xff]
        %v3358 = vld [vmem:[%s156 + $0x29c8] sm:$0xff]
        %v3359 = vld [vmem:[%s156 + $0x2a80] sm:$0xff]
        %v3360 = vld [vmem:[%s156 + $0x2a88] sm:$0xff]
        %v3361 = vld [vmem:[%s156 + $0x2b40] sm:$0xff]
        %v3362 = vld [vmem:[%s156 + $0x2b48] sm:$0xff]
        %v3363 = vld [vmem:[%s156 + $0x2c00] sm:$0xff]
        %v3364 = vld [vmem:[%s156 + $0x2c08] sm:$0xff]
        %v3365 = vld [vmem:[%s156 + $0x2cc0] sm:$0xff]
        %v3366 = vld [vmem:[%s156 + $0x2cc8] sm:$0xff]
        %v3367 = vld [vmem:[%s156 + $0x2d80] sm:$0xff]
        %v3368 = vld [vmem:[%s156 + $0x2d88] sm:$0xff]
        %v3369 = vld [vmem:[%s156 + $0x2e40] sm:$0xff]
        %v3370 = vld [vmem:[%s156 + $0x2e48] sm:$0xff]
        %v3371 = vld [vmem:[%s156 + $0x2f00] sm:$0xff]
        %v3372 = vld [vmem:[%s156 + $0x2f08] sm:$0xff]
        %v3373 = vld [vmem:[%s156 + $0x2fc0] sm:$0xff]
        %v3374 = vld [vmem:[%s156 + $0x2fc8] sm:$0xff]
        %v3375 = vld [vmem:[%s156 + $0x3080] sm:$0xff]
        %v3376 = vld [vmem:[%s156 + $0x3088] sm:$0xff]
        %v3377 = vld [vmem:[%s156 + $0x3140] sm:$0xff]
        %v3378 = vld [vmem:[%s156 + $0x3148] sm:$0xff]
        %v3379 = vstv %s3246
        %v3380 = vmul.f32 %v3379, %v3247
        %v3381 = vmul.f32 %v3379, %v3248
        %v3382 = vmul.f32 %v3379, %v3249
        %v3383 = vmul.f32 %v3379, %v3250
        %v3384 = vmul.f32 %v3379, %v3251
        %v3385 = vmul.f32 %v3379, %v3252
        %v3386 = vmul.f32 %v3379, %v3253
        %v3387 = vmul.f32 %v3379, %v3254
        %v3388 = vmul.f32 %v3379, %v3255
        %v3389 = vmul.f32 %v3379, %v3256
        %v3390 = vmul.f32 %v3379, %v3257
        %v3391 = vmul.f32 %v3379, %v3258
        %v3392 = vmul.f32 %v3379, %v3259
        %v3393 = vmul.f32 %v3379, %v3260
        %v3394 = vmul.f32 %v3379, %v3261
        %v3395 = vmul.f32 %v3379, %v3262
        %v3396 = vmul.f32 %v3379, %v3263
        %v3397 = vmul.f32 %v3379, %v3264
        %v3398 = vmul.f32 %v3379, %v3265
        %v3399 = vmul.f32 %v3379, %v3266
        %v3400 = vmul.f32 %v3379, %v3267
        %v3401 = vmul.f32 %v3379, %v3268
        %v3402 = vmul.f32 %v3379, %v3269
        %v3403 = vmul.f32 %v3379, %v3270
        %v3404 = vmul.f32 %v3379, %v3271
        %v3405 = vmul.f32 %v3379, %v3272
        %v3406 = vmul.f32 %v3379, %v3273
        %v3407 = vmul.f32 %v3379, %v3274
        %v3408 = vmul.f32 %v3379, %v3275
        %v3409 = vmul.f32 %v3379, %v3276
        %v3410 = vmul.f32 %v3379, %v3277
        %v3411 = vmul.f32 %v3379, %v3278
        %v3412 = vmul.f32 %v3379, %v3279
        %v3413 = vmul.f32 %v3379, %v3280
        %v3414 = vmul.f32 %v3379, %v3281
        %v3415 = vmul.f32 %v3379, %v3282
        %v3416 = vmul.f32 %v3379, %v3283
        %v3417 = vmul.f32 %v3379, %v3284
        %v3418 = vmul.f32 %v3379, %v3285
        %v3419 = vmul.f32 %v3379, %v3286
        %v3420 = vmul.f32 %v3379, %v3287
        %v3421 = vmul.f32 %v3379, %v3288
        %v3422 = vmul.f32 %v3379, %v3289
        %v3423 = vmul.f32 %v3379, %v3290
        %v3424 = vmul.f32 %v3379, %v3291
        %v3425 = vmul.f32 %v3379, %v3292
        %v3426 = vmul.f32 %v3379, %v3293
        %v3427 = vmul.f32 %v3379, %v3294
        %v3428 = vmul.f32 %v3379, %v3295
        %v3429 = vmul.f32 %v3379, %v3296
        %v3430 = vmul.f32 %v3379, %v3297
        %v3431 = vmul.f32 %v3379, %v3298
        %v3432 = vmul.f32 %v3379, %v3299
        %v3433 = vmul.f32 %v3379, %v3300
        %v3434 = vmul.f32 %v3379, %v3301
        %v3435 = vmul.f32 %v3379, %v3302
        %v3436 = vmul.f32 %v3379, %v3303
        %v3437 = vmul.f32 %v3379, %v3304
        %v3438 = vmul.f32 %v3379, %v3305
        %v3439 = vmul.f32 %v3379, %v3306
        %v3440 = vmul.f32 %v3379, %v3307
        %v3441 = vmul.f32 %v3379, %v3308
        %v3442 = vmul.f32 %v3379, %v3309
        %v3443 = vmul.f32 %v3379, %v3310
        %v3444 = vmul.f32 %v3379, %v3311
        %v3445 = vmul.f32 %v3379, %v3312
        %v3446 = vmul.f32 %v3379, %v3313
        %v3447 = vmul.f32 %v3379, %v3314
        %v3448 = vmul.f32 %v3379, %v3315
        %v3449 = vmul.f32 %v3379, %v3316
        %v3450 = vmul.f32 %v3379, %v3317
        %v3451 = vmul.f32 %v3379, %v3318
        %v3452 = vmul.f32 %v3379, %v3319
        %v3453 = vmul.f32 %v3379, %v3320
        %v3454 = vmul.f32 %v3379, %v3321
        %v3455 = vmul.f32 %v3379, %v3322
        %v3456 = vmul.f32 %v3379, %v3323
        %v3457 = vmul.f32 %v3379, %v3324
        %v3458 = vmul.f32 %v3379, %v3325
        %v3459 = vmul.f32 %v3379, %v3326
        %v3460 = vmul.f32 %v3379, %v3327
        %v3461 = vmul.f32 %v3379, %v3328
        %v3462 = vmul.f32 %v3379, %v3329
        %v3463 = vmul.f32 %v3379, %v3330
        %v3464 = vmul.f32 %v3379, %v3331
        %v3465 = vmul.f32 %v3379, %v3332
        %v3466 = vmul.f32 %v3379, %v3333
        %v3467 = vmul.f32 %v3379, %v3334
        %v3468 = vmul.f32 %v3379, %v3335
        %v3469 = vmul.f32 %v3379, %v3336
        %v3470 = vmul.f32 %v3379, %v3337
        %v3471 = vmul.f32 %v3379, %v3338
        %v3472 = vmul.f32 %v3379, %v3339
        %v3473 = vmul.f32 %v3379, %v3340
        %v3474 = vmul.f32 %v3379, %v3341
        %v3475 = vmul.f32 %v3379, %v3342
        %v3476 = vmul.f32 %v3379, %v3343
        %v3477 = vmul.f32 %v3379, %v3344
        %v3478 = vmul.f32 %v3379, %v3345
        %v3479 = vmul.f32 %v3379, %v3346
        %v3480 = vmul.f32 %v3379, %v3347
        %v3481 = vmul.f32 %v3379, %v3348
        %v3482 = vmul.f32 %v3379, %v3349
        %v3483 = vmul.f32 %v3379, %v3350
        %v3484 = vmul.f32 %v3379, %v3351
        %v3485 = vmul.f32 %v3379, %v3352
        %v3486 = vmul.f32 %v3379, %v3353
        %v3487 = vmul.f32 %v3379, %v3354
        %v3488 = vmul.f32 %v3379, %v3355
        %v3489 = vmul.f32 %v3379, %v3356
        %v3490 = vmul.f32 %v3379, %v3357
        %v3491 = vmul.f32 %v3379, %v3358
        %v3492 = vmul.f32 %v3379, %v3359
        %v3493 = vmul.f32 %v3379, %v3360
        %v3494 = vmul.f32 %v3379, %v3361
        %v3495 = vmul.f32 %v3379, %v3362
        %v3496 = vmul.f32 %v3379, %v3363
        %v3497 = vmul.f32 %v3379, %v3364
        %v3498 = vmul.f32 %v3379, %v3365
        %v3499 = vmul.f32 %v3379, %v3366
        %v3500 = vmul.f32 %v3379, %v3367
        %v3501 = vmul.f32 %v3379, %v3368
        %v3502 = vmul.f32 %v3379, %v3369
        %v3503 = vmul.f32 %v3379, %v3370
        %v3504 = vmul.f32 %v3379, %v3371
        %v3505 = vmul.f32 %v3379, %v3372
        %v3506 = vmul.f32 %v3379, %v3373
        %v3507 = vmul.f32 %v3379, %v3374
        %v3508 = vmul.f32 %v3379, %v3375
        %v3509 = vmul.f32 %v3379, %v3376
        %v3510 = vmul.f32 %v3379, %v3377
        %v3511 = vmul.f32 %v3379, %v3378
        %v3512 = vadd.f32 %v3114, %v3380
        %v3513 = vadd.f32 %v3115, %v3381
        %v3514 = vadd.f32 %v3116, %v3382
        %v3515 = vadd.f32 %v3117, %v3383
        %v3516 = vadd.f32 %v3118, %v3384
        %v3517 = vadd.f32 %v3119, %v3385
        %v3518 = vadd.f32 %v3120, %v3386
        %v3519 = vadd.f32 %v3121, %v3387
        %v3520 = vadd.f32 %v3122, %v3388
        %v3521 = vadd.f32 %v3123, %v3389
        %v3522 = vadd.f32 %v3124, %v3390
        %v3523 = vadd.f32 %v3125, %v3391
        %v3524 = vadd.f32 %v3126, %v3392
        %v3525 = vadd.f32 %v3127, %v3393
        %v3526 = vadd.f32 %v3128, %v3394
        %v3527 = vadd.f32 %v3129, %v3395
        %v3528 = vadd.f32 %v3130, %v3396
        %v3529 = vadd.f32 %v3131, %v3397
        %v3530 = vadd.f32 %v3132, %v3398
        %v3531 = vadd.f32 %v3133, %v3399
        %v3532 = vadd.f32 %v3134, %v3400
        %v3533 = vadd.f32 %v3135, %v3401
        %v3534 = vadd.f32 %v3136, %v3402
        %v3535 = vadd.f32 %v3137, %v3403
        %v3536 = vadd.f32 %v3138, %v3404
        %v3537 = vadd.f32 %v3139, %v3405
        %v3538 = vadd.f32 %v3140, %v3406
        %v3539 = vadd.f32 %v3141, %v3407
        %v3540 = vadd.f32 %v3142, %v3408
        %v3541 = vadd.f32 %v3143, %v3409
        %v3542 = vadd.f32 %v3144, %v3410
        %v3543 = vadd.f32 %v3145, %v3411
        %v3544 = vadd.f32 %v3146, %v3412
        %v3545 = vadd.f32 %v3147, %v3413
        %v3546 = vadd.f32 %v3148, %v3414
        %v3547 = vadd.f32 %v3149, %v3415
        %v3548 = vadd.f32 %v3150, %v3416
        %v3549 = vadd.f32 %v3151, %v3417
        %v3550 = vadd.f32 %v3152, %v3418
        %v3551 = vadd.f32 %v3153, %v3419
        %v3552 = vadd.f32 %v3154, %v3420
        %v3553 = vadd.f32 %v3155, %v3421
        %v3554 = vadd.f32 %v3156, %v3422
        %v3555 = vadd.f32 %v3157, %v3423
        %v3556 = vadd.f32 %v3158, %v3424
        %v3557 = vadd.f32 %v3159, %v3425
        %v3558 = vadd.f32 %v3160, %v3426
        %v3559 = vadd.f32 %v3161, %v3427
        %v3560 = vadd.f32 %v3162, %v3428
        %v3561 = vadd.f32 %v3163, %v3429
        %v3562 = vadd.f32 %v3164, %v3430
        %v3563 = vadd.f32 %v3165, %v3431
        %v3564 = vadd.f32 %v3166, %v3432
        %v3565 = vadd.f32 %v3167, %v3433
        %v3566 = vadd.f32 %v3168, %v3434
        %v3567 = vadd.f32 %v3169, %v3435
        %v3568 = vadd.f32 %v3170, %v3436
        %v3569 = vadd.f32 %v3171, %v3437
        %v3570 = vadd.f32 %v3172, %v3438
        %v3571 = vadd.f32 %v3173, %v3439
        %v3572 = vadd.f32 %v3174, %v3440
        %v3573 = vadd.f32 %v3175, %v3441
        %v3574 = vadd.f32 %v3176, %v3442
        %v3575 = vadd.f32 %v3177, %v3443
        %v3576 = vadd.f32 %v3178, %v3444
        %v3577 = vadd.f32 %v3179, %v3445
        %v3578 = vadd.f32 %v3180, %v3446
        %v3579 = vadd.f32 %v3181, %v3447
        %v3580 = vadd.f32 %v3182, %v3448
        %v3581 = vadd.f32 %v3183, %v3449
        %v3582 = vadd.f32 %v3184, %v3450
        %v3583 = vadd.f32 %v3185, %v3451
        %v3584 = vadd.f32 %v3186, %v3452
        %v3585 = vadd.f32 %v3187, %v3453
        %v3586 = vadd.f32 %v3188, %v3454
        %v3587 = vadd.f32 %v3189, %v3455
        %v3588 = vadd.f32 %v3190, %v3456
        %v3589 = vadd.f32 %v3191, %v3457
        %v3590 = vadd.f32 %v3192, %v3458
        %v3591 = vadd.f32 %v3193, %v3459
        %v3592 = vadd.f32 %v3194, %v3460
        %v3593 = vadd.f32 %v3195, %v3461
        %v3594 = vadd.f32 %v3196, %v3462
        %v3595 = vadd.f32 %v3197, %v3463
        %v3596 = vadd.f32 %v3198, %v3464
        %v3597 = vadd.f32 %v3199, %v3465
        %v3598 = vadd.f32 %v3200, %v3466
        %v3599 = vadd.f32 %v3201, %v3467
        %v3600 = vadd.f32 %v3202, %v3468
        %v3601 = vadd.f32 %v3203, %v3469
        %v3602 = vadd.f32 %v3204, %v3470
        %v3603 = vadd.f32 %v3205, %v3471
        %v3604 = vadd.f32 %v3206, %v3472
        %v3605 = vadd.f32 %v3207, %v3473
        %v3606 = vadd.f32 %v3208, %v3474
        %v3607 = vadd.f32 %v3209, %v3475
        %v3608 = vadd.f32 %v3210, %v3476
        %v3609 = vadd.f32 %v3211, %v3477
        %v3610 = vadd.f32 %v3212, %v3478
        %v3611 = vadd.f32 %v3213, %v3479
        %v3612 = vadd.f32 %v3214, %v3480
        %v3613 = vadd.f32 %v3215, %v3481
        %v3614 = vadd.f32 %v3216, %v3482
        %v3615 = vadd.f32 %v3217, %v3483
        %v3616 = vadd.f32 %v3218, %v3484
        %v3617 = vadd.f32 %v3219, %v3485
        %v3618 = vadd.f32 %v3220, %v3486
        %v3619 = vadd.f32 %v3221, %v3487
        %v3620 = vadd.f32 %v3222, %v3488
        %v3621 = vadd.f32 %v3223, %v3489
        %v3622 = vadd.f32 %v3224, %v3490
        %v3623 = vadd.f32 %v3225, %v3491
        %v3624 = vadd.f32 %v3226, %v3492
        %v3625 = vadd.f32 %v3227, %v3493
        %v3626 = vadd.f32 %v3228, %v3494
        %v3627 = vadd.f32 %v3229, %v3495
        %v3628 = vadd.f32 %v3230, %v3496
        %v3629 = vadd.f32 %v3231, %v3497
        %v3630 = vadd.f32 %v3232, %v3498
        %v3631 = vadd.f32 %v3233, %v3499
        %v3632 = vadd.f32 %v3234, %v3500
        %v3633 = vadd.f32 %v3235, %v3501
        %v3634 = vadd.f32 %v3236, %v3502
        %v3635 = vadd.f32 %v3237, %v3503
        %v3636 = vadd.f32 %v3238, %v3504
        %v3637 = vadd.f32 %v3239, %v3505
        %v3638 = vadd.f32 %v3240, %v3506
        %v3639 = vadd.f32 %v3241, %v3507
        %v3640 = vadd.f32 %v3242, %v3508
        %v3641 = vadd.f32 %v3243, %v3509
        %v3642 = vadd.f32 %v3244, %v3510
        %v3643 = vadd.f32 %v3245, %v3511
        %s3644 = sld [smem:[#allocation6 + $0x9]]
        %v3645 = vld [vmem:[%s156 + $0x90] sm:$0xff]
        %v3646 = vld [vmem:[%s156 + $0x98] sm:$0xff]
        %v3647 = vld [vmem:[%s156 + $0x150] sm:$0xff]
        %v3648 = vld [vmem:[%s156 + $0x158] sm:$0xff]
        %v3649 = vld [vmem:[%s156 + $0x210] sm:$0xff]
        %v3650 = vld [vmem:[%s156 + $0x218] sm:$0xff]
        %v3651 = vld [vmem:[%s156 + $0x2d0] sm:$0xff]
        %v3652 = vld [vmem:[%s156 + $0x2d8] sm:$0xff]
        %v3653 = vld [vmem:[%s156 + $0x390] sm:$0xff]
        %v3654 = vld [vmem:[%s156 + $0x398] sm:$0xff]
        %v3655 = vld [vmem:[%s156 + $0x450] sm:$0xff]
        %v3656 = vld [vmem:[%s156 + $0x458] sm:$0xff]
        %v3657 = vld [vmem:[%s156 + $0x510] sm:$0xff]
        %v3658 = vld [vmem:[%s156 + $0x518] sm:$0xff]
        %v3659 = vld [vmem:[%s156 + $0x5d0] sm:$0xff]
        %v3660 = vld [vmem:[%s156 + $0x5d8] sm:$0xff]
        %v3661 = vld [vmem:[%s156 + $0x690] sm:$0xff]
        %v3662 = vld [vmem:[%s156 + $0x698] sm:$0xff]
        %v3663 = vld [vmem:[%s156 + $0x750] sm:$0xff]
        %v3664 = vld [vmem:[%s156 + $0x758] sm:$0xff]
        %v3665 = vld [vmem:[%s156 + $0x810] sm:$0xff]
        %v3666 = vld [vmem:[%s156 + $0x818] sm:$0xff]
        %v3667 = vld [vmem:[%s156 + $0x8d0] sm:$0xff]
        %v3668 = vld [vmem:[%s156 + $0x8d8] sm:$0xff]
        %v3669 = vld [vmem:[%s156 + $0x990] sm:$0xff]
        %v3670 = vld [vmem:[%s156 + $0x998] sm:$0xff]
        %v3671 = vld [vmem:[%s156 + $0xa50] sm:$0xff]
        %v3672 = vld [vmem:[%s156 + $0xa58] sm:$0xff]
        %v3673 = vld [vmem:[%s156 + $0xb10] sm:$0xff]
        %v3674 = vld [vmem:[%s156 + $0xb18] sm:$0xff]
        %v3675 = vld [vmem:[%s156 + $0xbd0] sm:$0xff]
        %v3676 = vld [vmem:[%s156 + $0xbd8] sm:$0xff]
        %v3677 = vld [vmem:[%s156 + $0xc90] sm:$0xff]
        %v3678 = vld [vmem:[%s156 + $0xc98] sm:$0xff]
        %v3679 = vld [vmem:[%s156 + $0xd50] sm:$0xff]
        %v3680 = vld [vmem:[%s156 + $0xd58] sm:$0xff]
        %v3681 = vld [vmem:[%s156 + $0xe10] sm:$0xff]
        %v3682 = vld [vmem:[%s156 + $0xe18] sm:$0xff]
        %v3683 = vld [vmem:[%s156 + $0xed0] sm:$0xff]
        %v3684 = vld [vmem:[%s156 + $0xed8] sm:$0xff]
        %v3685 = vld [vmem:[%s156 + $0xf90] sm:$0xff]
        %v3686 = vld [vmem:[%s156 + $0xf98] sm:$0xff]
        %v3687 = vld [vmem:[%s156 + $0x1050] sm:$0xff]
        %v3688 = vld [vmem:[%s156 + $0x1058] sm:$0xff]
        %v3689 = vld [vmem:[%s156 + $0x1110] sm:$0xff]
        %v3690 = vld [vmem:[%s156 + $0x1118] sm:$0xff]
        %v3691 = vld [vmem:[%s156 + $0x11d0] sm:$0xff]
        %v3692 = vld [vmem:[%s156 + $0x11d8] sm:$0xff]
        %v3693 = vld [vmem:[%s156 + $0x1290] sm:$0xff]
        %v3694 = vld [vmem:[%s156 + $0x1298] sm:$0xff]
        %v3695 = vld [vmem:[%s156 + $0x1350] sm:$0xff]
        %v3696 = vld [vmem:[%s156 + $0x1358] sm:$0xff]
        %v3697 = vld [vmem:[%s156 + $0x1410] sm:$0xff]
        %v3698 = vld [vmem:[%s156 + $0x1418] sm:$0xff]
        %v3699 = vld [vmem:[%s156 + $0x14d0] sm:$0xff]
        %v3700 = vld [vmem:[%s156 + $0x14d8] sm:$0xff]
        %v3701 = vld [vmem:[%s156 + $0x1590] sm:$0xff]
        %v3702 = vld [vmem:[%s156 + $0x1598] sm:$0xff]
        %v3703 = vld [vmem:[%s156 + $0x1650] sm:$0xff]
        %v3704 = vld [vmem:[%s156 + $0x1658] sm:$0xff]
        %v3705 = vld [vmem:[%s156 + $0x1710] sm:$0xff]
        %v3706 = vld [vmem:[%s156 + $0x1718] sm:$0xff]
        %v3707 = vld [vmem:[%s156 + $0x17d0] sm:$0xff]
        %v3708 = vld [vmem:[%s156 + $0x17d8] sm:$0xff]
        %v3709 = vld [vmem:[%s156 + $0x1890] sm:$0xff]
        %v3710 = vld [vmem:[%s156 + $0x1898] sm:$0xff]
        %v3711 = vld [vmem:[%s156 + $0x1950] sm:$0xff]
        %v3712 = vld [vmem:[%s156 + $0x1958] sm:$0xff]
        %v3713 = vld [vmem:[%s156 + $0x1a10] sm:$0xff]
        %v3714 = vld [vmem:[%s156 + $0x1a18] sm:$0xff]
        %v3715 = vld [vmem:[%s156 + $0x1ad0] sm:$0xff]
        %v3716 = vld [vmem:[%s156 + $0x1ad8] sm:$0xff]
        %v3717 = vld [vmem:[%s156 + $0x1b90] sm:$0xff]
        %v3718 = vld [vmem:[%s156 + $0x1b98] sm:$0xff]
        %v3719 = vld [vmem:[%s156 + $0x1c50] sm:$0xff]
        %v3720 = vld [vmem:[%s156 + $0x1c58] sm:$0xff]
        %v3721 = vld [vmem:[%s156 + $0x1d10] sm:$0xff]
        %v3722 = vld [vmem:[%s156 + $0x1d18] sm:$0xff]
        %v3723 = vld [vmem:[%s156 + $0x1dd0] sm:$0xff]
        %v3724 = vld [vmem:[%s156 + $0x1dd8] sm:$0xff]
        %v3725 = vld [vmem:[%s156 + $0x1e90] sm:$0xff]
        %v3726 = vld [vmem:[%s156 + $0x1e98] sm:$0xff]
        %v3727 = vld [vmem:[%s156 + $0x1f50] sm:$0xff]
        %v3728 = vld [vmem:[%s156 + $0x1f58] sm:$0xff]
        %v3729 = vld [vmem:[%s156 + $0x2010] sm:$0xff]
        %v3730 = vld [vmem:[%s156 + $0x2018] sm:$0xff]
        %v3731 = vld [vmem:[%s156 + $0x20d0] sm:$0xff]
        %v3732 = vld [vmem:[%s156 + $0x20d8] sm:$0xff]
        %v3733 = vld [vmem:[%s156 + $0x2190] sm:$0xff]
        %v3734 = vld [vmem:[%s156 + $0x2198] sm:$0xff]
        %v3735 = vld [vmem:[%s156 + $0x2250] sm:$0xff]
        %v3736 = vld [vmem:[%s156 + $0x2258] sm:$0xff]
        %v3737 = vld [vmem:[%s156 + $0x2310] sm:$0xff]
        %v3738 = vld [vmem:[%s156 + $0x2318] sm:$0xff]
        %v3739 = vld [vmem:[%s156 + $0x23d0] sm:$0xff]
        %v3740 = vld [vmem:[%s156 + $0x23d8] sm:$0xff]
        %v3741 = vld [vmem:[%s156 + $0x2490] sm:$0xff]
        %v3742 = vld [vmem:[%s156 + $0x2498] sm:$0xff]
        %v3743 = vld [vmem:[%s156 + $0x2550] sm:$0xff]
        %v3744 = vld [vmem:[%s156 + $0x2558] sm:$0xff]
        %v3745 = vld [vmem:[%s156 + $0x2610] sm:$0xff]
        %v3746 = vld [vmem:[%s156 + $0x2618] sm:$0xff]
        %v3747 = vld [vmem:[%s156 + $0x26d0] sm:$0xff]
        %v3748 = vld [vmem:[%s156 + $0x26d8] sm:$0xff]
        %v3749 = vld [vmem:[%s156 + $0x2790] sm:$0xff]
        %v3750 = vld [vmem:[%s156 + $0x2798] sm:$0xff]
        %v3751 = vld [vmem:[%s156 + $0x2850] sm:$0xff]
        %v3752 = vld [vmem:[%s156 + $0x2858] sm:$0xff]
        %v3753 = vld [vmem:[%s156 + $0x2910] sm:$0xff]
        %v3754 = vld [vmem:[%s156 + $0x2918] sm:$0xff]
        %v3755 = vld [vmem:[%s156 + $0x29d0] sm:$0xff]
        %v3756 = vld [vmem:[%s156 + $0x29d8] sm:$0xff]
        %v3757 = vld [vmem:[%s156 + $0x2a90] sm:$0xff]
        %v3758 = vld [vmem:[%s156 + $0x2a98] sm:$0xff]
        %v3759 = vld [vmem:[%s156 + $0x2b50] sm:$0xff]
        %v3760 = vld [vmem:[%s156 + $0x2b58] sm:$0xff]
        %v3761 = vld [vmem:[%s156 + $0x2c10] sm:$0xff]
        %v3762 = vld [vmem:[%s156 + $0x2c18] sm:$0xff]
        %v3763 = vld [vmem:[%s156 + $0x2cd0] sm:$0xff]
        %v3764 = vld [vmem:[%s156 + $0x2cd8] sm:$0xff]
        %v3765 = vld [vmem:[%s156 + $0x2d90] sm:$0xff]
        %v3766 = vld [vmem:[%s156 + $0x2d98] sm:$0xff]
        %v3767 = vld [vmem:[%s156 + $0x2e50] sm:$0xff]
        %v3768 = vld [vmem:[%s156 + $0x2e58] sm:$0xff]
        %v3769 = vld [vmem:[%s156 + $0x2f10] sm:$0xff]
        %v3770 = vld [vmem:[%s156 + $0x2f18] sm:$0xff]
        %v3771 = vld [vmem:[%s156 + $0x2fd0] sm:$0xff]
        %v3772 = vld [vmem:[%s156 + $0x2fd8] sm:$0xff]
        %v3773 = vld [vmem:[%s156 + $0x3090] sm:$0xff]
        %v3774 = vld [vmem:[%s156 + $0x3098] sm:$0xff]
        %v3775 = vld [vmem:[%s156 + $0x3150] sm:$0xff]
        %v3776 = vld [vmem:[%s156 + $0x3158] sm:$0xff]
        %v3777 = vstv %s3644
        %v3778 = vmul.f32 %v3777, %v3645
        %v3779 = vmul.f32 %v3777, %v3646
        %v3780 = vmul.f32 %v3777, %v3647
        %v3781 = vmul.f32 %v3777, %v3648
        %v3782 = vmul.f32 %v3777, %v3649
        %v3783 = vmul.f32 %v3777, %v3650
        %v3784 = vmul.f32 %v3777, %v3651
        %v3785 = vmul.f32 %v3777, %v3652
        %v3786 = vmul.f32 %v3777, %v3653
        %v3787 = vmul.f32 %v3777, %v3654
        %v3788 = vmul.f32 %v3777, %v3655
        %v3789 = vmul.f32 %v3777, %v3656
        %v3790 = vmul.f32 %v3777, %v3657
        %v3791 = vmul.f32 %v3777, %v3658
        %v3792 = vmul.f32 %v3777, %v3659
        %v3793 = vmul.f32 %v3777, %v3660
        %v3794 = vmul.f32 %v3777, %v3661
        %v3795 = vmul.f32 %v3777, %v3662
        %v3796 = vmul.f32 %v3777, %v3663
        %v3797 = vmul.f32 %v3777, %v3664
        %v3798 = vmul.f32 %v3777, %v3665
        %v3799 = vmul.f32 %v3777, %v3666
        %v3800 = vmul.f32 %v3777, %v3667
        %v3801 = vmul.f32 %v3777, %v3668
        %v3802 = vmul.f32 %v3777, %v3669
        %v3803 = vmul.f32 %v3777, %v3670
        %v3804 = vmul.f32 %v3777, %v3671
        %v3805 = vmul.f32 %v3777, %v3672
        %v3806 = vmul.f32 %v3777, %v3673
        %v3807 = vmul.f32 %v3777, %v3674
        %v3808 = vmul.f32 %v3777, %v3675
        %v3809 = vmul.f32 %v3777, %v3676
        %v3810 = vmul.f32 %v3777, %v3677
        %v3811 = vmul.f32 %v3777, %v3678
        %v3812 = vmul.f32 %v3777, %v3679
        %v3813 = vmul.f32 %v3777, %v3680
        %v3814 = vmul.f32 %v3777, %v3681
        %v3815 = vmul.f32 %v3777, %v3682
        %v3816 = vmul.f32 %v3777, %v3683
        %v3817 = vmul.f32 %v3777, %v3684
        %v3818 = vmul.f32 %v3777, %v3685
        %v3819 = vmul.f32 %v3777, %v3686
        %v3820 = vmul.f32 %v3777, %v3687
        %v3821 = vmul.f32 %v3777, %v3688
        %v3822 = vmul.f32 %v3777, %v3689
        %v3823 = vmul.f32 %v3777, %v3690
        %v3824 = vmul.f32 %v3777, %v3691
        %v3825 = vmul.f32 %v3777, %v3692
        %v3826 = vmul.f32 %v3777, %v3693
        %v3827 = vmul.f32 %v3777, %v3694
        %v3828 = vmul.f32 %v3777, %v3695
        %v3829 = vmul.f32 %v3777, %v3696
        %v3830 = vmul.f32 %v3777, %v3697
        %v3831 = vmul.f32 %v3777, %v3698
        %v3832 = vmul.f32 %v3777, %v3699
        %v3833 = vmul.f32 %v3777, %v3700
        %v3834 = vmul.f32 %v3777, %v3701
        %v3835 = vmul.f32 %v3777, %v3702
        %v3836 = vmul.f32 %v3777, %v3703
        %v3837 = vmul.f32 %v3777, %v3704
        %v3838 = vmul.f32 %v3777, %v3705
        %v3839 = vmul.f32 %v3777, %v3706
        %v3840 = vmul.f32 %v3777, %v3707
        %v3841 = vmul.f32 %v3777, %v3708
        %v3842 = vmul.f32 %v3777, %v3709
        %v3843 = vmul.f32 %v3777, %v3710
        %v3844 = vmul.f32 %v3777, %v3711
        %v3845 = vmul.f32 %v3777, %v3712
        %v3846 = vmul.f32 %v3777, %v3713
        %v3847 = vmul.f32 %v3777, %v3714
        %v3848 = vmul.f32 %v3777, %v3715
        %v3849 = vmul.f32 %v3777, %v3716
        %v3850 = vmul.f32 %v3777, %v3717
        %v3851 = vmul.f32 %v3777, %v3718
        %v3852 = vmul.f32 %v3777, %v3719
        %v3853 = vmul.f32 %v3777, %v3720
        %v3854 = vmul.f32 %v3777, %v3721
        %v3855 = vmul.f32 %v3777, %v3722
        %v3856 = vmul.f32 %v3777, %v3723
        %v3857 = vmul.f32 %v3777, %v3724
        %v3858 = vmul.f32 %v3777, %v3725
        %v3859 = vmul.f32 %v3777, %v3726
        %v3860 = vmul.f32 %v3777, %v3727
        %v3861 = vmul.f32 %v3777, %v3728
        %v3862 = vmul.f32 %v3777, %v3729
        %v3863 = vmul.f32 %v3777, %v3730
        %v3864 = vmul.f32 %v3777, %v3731
        %v3865 = vmul.f32 %v3777, %v3732
        %v3866 = vmul.f32 %v3777, %v3733
        %v3867 = vmul.f32 %v3777, %v3734
        %v3868 = vmul.f32 %v3777, %v3735
        %v3869 = vmul.f32 %v3777, %v3736
        %v3870 = vmul.f32 %v3777, %v3737
        %v3871 = vmul.f32 %v3777, %v3738
        %v3872 = vmul.f32 %v3777, %v3739
        %v3873 = vmul.f32 %v3777, %v3740
        %v3874 = vmul.f32 %v3777, %v3741
        %v3875 = vmul.f32 %v3777, %v3742
        %v3876 = vmul.f32 %v3777, %v3743
        %v3877 = vmul.f32 %v3777, %v3744
        %v3878 = vmul.f32 %v3777, %v3745
        %v3879 = vmul.f32 %v3777, %v3746
        %v3880 = vmul.f32 %v3777, %v3747
        %v3881 = vmul.f32 %v3777, %v3748
        %v3882 = vmul.f32 %v3777, %v3749
        %v3883 = vmul.f32 %v3777, %v3750
        %v3884 = vmul.f32 %v3777, %v3751
        %v3885 = vmul.f32 %v3777, %v3752
        %v3886 = vmul.f32 %v3777, %v3753
        %v3887 = vmul.f32 %v3777, %v3754
        %v3888 = vmul.f32 %v3777, %v3755
        %v3889 = vmul.f32 %v3777, %v3756
        %v3890 = vmul.f32 %v3777, %v3757
        %v3891 = vmul.f32 %v3777, %v3758
        %v3892 = vmul.f32 %v3777, %v3759
        %v3893 = vmul.f32 %v3777, %v3760
        %v3894 = vmul.f32 %v3777, %v3761
        %v3895 = vmul.f32 %v3777, %v3762
        %v3896 = vmul.f32 %v3777, %v3763
        %v3897 = vmul.f32 %v3777, %v3764
        %v3898 = vmul.f32 %v3777, %v3765
        %v3899 = vmul.f32 %v3777, %v3766
        %v3900 = vmul.f32 %v3777, %v3767
        %v3901 = vmul.f32 %v3777, %v3768
        %v3902 = vmul.f32 %v3777, %v3769
        %v3903 = vmul.f32 %v3777, %v3770
        %v3904 = vmul.f32 %v3777, %v3771
        %v3905 = vmul.f32 %v3777, %v3772
        %v3906 = vmul.f32 %v3777, %v3773
        %v3907 = vmul.f32 %v3777, %v3774
        %v3908 = vmul.f32 %v3777, %v3775
        %v3909 = vmul.f32 %v3777, %v3776
        %v3910 = vadd.f32 %v3512, %v3778
        %v3911 = vadd.f32 %v3513, %v3779
        %v3912 = vadd.f32 %v3514, %v3780
        %v3913 = vadd.f32 %v3515, %v3781
        %v3914 = vadd.f32 %v3516, %v3782
        %v3915 = vadd.f32 %v3517, %v3783
        %v3916 = vadd.f32 %v3518, %v3784
        %v3917 = vadd.f32 %v3519, %v3785
        %v3918 = vadd.f32 %v3520, %v3786
        %v3919 = vadd.f32 %v3521, %v3787
        %v3920 = vadd.f32 %v3522, %v3788
        %v3921 = vadd.f32 %v3523, %v3789
        %v3922 = vadd.f32 %v3524, %v3790
        %v3923 = vadd.f32 %v3525, %v3791
        %v3924 = vadd.f32 %v3526, %v3792
        %v3925 = vadd.f32 %v3527, %v3793
        %v3926 = vadd.f32 %v3528, %v3794
        %v3927 = vadd.f32 %v3529, %v3795
        %v3928 = vadd.f32 %v3530, %v3796
        %v3929 = vadd.f32 %v3531, %v3797
        %v3930 = vadd.f32 %v3532, %v3798
        %v3931 = vadd.f32 %v3533, %v3799
        %v3932 = vadd.f32 %v3534, %v3800
        %v3933 = vadd.f32 %v3535, %v3801
        %v3934 = vadd.f32 %v3536, %v3802
        %v3935 = vadd.f32 %v3537, %v3803
        %v3936 = vadd.f32 %v3538, %v3804
        %v3937 = vadd.f32 %v3539, %v3805
        %v3938 = vadd.f32 %v3540, %v3806
        %v3939 = vadd.f32 %v3541, %v3807
        %v3940 = vadd.f32 %v3542, %v3808
        %v3941 = vadd.f32 %v3543, %v3809
        %v3942 = vadd.f32 %v3544, %v3810
        %v3943 = vadd.f32 %v3545, %v3811
        %v3944 = vadd.f32 %v3546, %v3812
        %v3945 = vadd.f32 %v3547, %v3813
        %v3946 = vadd.f32 %v3548, %v3814
        %v3947 = vadd.f32 %v3549, %v3815
        %v3948 = vadd.f32 %v3550, %v3816
        %v3949 = vadd.f32 %v3551, %v3817
        %v3950 = vadd.f32 %v3552, %v3818
        %v3951 = vadd.f32 %v3553, %v3819
        %v3952 = vadd.f32 %v3554, %v3820
        %v3953 = vadd.f32 %v3555, %v3821
        %v3954 = vadd.f32 %v3556, %v3822
        %v3955 = vadd.f32 %v3557, %v3823
        %v3956 = vadd.f32 %v3558, %v3824
        %v3957 = vadd.f32 %v3559, %v3825
        %v3958 = vadd.f32 %v3560, %v3826
        %v3959 = vadd.f32 %v3561, %v3827
        %v3960 = vadd.f32 %v3562, %v3828
        %v3961 = vadd.f32 %v3563, %v3829
        %v3962 = vadd.f32 %v3564, %v3830
        %v3963 = vadd.f32 %v3565, %v3831
        %v3964 = vadd.f32 %v3566, %v3832
        %v3965 = vadd.f32 %v3567, %v3833
        %v3966 = vadd.f32 %v3568, %v3834
        %v3967 = vadd.f32 %v3569, %v3835
        %v3968 = vadd.f32 %v3570, %v3836
        %v3969 = vadd.f32 %v3571, %v3837
        %v3970 = vadd.f32 %v3572, %v3838
        %v3971 = vadd.f32 %v3573, %v3839
        %v3972 = vadd.f32 %v3574, %v3840
        %v3973 = vadd.f32 %v3575, %v3841
        %v3974 = vadd.f32 %v3576, %v3842
        %v3975 = vadd.f32 %v3577, %v3843
        %v3976 = vadd.f32 %v3578, %v3844
        %v3977 = vadd.f32 %v3579, %v3845
        %v3978 = vadd.f32 %v3580, %v3846
        %v3979 = vadd.f32 %v3581, %v3847
        %v3980 = vadd.f32 %v3582, %v3848
        %v3981 = vadd.f32 %v3583, %v3849
        %v3982 = vadd.f32 %v3584, %v3850
        %v3983 = vadd.f32 %v3585, %v3851
        %v3984 = vadd.f32 %v3586, %v3852
        %v3985 = vadd.f32 %v3587, %v3853
        %v3986 = vadd.f32 %v3588, %v3854
        %v3987 = vadd.f32 %v3589, %v3855
        %v3988 = vadd.f32 %v3590, %v3856
        %v3989 = vadd.f32 %v3591, %v3857
        %v3990 = vadd.f32 %v3592, %v3858
        %v3991 = vadd.f32 %v3593, %v3859
        %v3992 = vadd.f32 %v3594, %v3860
        %v3993 = vadd.f32 %v3595, %v3861
        %v3994 = vadd.f32 %v3596, %v3862
        %v3995 = vadd.f32 %v3597, %v3863
        %v3996 = vadd.f32 %v3598, %v3864
        %v3997 = vadd.f32 %v3599, %v3865
        %v3998 = vadd.f32 %v3600, %v3866
        %v3999 = vadd.f32 %v3601, %v3867
        %v4000 = vadd.f32 %v3602, %v3868
        %v4001 = vadd.f32 %v3603, %v3869
        %v4002 = vadd.f32 %v3604, %v3870
        %v4003 = vadd.f32 %v3605, %v3871
        %v4004 = vadd.f32 %v3606, %v3872
        %v4005 = vadd.f32 %v3607, %v3873
        %v4006 = vadd.f32 %v3608, %v3874
        %v4007 = vadd.f32 %v3609, %v3875
        %v4008 = vadd.f32 %v3610, %v3876
        %v4009 = vadd.f32 %v3611, %v3877
        %v4010 = vadd.f32 %v3612, %v3878
        %v4011 = vadd.f32 %v3613, %v3879
        %v4012 = vadd.f32 %v3614, %v3880
        %v4013 = vadd.f32 %v3615, %v3881
        %v4014 = vadd.f32 %v3616, %v3882
        %v4015 = vadd.f32 %v3617, %v3883
        %v4016 = vadd.f32 %v3618, %v3884
        %v4017 = vadd.f32 %v3619, %v3885
        %v4018 = vadd.f32 %v3620, %v3886
        %v4019 = vadd.f32 %v3621, %v3887
        %v4020 = vadd.f32 %v3622, %v3888
        %v4021 = vadd.f32 %v3623, %v3889
        %v4022 = vadd.f32 %v3624, %v3890
        %v4023 = vadd.f32 %v3625, %v3891
        %v4024 = vadd.f32 %v3626, %v3892
        %v4025 = vadd.f32 %v3627, %v3893
        %v4026 = vadd.f32 %v3628, %v3894
        %v4027 = vadd.f32 %v3629, %v3895
        %v4028 = vadd.f32 %v3630, %v3896
        %v4029 = vadd.f32 %v3631, %v3897
        %v4030 = vadd.f32 %v3632, %v3898
        %v4031 = vadd.f32 %v3633, %v3899
        %v4032 = vadd.f32 %v3634, %v3900
        %v4033 = vadd.f32 %v3635, %v3901
        %v4034 = vadd.f32 %v3636, %v3902
        %v4035 = vadd.f32 %v3637, %v3903
        %v4036 = vadd.f32 %v3638, %v3904
        %v4037 = vadd.f32 %v3639, %v3905
        %v4038 = vadd.f32 %v3640, %v3906
        %v4039 = vadd.f32 %v3641, %v3907
        %v4040 = vadd.f32 %v3642, %v3908
        %v4041 = vadd.f32 %v3643, %v3909
        %s4042 = sld [smem:[#allocation6 + $0xa]]
        %v4043 = vld [vmem:[%s156 + $0xa0] sm:$0xff]
        %v4044 = vld [vmem:[%s156 + $0xa8] sm:$0xff]
        %v4045 = vld [vmem:[%s156 + $0x160] sm:$0xff]
        %v4046 = vld [vmem:[%s156 + $0x168] sm:$0xff]
        %v4047 = vld [vmem:[%s156 + $0x220] sm:$0xff]
        %v4048 = vld [vmem:[%s156 + $0x228] sm:$0xff]
        %v4049 = vld [vmem:[%s156 + $0x2e0] sm:$0xff]
        %v4050 = vld [vmem:[%s156 + $0x2e8] sm:$0xff]
        %v4051 = vld [vmem:[%s156 + $0x3a0] sm:$0xff]
        %v4052 = vld [vmem:[%s156 + $0x3a8] sm:$0xff]
        %v4053 = vld [vmem:[%s156 + $0x460] sm:$0xff]
        %v4054 = vld [vmem:[%s156 + $0x468] sm:$0xff]
        %v4055 = vld [vmem:[%s156 + $0x520] sm:$0xff]
        %v4056 = vld [vmem:[%s156 + $0x528] sm:$0xff]
        %v4057 = vld [vmem:[%s156 + $0x5e0] sm:$0xff]
        %v4058 = vld [vmem:[%s156 + $0x5e8] sm:$0xff]
        %v4059 = vld [vmem:[%s156 + $0x6a0] sm:$0xff]
        %v4060 = vld [vmem:[%s156 + $0x6a8] sm:$0xff]
        %v4061 = vld [vmem:[%s156 + $0x760] sm:$0xff]
        %v4062 = vld [vmem:[%s156 + $0x768] sm:$0xff]
        %v4063 = vld [vmem:[%s156 + $0x820] sm:$0xff]
        %v4064 = vld [vmem:[%s156 + $0x828] sm:$0xff]
        %v4065 = vld [vmem:[%s156 + $0x8e0] sm:$0xff]
        %v4066 = vld [vmem:[%s156 + $0x8e8] sm:$0xff]
        %v4067 = vld [vmem:[%s156 + $0x9a0] sm:$0xff]
        %v4068 = vld [vmem:[%s156 + $0x9a8] sm:$0xff]
        %v4069 = vld [vmem:[%s156 + $0xa60] sm:$0xff]
        %v4070 = vld [vmem:[%s156 + $0xa68] sm:$0xff]
        %v4071 = vld [vmem:[%s156 + $0xb20] sm:$0xff]
        %v4072 = vld [vmem:[%s156 + $0xb28] sm:$0xff]
        %v4073 = vld [vmem:[%s156 + $0xbe0] sm:$0xff]
        %v4074 = vld [vmem:[%s156 + $0xbe8] sm:$0xff]
        %v4075 = vld [vmem:[%s156 + $0xca0] sm:$0xff]
        %v4076 = vld [vmem:[%s156 + $0xca8] sm:$0xff]
        %v4077 = vld [vmem:[%s156 + $0xd60] sm:$0xff]
        %v4078 = vld [vmem:[%s156 + $0xd68] sm:$0xff]
        %v4079 = vld [vmem:[%s156 + $0xe20] sm:$0xff]
        %v4080 = vld [vmem:[%s156 + $0xe28] sm:$0xff]
        %v4081 = vld [vmem:[%s156 + $0xee0] sm:$0xff]
        %v4082 = vld [vmem:[%s156 + $0xee8] sm:$0xff]
        %v4083 = vld [vmem:[%s156 + $0xfa0] sm:$0xff]
        %v4084 = vld [vmem:[%s156 + $0xfa8] sm:$0xff]
        %v4085 = vld [vmem:[%s156 + $0x1060] sm:$0xff]
        %v4086 = vld [vmem:[%s156 + $0x1068] sm:$0xff]
        %v4087 = vld [vmem:[%s156 + $0x1120] sm:$0xff]
        %v4088 = vld [vmem:[%s156 + $0x1128] sm:$0xff]
        %v4089 = vld [vmem:[%s156 + $0x11e0] sm:$0xff]
        %v4090 = vld [vmem:[%s156 + $0x11e8] sm:$0xff]
        %v4091 = vld [vmem:[%s156 + $0x12a0] sm:$0xff]
        %v4092 = vld [vmem:[%s156 + $0x12a8] sm:$0xff]
        %v4093 = vld [vmem:[%s156 + $0x1360] sm:$0xff]
        %v4094 = vld [vmem:[%s156 + $0x1368] sm:$0xff]
        %v4095 = vld [vmem:[%s156 + $0x1420] sm:$0xff]
        %v4096 = vld [vmem:[%s156 + $0x1428] sm:$0xff]
        %v4097 = vld [vmem:[%s156 + $0x14e0] sm:$0xff]
        %v4098 = vld [vmem:[%s156 + $0x14e8] sm:$0xff]
        %v4099 = vld [vmem:[%s156 + $0x15a0] sm:$0xff]
        %v4100 = vld [vmem:[%s156 + $0x15a8] sm:$0xff]
        %v4101 = vld [vmem:[%s156 + $0x1660] sm:$0xff]
        %v4102 = vld [vmem:[%s156 + $0x1668] sm:$0xff]
        %v4103 = vld [vmem:[%s156 + $0x1720] sm:$0xff]
        %v4104 = vld [vmem:[%s156 + $0x1728] sm:$0xff]
        %v4105 = vld [vmem:[%s156 + $0x17e0] sm:$0xff]
        %v4106 = vld [vmem:[%s156 + $0x17e8] sm:$0xff]
        %v4107 = vld [vmem:[%s156 + $0x18a0] sm:$0xff]
        %v4108 = vld [vmem:[%s156 + $0x18a8] sm:$0xff]
        %v4109 = vld [vmem:[%s156 + $0x1960] sm:$0xff]
        %v4110 = vld [vmem:[%s156 + $0x1968] sm:$0xff]
        %v4111 = vld [vmem:[%s156 + $0x1a20] sm:$0xff]
        %v4112 = vld [vmem:[%s156 + $0x1a28] sm:$0xff]
        %v4113 = vld [vmem:[%s156 + $0x1ae0] sm:$0xff]
        %v4114 = vld [vmem:[%s156 + $0x1ae8] sm:$0xff]
        %v4115 = vld [vmem:[%s156 + $0x1ba0] sm:$0xff]
        %v4116 = vld [vmem:[%s156 + $0x1ba8] sm:$0xff]
        %v4117 = vld [vmem:[%s156 + $0x1c60] sm:$0xff]
        %v4118 = vld [vmem:[%s156 + $0x1c68] sm:$0xff]
        %v4119 = vld [vmem:[%s156 + $0x1d20] sm:$0xff]
        %v4120 = vld [vmem:[%s156 + $0x1d28] sm:$0xff]
        %v4121 = vld [vmem:[%s156 + $0x1de0] sm:$0xff]
        %v4122 = vld [vmem:[%s156 + $0x1de8] sm:$0xff]
        %v4123 = vld [vmem:[%s156 + $0x1ea0] sm:$0xff]
        %v4124 = vld [vmem:[%s156 + $0x1ea8] sm:$0xff]
        %v4125 = vld [vmem:[%s156 + $0x1f60] sm:$0xff]
        %v4126 = vld [vmem:[%s156 + $0x1f68] sm:$0xff]
        %v4127 = vld [vmem:[%s156 + $0x2020] sm:$0xff]
        %v4128 = vld [vmem:[%s156 + $0x2028] sm:$0xff]
        %v4129 = vld [vmem:[%s156 + $0x20e0] sm:$0xff]
        %v4130 = vld [vmem:[%s156 + $0x20e8] sm:$0xff]
        %v4131 = vld [vmem:[%s156 + $0x21a0] sm:$0xff]
        %v4132 = vld [vmem:[%s156 + $0x21a8] sm:$0xff]
        %v4133 = vld [vmem:[%s156 + $0x2260] sm:$0xff]
        %v4134 = vld [vmem:[%s156 + $0x2268] sm:$0xff]
        %v4135 = vld [vmem:[%s156 + $0x2320] sm:$0xff]
        %v4136 = vld [vmem:[%s156 + $0x2328] sm:$0xff]
        %v4137 = vld [vmem:[%s156 + $0x23e0] sm:$0xff]
        %v4138 = vld [vmem:[%s156 + $0x23e8] sm:$0xff]
        %v4139 = vld [vmem:[%s156 + $0x24a0] sm:$0xff]
        %v4140 = vld [vmem:[%s156 + $0x24a8] sm:$0xff]
        %v4141 = vld [vmem:[%s156 + $0x2560] sm:$0xff]
        %v4142 = vld [vmem:[%s156 + $0x2568] sm:$0xff]
        %v4143 = vld [vmem:[%s156 + $0x2620] sm:$0xff]
        %v4144 = vld [vmem:[%s156 + $0x2628] sm:$0xff]
        %v4145 = vld [vmem:[%s156 + $0x26e0] sm:$0xff]
        %v4146 = vld [vmem:[%s156 + $0x26e8] sm:$0xff]
        %v4147 = vld [vmem:[%s156 + $0x27a0] sm:$0xff]
        %v4148 = vld [vmem:[%s156 + $0x27a8] sm:$0xff]
        %v4149 = vld [vmem:[%s156 + $0x2860] sm:$0xff]
        %v4150 = vld [vmem:[%s156 + $0x2868] sm:$0xff]
        %v4151 = vld [vmem:[%s156 + $0x2920] sm:$0xff]
        %v4152 = vld [vmem:[%s156 + $0x2928] sm:$0xff]
        %v4153 = vld [vmem:[%s156 + $0x29e0] sm:$0xff]
        %v4154 = vld [vmem:[%s156 + $0x29e8] sm:$0xff]
        %v4155 = vld [vmem:[%s156 + $0x2aa0] sm:$0xff]
        %v4156 = vld [vmem:[%s156 + $0x2aa8] sm:$0xff]
        %v4157 = vld [vmem:[%s156 + $0x2b60] sm:$0xff]
        %v4158 = vld [vmem:[%s156 + $0x2b68] sm:$0xff]
        %v4159 = vld [vmem:[%s156 + $0x2c20] sm:$0xff]
        %v4160 = vld [vmem:[%s156 + $0x2c28] sm:$0xff]
        %v4161 = vld [vmem:[%s156 + $0x2ce0] sm:$0xff]
        %v4162 = vld [vmem:[%s156 + $0x2ce8] sm:$0xff]
        %v4163 = vld [vmem:[%s156 + $0x2da0] sm:$0xff]
        %v4164 = vld [vmem:[%s156 + $0x2da8] sm:$0xff]
        %v4165 = vld [vmem:[%s156 + $0x2e60] sm:$0xff]
        %v4166 = vld [vmem:[%s156 + $0x2e68] sm:$0xff]
        %v4167 = vld [vmem:[%s156 + $0x2f20] sm:$0xff]
        %v4168 = vld [vmem:[%s156 + $0x2f28] sm:$0xff]
        %v4169 = vld [vmem:[%s156 + $0x2fe0] sm:$0xff]
        %v4170 = vld [vmem:[%s156 + $0x2fe8] sm:$0xff]
        %v4171 = vld [vmem:[%s156 + $0x30a0] sm:$0xff]
        %v4172 = vld [vmem:[%s156 + $0x30a8] sm:$0xff]
        %v4173 = vld [vmem:[%s156 + $0x3160] sm:$0xff]
        %v4174 = vld [vmem:[%s156 + $0x3168] sm:$0xff]
        %v4175 = vstv %s4042
        %v4176 = vmul.f32 %v4175, %v4043
        %v4177 = vmul.f32 %v4175, %v4044
        %v4178 = vmul.f32 %v4175, %v4045
        %v4179 = vmul.f32 %v4175, %v4046
        %v4180 = vmul.f32 %v4175, %v4047
        %v4181 = vmul.f32 %v4175, %v4048
        %v4182 = vmul.f32 %v4175, %v4049
        %v4183 = vmul.f32 %v4175, %v4050
        %v4184 = vmul.f32 %v4175, %v4051
        %v4185 = vmul.f32 %v4175, %v4052
        %v4186 = vmul.f32 %v4175, %v4053
        %v4187 = vmul.f32 %v4175, %v4054
        %v4188 = vmul.f32 %v4175, %v4055
        %v4189 = vmul.f32 %v4175, %v4056
        %v4190 = vmul.f32 %v4175, %v4057
        %v4191 = vmul.f32 %v4175, %v4058
        %v4192 = vmul.f32 %v4175, %v4059
        %v4193 = vmul.f32 %v4175, %v4060
        %v4194 = vmul.f32 %v4175, %v4061
        %v4195 = vmul.f32 %v4175, %v4062
        %v4196 = vmul.f32 %v4175, %v4063
        %v4197 = vmul.f32 %v4175, %v4064
        %v4198 = vmul.f32 %v4175, %v4065
        %v4199 = vmul.f32 %v4175, %v4066
        %v4200 = vmul.f32 %v4175, %v4067
        %v4201 = vmul.f32 %v4175, %v4068
        %v4202 = vmul.f32 %v4175, %v4069
        %v4203 = vmul.f32 %v4175, %v4070
        %v4204 = vmul.f32 %v4175, %v4071
        %v4205 = vmul.f32 %v4175, %v4072
        %v4206 = vmul.f32 %v4175, %v4073
        %v4207 = vmul.f32 %v4175, %v4074
        %v4208 = vmul.f32 %v4175, %v4075
        %v4209 = vmul.f32 %v4175, %v4076
        %v4210 = vmul.f32 %v4175, %v4077
        %v4211 = vmul.f32 %v4175, %v4078
        %v4212 = vmul.f32 %v4175, %v4079
        %v4213 = vmul.f32 %v4175, %v4080
        %v4214 = vmul.f32 %v4175, %v4081
        %v4215 = vmul.f32 %v4175, %v4082
        %v4216 = vmul.f32 %v4175, %v4083
        %v4217 = vmul.f32 %v4175, %v4084
        %v4218 = vmul.f32 %v4175, %v4085
        %v4219 = vmul.f32 %v4175, %v4086
        %v4220 = vmul.f32 %v4175, %v4087
        %v4221 = vmul.f32 %v4175, %v4088
        %v4222 = vmul.f32 %v4175, %v4089
        %v4223 = vmul.f32 %v4175, %v4090
        %v4224 = vmul.f32 %v4175, %v4091
        %v4225 = vmul.f32 %v4175, %v4092
        %v4226 = vmul.f32 %v4175, %v4093
        %v4227 = vmul.f32 %v4175, %v4094
        %v4228 = vmul.f32 %v4175, %v4095
        %v4229 = vmul.f32 %v4175, %v4096
        %v4230 = vmul.f32 %v4175, %v4097
        %v4231 = vmul.f32 %v4175, %v4098
        %v4232 = vmul.f32 %v4175, %v4099
        %v4233 = vmul.f32 %v4175, %v4100
        %v4234 = vmul.f32 %v4175, %v4101
        %v4235 = vmul.f32 %v4175, %v4102
        %v4236 = vmul.f32 %v4175, %v4103
        %v4237 = vmul.f32 %v4175, %v4104
        %v4238 = vmul.f32 %v4175, %v4105
        %v4239 = vmul.f32 %v4175, %v4106
        %v4240 = vmul.f32 %v4175, %v4107
        %v4241 = vmul.f32 %v4175, %v4108
        %v4242 = vmul.f32 %v4175, %v4109
        %v4243 = vmul.f32 %v4175, %v4110
        %v4244 = vmul.f32 %v4175, %v4111
        %v4245 = vmul.f32 %v4175, %v4112
        %v4246 = vmul.f32 %v4175, %v4113
        %v4247 = vmul.f32 %v4175, %v4114
        %v4248 = vmul.f32 %v4175, %v4115
        %v4249 = vmul.f32 %v4175, %v4116
        %v4250 = vmul.f32 %v4175, %v4117
        %v4251 = vmul.f32 %v4175, %v4118
        %v4252 = vmul.f32 %v4175, %v4119
        %v4253 = vmul.f32 %v4175, %v4120
        %v4254 = vmul.f32 %v4175, %v4121
        %v4255 = vmul.f32 %v4175, %v4122
        %v4256 = vmul.f32 %v4175, %v4123
        %v4257 = vmul.f32 %v4175, %v4124
        %v4258 = vmul.f32 %v4175, %v4125
        %v4259 = vmul.f32 %v4175, %v4126
        %v4260 = vmul.f32 %v4175, %v4127
        %v4261 = vmul.f32 %v4175, %v4128
        %v4262 = vmul.f32 %v4175, %v4129
        %v4263 = vmul.f32 %v4175, %v4130
        %v4264 = vmul.f32 %v4175, %v4131
        %v4265 = vmul.f32 %v4175, %v4132
        %v4266 = vmul.f32 %v4175, %v4133
        %v4267 = vmul.f32 %v4175, %v4134
        %v4268 = vmul.f32 %v4175, %v4135
        %v4269 = vmul.f32 %v4175, %v4136
        %v4270 = vmul.f32 %v4175, %v4137
        %v4271 = vmul.f32 %v4175, %v4138
        %v4272 = vmul.f32 %v4175, %v4139
        %v4273 = vmul.f32 %v4175, %v4140
        %v4274 = vmul.f32 %v4175, %v4141
        %v4275 = vmul.f32 %v4175, %v4142
        %v4276 = vmul.f32 %v4175, %v4143
        %v4277 = vmul.f32 %v4175, %v4144
        %v4278 = vmul.f32 %v4175, %v4145
        %v4279 = vmul.f32 %v4175, %v4146
        %v4280 = vmul.f32 %v4175, %v4147
        %v4281 = vmul.f32 %v4175, %v4148
        %v4282 = vmul.f32 %v4175, %v4149
        %v4283 = vmul.f32 %v4175, %v4150
        %v4284 = vmul.f32 %v4175, %v4151
        %v4285 = vmul.f32 %v4175, %v4152
        %v4286 = vmul.f32 %v4175, %v4153
        %v4287 = vmul.f32 %v4175, %v4154
        %v4288 = vmul.f32 %v4175, %v4155
        %v4289 = vmul.f32 %v4175, %v4156
        %v4290 = vmul.f32 %v4175, %v4157
        %v4291 = vmul.f32 %v4175, %v4158
        %v4292 = vmul.f32 %v4175, %v4159
        %v4293 = vmul.f32 %v4175, %v4160
        %v4294 = vmul.f32 %v4175, %v4161
        %v4295 = vmul.f32 %v4175, %v4162
        %v4296 = vmul.f32 %v4175, %v4163
        %v4297 = vmul.f32 %v4175, %v4164
        %v4298 = vmul.f32 %v4175, %v4165
        %v4299 = vmul.f32 %v4175, %v4166
        %v4300 = vmul.f32 %v4175, %v4167
        %v4301 = vmul.f32 %v4175, %v4168
        %v4302 = vmul.f32 %v4175, %v4169
        %v4303 = vmul.f32 %v4175, %v4170
        %v4304 = vmul.f32 %v4175, %v4171
        %v4305 = vmul.f32 %v4175, %v4172
        %v4306 = vmul.f32 %v4175, %v4173
        %v4307 = vmul.f32 %v4175, %v4174
        %v4308 = vadd.f32 %v3910, %v4176
        %v4309 = vadd.f32 %v3911, %v4177
        %v4310 = vadd.f32 %v3912, %v4178
        %v4311 = vadd.f32 %v3913, %v4179
        %v4312 = vadd.f32 %v3914, %v4180
        %v4313 = vadd.f32 %v3915, %v4181
        %v4314 = vadd.f32 %v3916, %v4182
        %v4315 = vadd.f32 %v3917, %v4183
        %v4316 = vadd.f32 %v3918, %v4184
        %v4317 = vadd.f32 %v3919, %v4185
        %v4318 = vadd.f32 %v3920, %v4186
        %v4319 = vadd.f32 %v3921, %v4187
        %v4320 = vadd.f32 %v3922, %v4188
        %v4321 = vadd.f32 %v3923, %v4189
        %v4322 = vadd.f32 %v3924, %v4190
        %v4323 = vadd.f32 %v3925, %v4191
        %v4324 = vadd.f32 %v3926, %v4192
        %v4325 = vadd.f32 %v3927, %v4193
        %v4326 = vadd.f32 %v3928, %v4194
        %v4327 = vadd.f32 %v3929, %v4195
        %v4328 = vadd.f32 %v3930, %v4196
        %v4329 = vadd.f32 %v3931, %v4197
        %v4330 = vadd.f32 %v3932, %v4198
        %v4331 = vadd.f32 %v3933, %v4199
        %v4332 = vadd.f32 %v3934, %v4200
        %v4333 = vadd.f32 %v3935, %v4201
        %v4334 = vadd.f32 %v3936, %v4202
        %v4335 = vadd.f32 %v3937, %v4203
        %v4336 = vadd.f32 %v3938, %v4204
        %v4337 = vadd.f32 %v3939, %v4205
        %v4338 = vadd.f32 %v3940, %v4206
        %v4339 = vadd.f32 %v3941, %v4207
        %v4340 = vadd.f32 %v3942, %v4208
        %v4341 = vadd.f32 %v3943, %v4209
        %v4342 = vadd.f32 %v3944, %v4210
        %v4343 = vadd.f32 %v3945, %v4211
        %v4344 = vadd.f32 %v3946, %v4212
        %v4345 = vadd.f32 %v3947, %v4213
        %v4346 = vadd.f32 %v3948, %v4214
        %v4347 = vadd.f32 %v3949, %v4215
        %v4348 = vadd.f32 %v3950, %v4216
        %v4349 = vadd.f32 %v3951, %v4217
        %v4350 = vadd.f32 %v3952, %v4218
        %v4351 = vadd.f32 %v3953, %v4219
        %v4352 = vadd.f32 %v3954, %v4220
        %v4353 = vadd.f32 %v3955, %v4221
        %v4354 = vadd.f32 %v3956, %v4222
        %v4355 = vadd.f32 %v3957, %v4223
        %v4356 = vadd.f32 %v3958, %v4224
        %v4357 = vadd.f32 %v3959, %v4225
        %v4358 = vadd.f32 %v3960, %v4226
        %v4359 = vadd.f32 %v3961, %v4227
        %v4360 = vadd.f32 %v3962, %v4228
        %v4361 = vadd.f32 %v3963, %v4229
        %v4362 = vadd.f32 %v3964, %v4230
        %v4363 = vadd.f32 %v3965, %v4231
        %v4364 = vadd.f32 %v3966, %v4232
        %v4365 = vadd.f32 %v3967, %v4233
        %v4366 = vadd.f32 %v3968, %v4234
        %v4367 = vadd.f32 %v3969, %v4235
        %v4368 = vadd.f32 %v3970, %v4236
        %v4369 = vadd.f32 %v3971, %v4237
        %v4370 = vadd.f32 %v3972, %v4238
        %v4371 = vadd.f32 %v3973, %v4239
        %v4372 = vadd.f32 %v3974, %v4240
        %v4373 = vadd.f32 %v3975, %v4241
        %v4374 = vadd.f32 %v3976, %v4242
        %v4375 = vadd.f32 %v3977, %v4243
        %v4376 = vadd.f32 %v3978, %v4244
        %v4377 = vadd.f32 %v3979, %v4245
        %v4378 = vadd.f32 %v3980, %v4246
        %v4379 = vadd.f32 %v3981, %v4247
        %v4380 = vadd.f32 %v3982, %v4248
        %v4381 = vadd.f32 %v3983, %v4249
        %v4382 = vadd.f32 %v3984, %v4250
        %v4383 = vadd.f32 %v3985, %v4251
        %v4384 = vadd.f32 %v3986, %v4252
        %v4385 = vadd.f32 %v3987, %v4253
        %v4386 = vadd.f32 %v3988, %v4254
        %v4387 = vadd.f32 %v3989, %v4255
        %v4388 = vadd.f32 %v3990, %v4256
        %v4389 = vadd.f32 %v3991, %v4257
        %v4390 = vadd.f32 %v3992, %v4258
        %v4391 = vadd.f32 %v3993, %v4259
        %v4392 = vadd.f32 %v3994, %v4260
        %v4393 = vadd.f32 %v3995, %v4261
        %v4394 = vadd.f32 %v3996, %v4262
        %v4395 = vadd.f32 %v3997, %v4263
        %v4396 = vadd.f32 %v3998, %v4264
        %v4397 = vadd.f32 %v3999, %v4265
        %v4398 = vadd.f32 %v4000, %v4266
        %v4399 = vadd.f32 %v4001, %v4267
        %v4400 = vadd.f32 %v4002, %v4268
        %v4401 = vadd.f32 %v4003, %v4269
        %v4402 = vadd.f32 %v4004, %v4270
        %v4403 = vadd.f32 %v4005, %v4271
        %v4404 = vadd.f32 %v4006, %v4272
        %v4405 = vadd.f32 %v4007, %v4273
        %v4406 = vadd.f32 %v4008, %v4274
        %v4407 = vadd.f32 %v4009, %v4275
        %v4408 = vadd.f32 %v4010, %v4276
        %v4409 = vadd.f32 %v4011, %v4277
        %v4410 = vadd.f32 %v4012, %v4278
        %v4411 = vadd.f32 %v4013, %v4279
        %v4412 = vadd.f32 %v4014, %v4280
        %v4413 = vadd.f32 %v4015, %v4281
        %v4414 = vadd.f32 %v4016, %v4282
        %v4415 = vadd.f32 %v4017, %v4283
        %v4416 = vadd.f32 %v4018, %v4284
        %v4417 = vadd.f32 %v4019, %v4285
        %v4418 = vadd.f32 %v4020, %v4286
        %v4419 = vadd.f32 %v4021, %v4287
        %v4420 = vadd.f32 %v4022, %v4288
        %v4421 = vadd.f32 %v4023, %v4289
        %v4422 = vadd.f32 %v4024, %v4290
        %v4423 = vadd.f32 %v4025, %v4291
        %v4424 = vadd.f32 %v4026, %v4292
        %v4425 = vadd.f32 %v4027, %v4293
        %v4426 = vadd.f32 %v4028, %v4294
        %v4427 = vadd.f32 %v4029, %v4295
        %v4428 = vadd.f32 %v4030, %v4296
        %v4429 = vadd.f32 %v4031, %v4297
        %v4430 = vadd.f32 %v4032, %v4298
        %v4431 = vadd.f32 %v4033, %v4299
        %v4432 = vadd.f32 %v4034, %v4300
        %v4433 = vadd.f32 %v4035, %v4301
        %v4434 = vadd.f32 %v4036, %v4302
        %v4435 = vadd.f32 %v4037, %v4303
        %v4436 = vadd.f32 %v4038, %v4304
        %v4437 = vadd.f32 %v4039, %v4305
        %v4438 = vadd.f32 %v4040, %v4306
        %v4439 = vadd.f32 %v4041, %v4307
        %s4440 = sld [smem:[#allocation6 + $0xb]]
        %v4441 = vld [vmem:[%s156 + $0xb0] sm:$0xff]
        %v4442 = vld [vmem:[%s156 + $0xb8] sm:$0xff]
        %v4443 = vld [vmem:[%s156 + $0x170] sm:$0xff]
        %v4444 = vld [vmem:[%s156 + $0x178] sm:$0xff]
        %v4445 = vld [vmem:[%s156 + $0x230] sm:$0xff]
        %v4446 = vld [vmem:[%s156 + $0x238] sm:$0xff]
        %v4447 = vld [vmem:[%s156 + $0x2f0] sm:$0xff]
        %v4448 = vld [vmem:[%s156 + $0x2f8] sm:$0xff]
        %v4449 = vld [vmem:[%s156 + $0x3b0] sm:$0xff]
        %v4450 = vld [vmem:[%s156 + $0x3b8] sm:$0xff]
        %v4451 = vld [vmem:[%s156 + $0x470] sm:$0xff]
        %v4452 = vld [vmem:[%s156 + $0x478] sm:$0xff]
        %v4453 = vld [vmem:[%s156 + $0x530] sm:$0xff]
        %v4454 = vld [vmem:[%s156 + $0x538] sm:$0xff]
        %v4455 = vld [vmem:[%s156 + $0x5f0] sm:$0xff]
        %v4456 = vld [vmem:[%s156 + $0x5f8] sm:$0xff]
        %v4457 = vld [vmem:[%s156 + $0x6b0] sm:$0xff]
        %v4458 = vld [vmem:[%s156 + $0x6b8] sm:$0xff]
        %v4459 = vld [vmem:[%s156 + $0x770] sm:$0xff]
        %v4460 = vld [vmem:[%s156 + $0x778] sm:$0xff]
        %v4461 = vld [vmem:[%s156 + $0x830] sm:$0xff]
        %v4462 = vld [vmem:[%s156 + $0x838] sm:$0xff]
        %v4463 = vld [vmem:[%s156 + $0x8f0] sm:$0xff]
        %v4464 = vld [vmem:[%s156 + $0x8f8] sm:$0xff]
        %v4465 = vld [vmem:[%s156 + $0x9b0] sm:$0xff]
        %v4466 = vld [vmem:[%s156 + $0x9b8] sm:$0xff]
        %v4467 = vld [vmem:[%s156 + $0xa70] sm:$0xff]
        %v4468 = vld [vmem:[%s156 + $0xa78] sm:$0xff]
        %v4469 = vld [vmem:[%s156 + $0xb30] sm:$0xff]
        %v4470 = vld [vmem:[%s156 + $0xb38] sm:$0xff]
        %v4471 = vld [vmem:[%s156 + $0xbf0] sm:$0xff]
        %v4472 = vld [vmem:[%s156 + $0xbf8] sm:$0xff]
        %v4473 = vld [vmem:[%s156 + $0xcb0] sm:$0xff]
        %v4474 = vld [vmem:[%s156 + $0xcb8] sm:$0xff]
        %v4475 = vld [vmem:[%s156 + $0xd70] sm:$0xff]
        %v4476 = vld [vmem:[%s156 + $0xd78] sm:$0xff]
        %v4477 = vld [vmem:[%s156 + $0xe30] sm:$0xff]
        %v4478 = vld [vmem:[%s156 + $0xe38] sm:$0xff]
        %v4479 = vld [vmem:[%s156 + $0xef0] sm:$0xff]
        %v4480 = vld [vmem:[%s156 + $0xef8] sm:$0xff]
        %v4481 = vld [vmem:[%s156 + $0xfb0] sm:$0xff]
        %v4482 = vld [vmem:[%s156 + $0xfb8] sm:$0xff]
        %v4483 = vld [vmem:[%s156 + $0x1070] sm:$0xff]
        %v4484 = vld [vmem:[%s156 + $0x1078] sm:$0xff]
        %v4485 = vld [vmem:[%s156 + $0x1130] sm:$0xff]
        %v4486 = vld [vmem:[%s156 + $0x1138] sm:$0xff]
        %v4487 = vld [vmem:[%s156 + $0x11f0] sm:$0xff]
        %v4488 = vld [vmem:[%s156 + $0x11f8] sm:$0xff]
        %v4489 = vld [vmem:[%s156 + $0x12b0] sm:$0xff]
        %v4490 = vld [vmem:[%s156 + $0x12b8] sm:$0xff]
        %v4491 = vld [vmem:[%s156 + $0x1370] sm:$0xff]
        %v4492 = vld [vmem:[%s156 + $0x1378] sm:$0xff]
        %v4493 = vld [vmem:[%s156 + $0x1430] sm:$0xff]
        %v4494 = vld [vmem:[%s156 + $0x1438] sm:$0xff]
        %v4495 = vld [vmem:[%s156 + $0x14f0] sm:$0xff]
        %v4496 = vld [vmem:[%s156 + $0x14f8] sm:$0xff]
        %v4497 = vld [vmem:[%s156 + $0x15b0] sm:$0xff]
        %v4498 = vld [vmem:[%s156 + $0x15b8] sm:$0xff]
        %v4499 = vld [vmem:[%s156 + $0x1670] sm:$0xff]
        %v4500 = vld [vmem:[%s156 + $0x1678] sm:$0xff]
        %v4501 = vld [vmem:[%s156 + $0x1730] sm:$0xff]
        %v4502 = vld [vmem:[%s156 + $0x1738] sm:$0xff]
        %v4503 = vld [vmem:[%s156 + $0x17f0] sm:$0xff]
        %v4504 = vld [vmem:[%s156 + $0x17f8] sm:$0xff]
        %v4505 = vld [vmem:[%s156 + $0x18b0] sm:$0xff]
        %v4506 = vld [vmem:[%s156 + $0x18b8] sm:$0xff]
        %v4507 = vld [vmem:[%s156 + $0x1970] sm:$0xff]
        %v4508 = vld [vmem:[%s156 + $0x1978] sm:$0xff]
        %v4509 = vld [vmem:[%s156 + $0x1a30] sm:$0xff]
        %v4510 = vld [vmem:[%s156 + $0x1a38] sm:$0xff]
        %v4511 = vld [vmem:[%s156 + $0x1af0] sm:$0xff]
        %v4512 = vld [vmem:[%s156 + $0x1af8] sm:$0xff]
        %v4513 = vld [vmem:[%s156 + $0x1bb0] sm:$0xff]
        %v4514 = vld [vmem:[%s156 + $0x1bb8] sm:$0xff]
        %v4515 = vld [vmem:[%s156 + $0x1c70] sm:$0xff]
        %v4516 = vld [vmem:[%s156 + $0x1c78] sm:$0xff]
        %v4517 = vld [vmem:[%s156 + $0x1d30] sm:$0xff]
        %v4518 = vld [vmem:[%s156 + $0x1d38] sm:$0xff]
        %v4519 = vld [vmem:[%s156 + $0x1df0] sm:$0xff]
        %v4520 = vld [vmem:[%s156 + $0x1df8] sm:$0xff]
        %v4521 = vld [vmem:[%s156 + $0x1eb0] sm:$0xff]
        %v4522 = vld [vmem:[%s156 + $0x1eb8] sm:$0xff]
        %v4523 = vld [vmem:[%s156 + $0x1f70] sm:$0xff]
        %v4524 = vld [vmem:[%s156 + $0x1f78] sm:$0xff]
        %v4525 = vld [vmem:[%s156 + $0x2030] sm:$0xff]
        %v4526 = vld [vmem:[%s156 + $0x2038] sm:$0xff]
        %v4527 = vld [vmem:[%s156 + $0x20f0] sm:$0xff]
        %v4528 = vld [vmem:[%s156 + $0x20f8] sm:$0xff]
        %v4529 = vld [vmem:[%s156 + $0x21b0] sm:$0xff]
        %v4530 = vld [vmem:[%s156 + $0x21b8] sm:$0xff]
        %v4531 = vld [vmem:[%s156 + $0x2270] sm:$0xff]
        %v4532 = vld [vmem:[%s156 + $0x2278] sm:$0xff]
        %v4533 = vld [vmem:[%s156 + $0x2330] sm:$0xff]
        %v4534 = vld [vmem:[%s156 + $0x2338] sm:$0xff]
        %v4535 = vld [vmem:[%s156 + $0x23f0] sm:$0xff]
        %v4536 = vld [vmem:[%s156 + $0x23f8] sm:$0xff]
        %v4537 = vld [vmem:[%s156 + $0x24b0] sm:$0xff]
        %v4538 = vld [vmem:[%s156 + $0x24b8] sm:$0xff]
        %v4539 = vld [vmem:[%s156 + $0x2570] sm:$0xff]
        %v4540 = vld [vmem:[%s156 + $0x2578] sm:$0xff]
        %v4541 = vld [vmem:[%s156 + $0x2630] sm:$0xff]
        %v4542 = vld [vmem:[%s156 + $0x2638] sm:$0xff]
        %v4543 = vld [vmem:[%s156 + $0x26f0] sm:$0xff]
        %v4544 = vld [vmem:[%s156 + $0x26f8] sm:$0xff]
        %v4545 = vld [vmem:[%s156 + $0x27b0] sm:$0xff]
        %v4546 = vld [vmem:[%s156 + $0x27b8] sm:$0xff]
        %v4547 = vld [vmem:[%s156 + $0x2870] sm:$0xff]
        %v4548 = vld [vmem:[%s156 + $0x2878] sm:$0xff]
        %v4549 = vld [vmem:[%s156 + $0x2930] sm:$0xff]
        %v4550 = vld [vmem:[%s156 + $0x2938] sm:$0xff]
        %v4551 = vld [vmem:[%s156 + $0x29f0] sm:$0xff]
        %v4552 = vld [vmem:[%s156 + $0x29f8] sm:$0xff]
        %v4553 = vld [vmem:[%s156 + $0x2ab0] sm:$0xff]
        %v4554 = vld [vmem:[%s156 + $0x2ab8] sm:$0xff]
        %v4555 = vld [vmem:[%s156 + $0x2b70] sm:$0xff]
        %v4556 = vld [vmem:[%s156 + $0x2b78] sm:$0xff]
        %v4557 = vld [vmem:[%s156 + $0x2c30] sm:$0xff]
        %v4558 = vld [vmem:[%s156 + $0x2c38] sm:$0xff]
        %v4559 = vld [vmem:[%s156 + $0x2cf0] sm:$0xff]
        %v4560 = vld [vmem:[%s156 + $0x2cf8] sm:$0xff]
        %v4561 = vld [vmem:[%s156 + $0x2db0] sm:$0xff]
        %v4562 = vld [vmem:[%s156 + $0x2db8] sm:$0xff]
        %v4563 = vld [vmem:[%s156 + $0x2e70] sm:$0xff]
        %v4564 = vld [vmem:[%s156 + $0x2e78] sm:$0xff]
        %v4565 = vld [vmem:[%s156 + $0x2f30] sm:$0xff]
        %v4566 = vld [vmem:[%s156 + $0x2f38] sm:$0xff]
        %v4567 = vld [vmem:[%s156 + $0x2ff0] sm:$0xff]
        %v4568 = vld [vmem:[%s156 + $0x2ff8] sm:$0xff]
        %v4569 = vld [vmem:[%s156 + $0x30b0] sm:$0xff]
        %v4570 = vld [vmem:[%s156 + $0x30b8] sm:$0xff]
        %v4571 = vld [vmem:[%s156 + $0x3170] sm:$0xff]
        %v4572 = vld [vmem:[%s156 + $0x3178] sm:$0xff]
        %v4573 = vstv %s4440
        %v4574 = vmul.f32 %v4573, %v4441
        %v4575 = vmul.f32 %v4573, %v4442
        %v4576 = vmul.f32 %v4573, %v4443
        %v4577 = vmul.f32 %v4573, %v4444
        %v4578 = vmul.f32 %v4573, %v4445
        %v4579 = vmul.f32 %v4573, %v4446
        %v4580 = vmul.f32 %v4573, %v4447
        %v4581 = vmul.f32 %v4573, %v4448
        %v4582 = vmul.f32 %v4573, %v4449
        %v4583 = vmul.f32 %v4573, %v4450
        %v4584 = vmul.f32 %v4573, %v4451
        %v4585 = vmul.f32 %v4573, %v4452
        %v4586 = vmul.f32 %v4573, %v4453
        %v4587 = vmul.f32 %v4573, %v4454
        %v4588 = vmul.f32 %v4573, %v4455
        %v4589 = vmul.f32 %v4573, %v4456
        %v4590 = vmul.f32 %v4573, %v4457
        %v4591 = vmul.f32 %v4573, %v4458
        %v4592 = vmul.f32 %v4573, %v4459
        %v4593 = vmul.f32 %v4573, %v4460
        %v4594 = vmul.f32 %v4573, %v4461
        %v4595 = vmul.f32 %v4573, %v4462
        %v4596 = vmul.f32 %v4573, %v4463
        %v4597 = vmul.f32 %v4573, %v4464
        %v4598 = vmul.f32 %v4573, %v4465
        %v4599 = vmul.f32 %v4573, %v4466
        %v4600 = vmul.f32 %v4573, %v4467
        %v4601 = vmul.f32 %v4573, %v4468
        %v4602 = vmul.f32 %v4573, %v4469
        %v4603 = vmul.f32 %v4573, %v4470
        %v4604 = vmul.f32 %v4573, %v4471
        %v4605 = vmul.f32 %v4573, %v4472
        %v4606 = vmul.f32 %v4573, %v4473
        %v4607 = vmul.f32 %v4573, %v4474
        %v4608 = vmul.f32 %v4573, %v4475
        %v4609 = vmul.f32 %v4573, %v4476
        %v4610 = vmul.f32 %v4573, %v4477
        %v4611 = vmul.f32 %v4573, %v4478
        %v4612 = vmul.f32 %v4573, %v4479
        %v4613 = vmul.f32 %v4573, %v4480
        %v4614 = vmul.f32 %v4573, %v4481
        %v4615 = vmul.f32 %v4573, %v4482
        %v4616 = vmul.f32 %v4573, %v4483
        %v4617 = vmul.f32 %v4573, %v4484
        %v4618 = vmul.f32 %v4573, %v4485
        %v4619 = vmul.f32 %v4573, %v4486
        %v4620 = vmul.f32 %v4573, %v4487
        %v4621 = vmul.f32 %v4573, %v4488
        %v4622 = vmul.f32 %v4573, %v4489
        %v4623 = vmul.f32 %v4573, %v4490
        %v4624 = vmul.f32 %v4573, %v4491
        %v4625 = vmul.f32 %v4573, %v4492
        %v4626 = vmul.f32 %v4573, %v4493
        %v4627 = vmul.f32 %v4573, %v4494
        %v4628 = vmul.f32 %v4573, %v4495
        %v4629 = vmul.f32 %v4573, %v4496
        %v4630 = vmul.f32 %v4573, %v4497
        %v4631 = vmul.f32 %v4573, %v4498
        %v4632 = vmul.f32 %v4573, %v4499
        %v4633 = vmul.f32 %v4573, %v4500
        %v4634 = vmul.f32 %v4573, %v4501
        %v4635 = vmul.f32 %v4573, %v4502
        %v4636 = vmul.f32 %v4573, %v4503
        %v4637 = vmul.f32 %v4573, %v4504
        %v4638 = vmul.f32 %v4573, %v4505
        %v4639 = vmul.f32 %v4573, %v4506
        %v4640 = vmul.f32 %v4573, %v4507
        %v4641 = vmul.f32 %v4573, %v4508
        %v4642 = vmul.f32 %v4573, %v4509
        %v4643 = vmul.f32 %v4573, %v4510
        %v4644 = vmul.f32 %v4573, %v4511
        %v4645 = vmul.f32 %v4573, %v4512
        %v4646 = vmul.f32 %v4573, %v4513
        %v4647 = vmul.f32 %v4573, %v4514
        %v4648 = vmul.f32 %v4573, %v4515
        %v4649 = vmul.f32 %v4573, %v4516
        %v4650 = vmul.f32 %v4573, %v4517
        %v4651 = vmul.f32 %v4573, %v4518
        %v4652 = vmul.f32 %v4573, %v4519
        %v4653 = vmul.f32 %v4573, %v4520
        %v4654 = vmul.f32 %v4573, %v4521
        %v4655 = vmul.f32 %v4573, %v4522
        %v4656 = vmul.f32 %v4573, %v4523
        %v4657 = vmul.f32 %v4573, %v4524
        %v4658 = vmul.f32 %v4573, %v4525
        %v4659 = vmul.f32 %v4573, %v4526
        %v4660 = vmul.f32 %v4573, %v4527
        %v4661 = vmul.f32 %v4573, %v4528
        %v4662 = vmul.f32 %v4573, %v4529
        %v4663 = vmul.f32 %v4573, %v4530
        %v4664 = vmul.f32 %v4573, %v4531
        %v4665 = vmul.f32 %v4573, %v4532
        %v4666 = vmul.f32 %v4573, %v4533
        %v4667 = vmul.f32 %v4573, %v4534
        %v4668 = vmul.f32 %v4573, %v4535
        %v4669 = vmul.f32 %v4573, %v4536
        %v4670 = vmul.f32 %v4573, %v4537
        %v4671 = vmul.f32 %v4573, %v4538
        %v4672 = vmul.f32 %v4573, %v4539
        %v4673 = vmul.f32 %v4573, %v4540
        %v4674 = vmul.f32 %v4573, %v4541
        %v4675 = vmul.f32 %v4573, %v4542
        %v4676 = vmul.f32 %v4573, %v4543
        %v4677 = vmul.f32 %v4573, %v4544
        %v4678 = vmul.f32 %v4573, %v4545
        %v4679 = vmul.f32 %v4573, %v4546
        %v4680 = vmul.f32 %v4573, %v4547
        %v4681 = vmul.f32 %v4573, %v4548
        %v4682 = vmul.f32 %v4573, %v4549
        %v4683 = vmul.f32 %v4573, %v4550
        %v4684 = vmul.f32 %v4573, %v4551
        %v4685 = vmul.f32 %v4573, %v4552
        %v4686 = vmul.f32 %v4573, %v4553
        %v4687 = vmul.f32 %v4573, %v4554
        %v4688 = vmul.f32 %v4573, %v4555
        %v4689 = vmul.f32 %v4573, %v4556
        %v4690 = vmul.f32 %v4573, %v4557
        %v4691 = vmul.f32 %v4573, %v4558
        %v4692 = vmul.f32 %v4573, %v4559
        %v4693 = vmul.f32 %v4573, %v4560
        %v4694 = vmul.f32 %v4573, %v4561
        %v4695 = vmul.f32 %v4573, %v4562
        %v4696 = vmul.f32 %v4573, %v4563
        %v4697 = vmul.f32 %v4573, %v4564
        %v4698 = vmul.f32 %v4573, %v4565
        %v4699 = vmul.f32 %v4573, %v4566
        %v4700 = vmul.f32 %v4573, %v4567
        %v4701 = vmul.f32 %v4573, %v4568
        %v4702 = vmul.f32 %v4573, %v4569
        %v4703 = vmul.f32 %v4573, %v4570
        %v4704 = vmul.f32 %v4573, %v4571
        %v4705 = vmul.f32 %v4573, %v4572
        %v4706 = vadd.f32 %v4308, %v4574
        %v4707 = vadd.f32 %v4309, %v4575
        %v4708 = vadd.f32 %v4310, %v4576
        %v4709 = vadd.f32 %v4311, %v4577
        %v4710 = vadd.f32 %v4312, %v4578
        %v4711 = vadd.f32 %v4313, %v4579
        %v4712 = vadd.f32 %v4314, %v4580
        %v4713 = vadd.f32 %v4315, %v4581
        %v4714 = vadd.f32 %v4316, %v4582
        %v4715 = vadd.f32 %v4317, %v4583
        %v4716 = vadd.f32 %v4318, %v4584
        %v4717 = vadd.f32 %v4319, %v4585
        %v4718 = vadd.f32 %v4320, %v4586
        %v4719 = vadd.f32 %v4321, %v4587
        %v4720 = vadd.f32 %v4322, %v4588
        %v4721 = vadd.f32 %v4323, %v4589
        %v4722 = vadd.f32 %v4324, %v4590
        %v4723 = vadd.f32 %v4325, %v4591
        %v4724 = vadd.f32 %v4326, %v4592
        %v4725 = vadd.f32 %v4327, %v4593
        %v4726 = vadd.f32 %v4328, %v4594
        %v4727 = vadd.f32 %v4329, %v4595
        %v4728 = vadd.f32 %v4330, %v4596
        %v4729 = vadd.f32 %v4331, %v4597
        %v4730 = vadd.f32 %v4332, %v4598
        %v4731 = vadd.f32 %v4333, %v4599
        %v4732 = vadd.f32 %v4334, %v4600
        %v4733 = vadd.f32 %v4335, %v4601
        %v4734 = vadd.f32 %v4336, %v4602
        %v4735 = vadd.f32 %v4337, %v4603
        %v4736 = vadd.f32 %v4338, %v4604
        %v4737 = vadd.f32 %v4339, %v4605
        %v4738 = vadd.f32 %v4340, %v4606
        %v4739 = vadd.f32 %v4341, %v4607
        %v4740 = vadd.f32 %v4342, %v4608
        %v4741 = vadd.f32 %v4343, %v4609
        %v4742 = vadd.f32 %v4344, %v4610
        %v4743 = vadd.f32 %v4345, %v4611
        %v4744 = vadd.f32 %v4346, %v4612
        %v4745 = vadd.f32 %v4347, %v4613
        %v4746 = vadd.f32 %v4348, %v4614
        %v4747 = vadd.f32 %v4349, %v4615
        %v4748 = vadd.f32 %v4350, %v4616
        %v4749 = vadd.f32 %v4351, %v4617
        %v4750 = vadd.f32 %v4352, %v4618
        %v4751 = vadd.f32 %v4353, %v4619
        %v4752 = vadd.f32 %v4354, %v4620
        %v4753 = vadd.f32 %v4355, %v4621
        %v4754 = vadd.f32 %v4356, %v4622
        %v4755 = vadd.f32 %v4357, %v4623
        %v4756 = vadd.f32 %v4358, %v4624
        %v4757 = vadd.f32 %v4359, %v4625
        %v4758 = vadd.f32 %v4360, %v4626
        %v4759 = vadd.f32 %v4361, %v4627
        %v4760 = vadd.f32 %v4362, %v4628
        %v4761 = vadd.f32 %v4363, %v4629
        %v4762 = vadd.f32 %v4364, %v4630
        %v4763 = vadd.f32 %v4365, %v4631
        %v4764 = vadd.f32 %v4366, %v4632
        %v4765 = vadd.f32 %v4367, %v4633
        %v4766 = vadd.f32 %v4368, %v4634
        %v4767 = vadd.f32 %v4369, %v4635
        %v4768 = vadd.f32 %v4370, %v4636
        %v4769 = vadd.f32 %v4371, %v4637
        %v4770 = vadd.f32 %v4372, %v4638
        %v4771 = vadd.f32 %v4373, %v4639
        %v4772 = vadd.f32 %v4374, %v4640
        %v4773 = vadd.f32 %v4375, %v4641
        %v4774 = vadd.f32 %v4376, %v4642
        %v4775 = vadd.f32 %v4377, %v4643
        %v4776 = vadd.f32 %v4378, %v4644
        %v4777 = vadd.f32 %v4379, %v4645
        %v4778 = vadd.f32 %v4380, %v4646
        %v4779 = vadd.f32 %v4381, %v4647
        %v4780 = vadd.f32 %v4382, %v4648
        %v4781 = vadd.f32 %v4383, %v4649
        %v4782 = vadd.f32 %v4384, %v4650
        %v4783 = vadd.f32 %v4385, %v4651
        %v4784 = vadd.f32 %v4386, %v4652
        %v4785 = vadd.f32 %v4387, %v4653
        %v4786 = vadd.f32 %v4388, %v4654
        %v4787 = vadd.f32 %v4389, %v4655
        %v4788 = vadd.f32 %v4390, %v4656
        %v4789 = vadd.f32 %v4391, %v4657
        %v4790 = vadd.f32 %v4392, %v4658
        %v4791 = vadd.f32 %v4393, %v4659
        %v4792 = vadd.f32 %v4394, %v4660
        %v4793 = vadd.f32 %v4395, %v4661
        %v4794 = vadd.f32 %v4396, %v4662
        %v4795 = vadd.f32 %v4397, %v4663
        %v4796 = vadd.f32 %v4398, %v4664
        %v4797 = vadd.f32 %v4399, %v4665
        %v4798 = vadd.f32 %v4400, %v4666
        %v4799 = vadd.f32 %v4401, %v4667
        %v4800 = vadd.f32 %v4402, %v4668
        %v4801 = vadd.f32 %v4403, %v4669
        %v4802 = vadd.f32 %v4404, %v4670
        %v4803 = vadd.f32 %v4405, %v4671
        %v4804 = vadd.f32 %v4406, %v4672
        %v4805 = vadd.f32 %v4407, %v4673
        %v4806 = vadd.f32 %v4408, %v4674
        %v4807 = vadd.f32 %v4409, %v4675
        %v4808 = vadd.f32 %v4410, %v4676
        %v4809 = vadd.f32 %v4411, %v4677
        %v4810 = vadd.f32 %v4412, %v4678
        %v4811 = vadd.f32 %v4413, %v4679
        %v4812 = vadd.f32 %v4414, %v4680
        %v4813 = vadd.f32 %v4415, %v4681
        %v4814 = vadd.f32 %v4416, %v4682
        %v4815 = vadd.f32 %v4417, %v4683
        %v4816 = vadd.f32 %v4418, %v4684
        %v4817 = vadd.f32 %v4419, %v4685
        %v4818 = vadd.f32 %v4420, %v4686
        %v4819 = vadd.f32 %v4421, %v4687
        %v4820 = vadd.f32 %v4422, %v4688
        %v4821 = vadd.f32 %v4423, %v4689
        %v4822 = vadd.f32 %v4424, %v4690
        %v4823 = vadd.f32 %v4425, %v4691
        %v4824 = vadd.f32 %v4426, %v4692
        %v4825 = vadd.f32 %v4427, %v4693
        %v4826 = vadd.f32 %v4428, %v4694
        %v4827 = vadd.f32 %v4429, %v4695
        %v4828 = vadd.f32 %v4430, %v4696
        %v4829 = vadd.f32 %v4431, %v4697
        %v4830 = vadd.f32 %v4432, %v4698
        %v4831 = vadd.f32 %v4433, %v4699
        %v4832 = vadd.f32 %v4434, %v4700
        %v4833 = vadd.f32 %v4435, %v4701
        %v4834 = vadd.f32 %v4436, %v4702
        %v4835 = vadd.f32 %v4437, %v4703
        %v4836 = vadd.f32 %v4438, %v4704
        %v4837 = vadd.f32 %v4439, %v4705
        %4838 = vst [vmem:[%s181] sm:$0xff] %v4706
        %4839 = vst [vmem:[%s181 + $0x8] sm:$0xff] %v4707
        %4840 = vst [vmem:[%s181 + $0x10] sm:$0xff] %v4708
        %4841 = vst [vmem:[%s181 + $0x18] sm:$0xff] %v4709
        %4842 = vst [vmem:[%s181 + $0x20] sm:$0xff] %v4710
        %4843 = vst [vmem:[%s181 + $0x28] sm:$0xff] %v4711
        %4844 = vst [vmem:[%s181 + $0x30] sm:$0xff] %v4712
        %4845 = vst [vmem:[%s181 + $0x38] sm:$0xff] %v4713
        %4846 = vst [vmem:[%s181 + $0x40] sm:$0xff] %v4714
        %4847 = vst [vmem:[%s181 + $0x48] sm:$0xff] %v4715
        %4848 = vst [vmem:[%s181 + $0x50] sm:$0xff] %v4716
        %4849 = vst [vmem:[%s181 + $0x58] sm:$0xff] %v4717
        %4850 = vst [vmem:[%s181 + $0x60] sm:$0xff] %v4718
        %4851 = vst [vmem:[%s181 + $0x68] sm:$0xff] %v4719
        %4852 = vst [vmem:[%s181 + $0x70] sm:$0xff] %v4720
        %4853 = vst [vmem:[%s181 + $0x78] sm:$0xff] %v4721
        %4854 = vst [vmem:[%s181 + $0x80] sm:$0xff] %v4722
        %4855 = vst [vmem:[%s181 + $0x88] sm:$0xff] %v4723
        %4856 = vst [vmem:[%s181 + $0x90] sm:$0xff] %v4724
        %4857 = vst [vmem:[%s181 + $0x98] sm:$0xff] %v4725
        %4858 = vst [vmem:[%s181 + $0xa0] sm:$0xff] %v4726
        %4859 = vst [vmem:[%s181 + $0xa8] sm:$0xff] %v4727
        %4860 = vst [vmem:[%s181 + $0xb0] sm:$0xff] %v4728
        %4861 = vst [vmem:[%s181 + $0xb8] sm:$0xff] %v4729
        %4862 = vst [vmem:[%s181 + $0xc0] sm:$0xff] %v4730
        %4863 = vst [vmem:[%s181 + $0xc8] sm:$0xff] %v4731
        %4864 = vst [vmem:[%s181 + $0xd0] sm:$0xff] %v4732
        %4865 = vst [vmem:[%s181 + $0xd8] sm:$0xff] %v4733
        %4866 = vst [vmem:[%s181 + $0xe0] sm:$0xff] %v4734
        %4867 = vst [vmem:[%s181 + $0xe8] sm:$0xff] %v4735
        %4868 = vst [vmem:[%s181 + $0xf0] sm:$0xff] %v4736
        %4869 = vst [vmem:[%s181 + $0xf8] sm:$0xff] %v4737
        %4870 = vst [vmem:[%s181 + $0x100] sm:$0xff] %v4738
        %4871 = vst [vmem:[%s181 + $0x108] sm:$0xff] %v4739
        %4872 = vst [vmem:[%s181 + $0x110] sm:$0xff] %v4740
        %4873 = vst [vmem:[%s181 + $0x118] sm:$0xff] %v4741
        %4874 = vst [vmem:[%s181 + $0x120] sm:$0xff] %v4742
        %4875 = vst [vmem:[%s181 + $0x128] sm:$0xff] %v4743
        %4876 = vst [vmem:[%s181 + $0x130] sm:$0xff] %v4744
        %4877 = vst [vmem:[%s181 + $0x138] sm:$0xff] %v4745
        %4878 = vst [vmem:[%s181 + $0x140] sm:$0xff] %v4746
        %4879 = vst [vmem:[%s181 + $0x148] sm:$0xff] %v4747
        %4880 = vst [vmem:[%s181 + $0x150] sm:$0xff] %v4748
        %4881 = vst [vmem:[%s181 + $0x158] sm:$0xff] %v4749
        %4882 = vst [vmem:[%s181 + $0x160] sm:$0xff] %v4750
        %4883 = vst [vmem:[%s181 + $0x168] sm:$0xff] %v4751
        %4884 = vst [vmem:[%s181 + $0x170] sm:$0xff] %v4752
        %4885 = vst [vmem:[%s181 + $0x178] sm:$0xff] %v4753
        %4886 = vst [vmem:[%s181 + $0x180] sm:$0xff] %v4754
        %4887 = vst [vmem:[%s181 + $0x188] sm:$0xff] %v4755
        %4888 = vst [vmem:[%s181 + $0x190] sm:$0xff] %v4756
        %4889 = vst [vmem:[%s181 + $0x198] sm:$0xff] %v4757
        %4890 = vst [vmem:[%s181 + $0x1a0] sm:$0xff] %v4758
        %4891 = vst [vmem:[%s181 + $0x1a8] sm:$0xff] %v4759
        %4892 = vst [vmem:[%s181 + $0x1b0] sm:$0xff] %v4760
        %4893 = vst [vmem:[%s181 + $0x1b8] sm:$0xff] %v4761
        %4894 = vst [vmem:[%s181 + $0x1c0] sm:$0xff] %v4762
        %4895 = vst [vmem:[%s181 + $0x1c8] sm:$0xff] %v4763
        %4896 = vst [vmem:[%s181 + $0x1d0] sm:$0xff] %v4764
        %4897 = vst [vmem:[%s181 + $0x1d8] sm:$0xff] %v4765
        %4898 = vst [vmem:[%s181 + $0x1e0] sm:$0xff] %v4766
        %4899 = vst [vmem:[%s181 + $0x1e8] sm:$0xff] %v4767
        %4900 = vst [vmem:[%s181 + $0x1f0] sm:$0xff] %v4768
        %4901 = vst [vmem:[%s181 + $0x1f8] sm:$0xff] %v4769
        %4902 = vst [vmem:[%s181 + $0x200] sm:$0xff] %v4770
        %4903 = vst [vmem:[%s181 + $0x208] sm:$0xff] %v4771
        %4904 = vst [vmem:[%s181 + $0x210] sm:$0xff] %v4772
        %4905 = vst [vmem:[%s181 + $0x218] sm:$0xff] %v4773
        %4906 = vst [vmem:[%s181 + $0x220] sm:$0xff] %v4774
        %4907 = vst [vmem:[%s181 + $0x228] sm:$0xff] %v4775
        %4908 = vst [vmem:[%s181 + $0x230] sm:$0xff] %v4776
        %4909 = vst [vmem:[%s181 + $0x238] sm:$0xff] %v4777
        %4910 = vst [vmem:[%s181 + $0x240] sm:$0xff] %v4778
        %4911 = vst [vmem:[%s181 + $0x248] sm:$0xff] %v4779
        %4912 = vst [vmem:[%s181 + $0x250] sm:$0xff] %v4780
        %4913 = vst [vmem:[%s181 + $0x258] sm:$0xff] %v4781
        %4914 = vst [vmem:[%s181 + $0x260] sm:$0xff] %v4782
        %4915 = vst [vmem:[%s181 + $0x268] sm:$0xff] %v4783
        %4916 = vst [vmem:[%s181 + $0x270] sm:$0xff] %v4784
        %4917 = vst [vmem:[%s181 + $0x278] sm:$0xff] %v4785
        %4918 = vst [vmem:[%s181 + $0x280] sm:$0xff] %v4786
        %4919 = vst [vmem:[%s181 + $0x288] sm:$0xff] %v4787
        %4920 = vst [vmem:[%s181 + $0x290] sm:$0xff] %v4788
        %4921 = vst [vmem:[%s181 + $0x298] sm:$0xff] %v4789
        %4922 = vst [vmem:[%s181 + $0x2a0] sm:$0xff] %v4790
        %4923 = vst [vmem:[%s181 + $0x2a8] sm:$0xff] %v4791
        %4924 = vst [vmem:[%s181 + $0x2b0] sm:$0xff] %v4792
        %4925 = vst [vmem:[%s181 + $0x2b8] sm:$0xff] %v4793
        %4926 = vst [vmem:[%s181 + $0x2c0] sm:$0xff] %v4794
        %4927 = vst [vmem:[%s181 + $0x2c8] sm:$0xff] %v4795
        %4928 = vst [vmem:[%s181 + $0x2d0] sm:$0xff] %v4796
        %4929 = vst [vmem:[%s181 + $0x2d8] sm:$0xff] %v4797
        %4930 = vst [vmem:[%s181 + $0x2e0] sm:$0xff] %v4798
        %4931 = vst [vmem:[%s181 + $0x2e8] sm:$0xff] %v4799
        %4932 = vst [vmem:[%s181 + $0x2f0] sm:$0xff] %v4800
        %4933 = vst [vmem:[%s181 + $0x2f8] sm:$0xff] %v4801
        %4934 = vst [vmem:[%s181 + $0x300] sm:$0xff] %v4802
        %4935 = vst [vmem:[%s181 + $0x308] sm:$0xff] %v4803
        %4936 = vst [vmem:[%s181 + $0x310] sm:$0xff] %v4804
        %4937 = vst [vmem:[%s181 + $0x318] sm:$0xff] %v4805
        %4938 = vst [vmem:[%s181 + $0x320] sm:$0xff] %v4806
        %4939 = vst [vmem:[%s181 + $0x328] sm:$0xff] %v4807
        %4940 = vst [vmem:[%s181 + $0x330] sm:$0xff] %v4808
        %4941 = vst [vmem:[%s181 + $0x338] sm:$0xff] %v4809
        %4942 = vst [vmem:[%s181 + $0x340] sm:$0xff] %v4810
        %4943 = vst [vmem:[%s181 + $0x348] sm:$0xff] %v4811
        %4944 = vst [vmem:[%s181 + $0x350] sm:$0xff] %v4812
        %4945 = vst [vmem:[%s181 + $0x358] sm:$0xff] %v4813
        %4946 = vst [vmem:[%s181 + $0x360] sm:$0xff] %v4814
        %4947 = vst [vmem:[%s181 + $0x368] sm:$0xff] %v4815
        %4948 = vst [vmem:[%s181 + $0x370] sm:$0xff] %v4816
        %4949 = vst [vmem:[%s181 + $0x378] sm:$0xff] %v4817
        %4950 = vst [vmem:[%s181 + $0x380] sm:$0xff] %v4818
        %4951 = vst [vmem:[%s181 + $0x388] sm:$0xff] %v4819
        %4952 = vst [vmem:[%s181 + $0x390] sm:$0xff] %v4820
        %4953 = vst [vmem:[%s181 + $0x398] sm:$0xff] %v4821
        %4954 = vst [vmem:[%s181 + $0x3a0] sm:$0xff] %v4822
        %4955 = vst [vmem:[%s181 + $0x3a8] sm:$0xff] %v4823
        %4956 = vst [vmem:[%s181 + $0x3b0] sm:$0xff] %v4824
        %4957 = vst [vmem:[%s181 + $0x3b8] sm:$0xff] %v4825
        %4958 = vst [vmem:[%s181 + $0x3c0] sm:$0xff] %v4826
        %4959 = vst [vmem:[%s181 + $0x3c8] sm:$0xff] %v4827
        %4960 = vst [vmem:[%s181 + $0x3d0] sm:$0xff] %v4828
        %4961 = vst [vmem:[%s181 + $0x3d8] sm:$0xff] %v4829
        %4962 = vst [vmem:[%s181 + $0x3e0] sm:$0xff] %v4830
        %4963 = vst [vmem:[%s181 + $0x3e8] sm:$0xff] %v4831
        %4964 = vst [vmem:[%s181 + $0x3f0] sm:$0xff] %v4832
        %4965 = vst [vmem:[%s181 + $0x3f8] sm:$0xff] %v4833
        %4966 = vst [vmem:[%s181 + $0x400] sm:$0xff] %v4834
        %4967 = vst [vmem:[%s181 + $0x408] sm:$0xff] %v4835
        %4968 = vst [vmem:[%s181 + $0x410] sm:$0xff] %v4836
        %4969 = vst [vmem:[%s181 + $0x418] sm:$0xff] %v4837
        %s4970 = sand.u32 %s75, 1
        %s4971 = scalar_lea.sflag [#allocation4], %s4970
        %s4972 = sand.u32 %s75, 1
        %s4973 = smul.addr %s4972, 1056
        %s4974 = scalar_lea.vmem [#allocation7], %s4973
        // Predicated region
        $region37: #{tpu_custom_call.1} parent=27 // pred_check
          %p4975 = pneg %p85
        $region38: #{tpu_custom_call.1} parent=27 // pred_check_branch
          %4977 = sbr.rel (%p4975) target = $region40
        $region39: #{tpu_custom_call.1} parent=27 // pred_region
          %s4978 = smul.u32 66, %s20
          %s4979 = ssub.s32 131, %s4978
          %p4980 = scmp.lt.s32.totalorder %s4979, 66
          %s4981 = scalar_select %p4980, %s4979, 66
          %s4982 = smul.u32 128, %s4981
          %s4983 = smul.u32 %s4982, 2
          %s4985 = ssub.s32 16896, %s4983
          %4986 = vsyncadd %s4971, %s4985
          %p4987 = scmp.ne.s32.totalorder 0, %s4983
          %s4988 = smul.addr %s4978, 2
          %s4989 = smul.addr %s4988, 128
          %s4990 = scalar_lea.hbm %s2, %s4989
          %s4991 = smul.u32 16, %s4981
          %s4992 = sshll.u32 %s4974, 4
          %s4993 = int_to_ptr.vmem [resolvable:$true] %s4992
          %s4994 = sshll.u32 %s4991, 4
          %4998 = dma.vmem_to_hbm [thread:$0]  (%p4987), %s4993, %s4994, %s4990, %s4971, 256, 256, 16
        $region40: #{tpu_custom_call.1} parent=27 // pred_fallthru
          _
      $region28: #{tpu_custom_call.1} parent=5 // pred_fallthru
        _
      %p4999 = scmp.le.s32.totalorder 2, %s15
      // Predicated region
      $region41: #{tpu_custom_call.1} parent=5 // pred_check
        %p5000 = pneg %p4999
      $region42: #{tpu_custom_call.1} parent=5 // pred_check_branch
        %5002 = sbr.rel (%p5000) target = $region44
      $region43: #{tpu_custom_call.1} parent=5 // pred_region
        %s5003 = ssub.s32 %s15, 2
        // Predicated region
        $region45: #{tpu_custom_call.1} parent=43 // pred_check
          %p5004 = pneg %p91
        $region46: #{tpu_custom_call.1} parent=43 // pred_check_branch
          %5006 = sbr.rel (%p5004) target = $region48
        $region47: #{tpu_custom_call.1} parent=43 // pred_region
          %s5007 = sand.u32 %s76, 1
          %s5008 = scalar_lea.sflag [#allocation4], %s5007
          %s5009 = sand.u32 %s76, 1
          %s5010 = smul.addr %s5009, 1056
          %s5011 = scalar_lea.vmem [#allocation7], %s5010
          %5012 = dma.done %s5008, 16896
        $region48: #{tpu_custom_call.1} parent=43 // pred_fallthru
          _
      $region44: #{tpu_custom_call.1} parent=5 // pred_fallthru
        _
    $region6: #{tpu_custom_call.1} parent=1 // loop_footer
      %s19 = sadd.s32 1, %s15
    $region7: #{tpu_custom_call.1} parent=1 // loop_footer_branch
      %14 = sbr.rel target = $region3
    $region8: #{tpu_custom_call.1} parent=1 // loop_exit
      _
    %5013 = vsyncpa [#allocation3], 1
    %s5014 = scalar_lea.sflag [#allocation3], 1
    %5015 = vsyncpa %s5014, 1
    %5016 = vsyncpa [#allocation4], 1
    %s5017 = scalar_lea.sflag [#allocation4], 1
    %5018 = vsyncpa %s5017, 1
    %5019 = vsyncpa [#allocation5], 1
    %s5020 = scalar_lea.sflag [#allocation5], 1
    %5021 = vsyncpa %s5020, 1

</llo_original>
